<compile_context>
chip_gen: v7x
topology: tpu7x:2x2x1
jax: 0.10.0
libtpu: 0.0.40
codegen_flags: <defaults>
</compile_context>

<pallas_src>
import functools

import jax
import jax.numpy as jnp
import numpy as np
from jax import lax
from jax.experimental import pallas as pl
from jax.experimental.pallas import tpu as pltpu


def recon_block_kernel(w_ref, bias_ref, mask_ref, x_ref, xprev_ref, xnext_ref,
                       o_ref, *, H, W, dense_out):
    # w_ref    : (9, C, C)   BN-folded per-tap weights, index = 3*branch + tap
    # bias_ref : (3, C)      folded BatchNorm bias per branch (f32)
    # mask_ref : (4, R, C)   in-plane boundary masks [h>0, h<H-1, w>0, w<W-1]
    # x_ref    : (1, R, C)   interior rows of this D-tile (R = td*H*W)
    # xprev/xnext_ref : (1, HW, C) clamped halo D-planes before / after the tile
    # o_ref    : (1, td*H, W*C) if dense_out else (1, R, C)
    HW = H * W
    R = x_ref.shape[1]
    C = x_ref.shape[2]

    i = pl.program_id(1)
    n_tiles = pl.num_programs(1)

    x = x_ref[0]                                          # (R, C) storage dtype

    # Clamped D-halo planes; NaN-safe zeroing at the global volume boundary
    # (equivalent to the conv's zero padding along D).
    i_map = jnp.zeros((HW, C), jnp.int32) + i
    xp = jnp.where(i_map > 0, xprev_ref[0], jnp.zeros_like(xprev_ref[0]))
    xn = jnp.where(i_map < n_tiles - 1, xnext_ref[0], jnp.zeros_like(xnext_ref[0]))

    # Extended rows [-HW, R+HW).  Every shifted tap is an R-row window of the
    # f32 matmul result over x_ext (static sublane-offset slices only; no
    # lane-misaligned column slicing).
    x_ext = jnp.concatenate([xp, x, xn], axis=0)          # (R + 2*HW, C)

    base = HW                                             # ext row of interior row 0
    offs = ((base - HW, base + HW),    # branch 0: conv3x1x1, shifts along D
            (base - W,  base + W),     # branch 1: conv1x3x1, shifts along H
            (base - 1,  base + 1))     # branch 2: conv1x1x3, shifts along W

    bias = bias_ref[...]                                  # (3, C) f32
    m_lo = (None, mask_ref[1 - 1], mask_ref[2])           # h>0 , w>0
    m_hi = (None, mask_ref[1], mask_ref[3])               # h<H-1, w<W-1

    gate = jnp.zeros((R, C), jnp.float32)
    for b in range(3):
        o0, o2 = offs[b]
        z0 = jnp.dot(x_ext, w_ref[3 * b + 0],
                     preferred_element_type=jnp.float32)[o0:o0 + R]
        z1 = jnp.dot(x, w_ref[3 * b + 1], preferred_element_type=jnp.float32)
        z2 = jnp.dot(x_ext, w_ref[3 * b + 2],
                     preferred_element_type=jnp.float32)[o2:o2 + R]
        if b > 0:  # in-plane branches: mask taps that cross H / W boundaries
            z0 = z0 * m_lo[b]
            z2 = z2 * m_hi[b]
        y = z0 + z1 + z2 + bias[b:b + 1, :]
        gate = gate + jax.nn.sigmoid(y)

    out = gate * x.astype(jnp.float32)                    # gate the input features
    if dense_out:
        # Lane-dense store: last dim W*C (>=128-wide vst instead of masked C-wide).
        o_ref[0] = out.reshape(R // W, W * C).astype(o_ref.dtype)
    else:
        o_ref[0] = out.astype(o_ref.dtype)


def _vmem_capacity_bytes():
    """Best-effort physical VMEM per core; conservative 64 MiB (v7x) fallback."""
    try:
        info = pltpu.get_tpu_info()
        for name in ("vmem_capacity_bytes", "vmem_bytes", "vmem_size_bytes"):
            v = getattr(info, name, None)
            if v:
                return int(v)
    except Exception:
        pass
    return 64 * 1024 * 1024


def _estimate_vmem_bytes(td, HW, C, in_bytes):
    """Conservative per-grid-step VMEM working-set estimate for tile size td."""
    R = td * HW
    Re = R + 2 * HW
    est = 0
    est += 2 * R * C * in_bytes              # input tile (double-buffered)
    est += 2 * 2 * HW * C * in_bytes         # halo planes (double-buffered)
    est += 2 * R * C * 4                     # f32 output tile (double-buffered)
    est += 2 * 4 * R * C * 4                 # boundary masks (double-buffered)
    est += 2 * (9 * C * C * in_bytes + 3 * C * 4)   # weights + bias
    est += Re * C * in_bytes                 # x_ext concat copy
    est += 2 * Re * C * 4 + 10 * R * C * 4   # live f32 matmul results / tail temps
    return int(est * 1.25)                   # headroom: relayouts, rounding, spill


def _pick_td(D, HW, C, budget_bytes, in_bytes, min_tiles):
    """Largest divisor of D that fits the budget (and yields >= min_tiles tiles)."""
    divs = [t for t in range(1, D + 1) if D % t == 0 and D // t >= min_tiles]
    if not divs:
        divs = [1]
    best = divs[0]
    for t in divs:
        if _estimate_vmem_bytes(t, HW, C, in_bytes) <= budget_bytes:
            best = t
    return best


def recon_block(x, w, bn_scale, bn_bias, *, td=None,
                storage_dtype=jnp.bfloat16, lane_dense_out=True):
    """x: (N,D,H,W,C) f32; w: (3,3,Cin,Cout); bn_scale/bn_bias: (3,Cout)."""
    N, D, H, W, C = x.shape
    HW = H * W
    in_bytes = jnp.dtype(storage_dtype).itemsize
    sub = 32 // in_bytes                       # 8 sublanes for f32, 16 for bf16
    assert HW % sub == 0, f"H*W must be a multiple of {sub} for {storage_dtype}"

    # Generation-aware VMEM sizing (don't size against 6 MiB when 96+ MiB is
    # available on v5e/v6e; don't overshoot v7x's 64 MiB per core either).
    cap = _vmem_capacity_bytes()
    vmem_limit = int(min(cap * 3 // 4, 96 * 1024 * 1024))

    if td is None:
        # With N == 1, keep >= 2 parallel grid steps so both v7x TCs get work.
        min_tiles = 2 if (N == 1 and D >= 2) else 1
        td = _pick_td(D, HW, C, int(vmem_limit * 0.8), in_bytes, min_tiles)
    assert D % td == 0, "td must divide D"
    n_tiles = D // td
    R = td * HW

    # Fold the (inference-mode) BatchNorm scale into the conv weights; stack
    # (branch, tap) on the leading axis -> 9 per-tap (Cin, Cout) matrices.
    wf = (w * bn_scale[:, None, None, :]).reshape(9, C, C).astype(storage_dtype)
    bias = bn_bias.astype(jnp.float32)                    # (3, C)

    # Hoisted in-plane boundary masks: precomputed once, constant across steps.
    r = np.arange(R)
    h_idx = (r // W) % H
    w_idx = r % W
    masks = np.stack([h_idx > 0, h_idx < H - 1, w_idx > 0, w_idx < W - 1], 0)
    masks = jnp.asarray(
        np.broadcast_to(masks[:, :, None], (4, R, C)).astype(np.float32))

    # Stream activations at the storage dtype (bf16 by default); rows = D*H*W.
    x2 = x.reshape(N, D * HW, C).astype(storage_dtype)

    in_specs = [
        pl.BlockSpec((9, C, C), lambda n, i: (0, 0, 0)),
        pl.BlockSpec((3, C), lambda n, i: (0, 0)),
        pl.BlockSpec((4, R, C), lambda n, i: (0, 0, 0)),
        # interior tile (td D-planes)
        pl.BlockSpec((1, R, C), lambda n, i: (n, i, 0)),
        # clamped halo planes before / after the tile (block unit = 1 D-plane)
        pl.BlockSpec((1, HW, C), lambda n, i: (n, jnp.maximum(i * td - 1, 0), 0)),
        pl.BlockSpec((1, HW, C), lambda n, i: (n, jnp.minimum((i + 1) * td, D - 1), 0)),
    ]
    cparams = pltpu.CompilerParams(
        dimension_semantics=("parallel", "parallel"),
        vmem_limit_bytes=vmem_limit)

    def run(dense):
        if dense:
            out_shape = jax.ShapeDtypeStruct((N, D * H, W * C), jnp.float32)
            out_spec = pl.BlockSpec((1, td * H, W * C), lambda n, i: (n, i, 0))
        else:
            out_shape = jax.ShapeDtypeStruct((N, D * HW, C), jnp.float32)
            out_spec = pl.BlockSpec((1, R, C), lambda n, i: (n, i, 0))
        fn = pl.pallas_call(
            functools.partial(recon_block_kernel, H=H, W=W, dense_out=dense),
            out_shape=out_shape,
            grid=(N, n_tiles),
            in_specs=in_specs,
            out_specs=out_spec,
            compiler_params=cparams)
        return fn(wf, bias, masks, x2, x2, x2)

    if lane_dense_out:
        try:
            out = jax.block_until_ready(run(True))
            return out.reshape(N, D, H, W, C)
        except Exception:
            # The lane-dense store needs an in-kernel sublane->lane relayout
            # (jnp.reshape); fall back to the channels-last store if this
            # Mosaic version rejects that reshape.
            pass
    out = run(False)
    return out.reshape(N, D, H, W, C)


def recon_block_reference(x, w, bn_scale, bn_bias):
    # Pure-JAX reference (dense-grid form of the module, BN in inference mode,
    # scale folded into the weights exactly as the kernel does).
    N, D, H, W, C = x.shape
    wf = w * bn_scale[:, None, None, :]
    acc = jnp.zeros_like(x)
    for b, axis in ((0, 1), (1, 2), (2, 3)):      # spatial axes of (N,D,H,W,C)
        pad = [(0, 0)] * 5
        pad[axis] = (1, 1)
        xp = jnp.pad(x, pad)
        L = x.shape[axis]
        y = jnp.zeros(x.shape, jnp.float32)
        for k in range(3):
            xs = lax.slice_in_dim(xp, k, k + L, axis=axis)
            y = y + jnp.einsum("ndhwc,co->ndhwo", xs, wf[b, k])
        y = y + bn_bias[b]
        acc = acc + jax.nn.sigmoid(y)
    return acc * x


if __name__ == "__main__":
    # Small shapes consistent with the module (in_filters == out_filters,
    # required by the final elementwise product with x.features).
    N, D, H, W, C = 2, 8, 8, 8, 32

    key = jax.random.PRNGKey(0)
    kx, kw, kg, kb, km, kv = jax.random.split(key, 6)

    x = jax.random.normal(kx, (N, D, H, W, C), dtype=jnp.float32)

    # Conv weights: (branch, tap, Cin, Cout), no bias (matches SubMConv3d).
    w = 0.1 * jax.random.normal(kw, (3, 3, C, C), dtype=jnp.float32)

    # BatchNorm1d (inference form) folded to per-channel scale / shift.
    eps = 1e-5
    gamma = 1.0 + 0.1 * jax.random.normal(kg, (3, C), dtype=jnp.float32)
    beta = 0.1 * jax.random.normal(kb, (3, C), dtype=jnp.float32)
    running_mean = 0.1 * jax.random.normal(km, (3, C), dtype=jnp.float32)
    running_var = 1.0 + 0.1 * jax.random.uniform(kv, (3, C), dtype=jnp.float32)
    bn_scale = gamma / jnp.sqrt(running_var + eps)
    bn_bias = beta - running_mean * bn_scale

    # 1) Exact-precision check: f32 storage + f32 MXU, explicit small D-tile so
    #    the halo / boundary-mask logic is exercised across tiles.
    ref = jax.block_until_ready(recon_block_reference(x, w, bn_scale, bn_bias))
    out_f32 = jax.block_until_ready(
        recon_block(x, w, bn_scale, bn_bias, td=2, storage_dtype=jnp.float32))
    np.testing.assert_allclose(np.asarray(out_f32), np.asarray(ref),
                               rtol=1e-4, atol=1e-5)

    # 2) Default fast path: bf16 HBM streaming + bf16 MXU operands (f32
    #    accumulate), auto-sized D-tile, lane-dense output store.  The
    #    reference is fed the same bf16-rounded activations so only matmul
    #    operand rounding remains in the comparison.
    x_q = x.astype(jnp.bfloat16).astype(jnp.float32)
    ref_q = jax.block_until_ready(recon_block_reference(x_q, w, bn_scale, bn_bias))
    out = jax.block_until_ready(recon_block(x, w, bn_scale, bn_bias))
    np.testing.assert_allclose(np.asarray(out), np.asarray(ref_q),
                               rtol=5e-2, atol=5e-2)

    print("KERNEL_OK")
</pallas_src>

<mosaic_0001>
module attributes {stable_mosaic.version = 11 : i64} {
  func.func @recon_block_kernel(%arg0: i32, %arg1: i32, %arg2: memref<9x32x32xf32, #tpu.memory_space<vmem>>, %arg3: memref<3x32xf32, #tpu.memory_space<vmem>>, %arg4: memref<4x128x32xf32, #tpu.memory_space<vmem>>, %arg5: memref<1x128x32xf32, #tpu.memory_space<vmem>>, %arg6: memref<1x64x32xf32, #tpu.memory_space<vmem>>, %arg7: memref<1x64x32xf32, #tpu.memory_space<vmem>>, %arg8: memref<1x16x256xf32, #tpu.memory_space<vmem>>) attributes {dimension_semantics = [#tpu.dimension_semantics<parallel>, #tpu.dimension_semantics<parallel>], iteration_bounds = array<i64: 2, 4>, scalar_prefetch = 0 : i64, scratch_operands = 0 : i64, tpu.core_type = #tpu.core_type<tc>, window_params = [{pipeline_mode = #tpu.pipeline_mode<synchronous>, transform_indices = @transform_0, window_bounds = array<i64: 9, 32, 32>}, {pipeline_mode = #tpu.pipeline_mode<synchronous>, transform_indices = @transform_1, window_bounds = array<i64: 3, 32>}, {pipeline_mode = #tpu.pipeline_mode<synchronous>, transform_indices = @transform_2, window_bounds = array<i64: 4, 128, 32>}, {transform_indices = @transform_3, window_bounds = array<i64: 1, 128, 32>}, {transform_indices = @transform_4, window_bounds = array<i64: 1, 64, 32>}, {transform_indices = @transform_5, window_bounds = array<i64: 1, 64, 32>}, {transform_indices = @transform_6, window_bounds = array<i64: 1, 16, 256>}]} {
    %c0 = arith.constant 0 : index
    %c0_0 = arith.constant 0 : index
    %c0_1 = arith.constant 0 : index
    %0 = vector.load %arg5[%c0, %c0_0, %c0_1] : memref<1x128x32xf32, #tpu.memory_space<vmem>>, vector<1x128x32xf32>
    %1 = vector.shape_cast %0 : vector<1x128x32xf32> to vector<128x32xf32>
    %c0_i32 = arith.constant 0 : i32
    %2 = vector.broadcast %c0_i32 : i32 to vector<64x32xi32>
    %3 = vector.broadcast %arg1 : i32 to vector<64x32xi32>
    %4 = arith.addi %2, %3 : vector<64x32xi32>
    %c0_i32_2 = arith.constant 0 : i32
    %5 = vector.broadcast %c0_i32_2 : i32 to vector<64x32xi32>
    %6 = arith.cmpi sgt, %4, %5 : vector<64x32xi32>
    %c0_3 = arith.constant 0 : index
    %c0_4 = arith.constant 0 : index
    %c0_5 = arith.constant 0 : index
    %7 = vector.load %arg6[%c0_3, %c0_4, %c0_5] : memref<1x64x32xf32, #tpu.memory_space<vmem>>, vector<1x64x32xf32>
    %8 = vector.shape_cast %7 : vector<1x64x32xf32> to vector<64x32xf32>
    %cst = arith.constant 0.000000e+00 : f32
    %9 = vector.broadcast %cst : f32 to vector<64x32xf32>
    %10 = arith.select %6, %8, %9 : vector<64x32xi1>, vector<64x32xf32>
    %c3_i32 = arith.constant 3 : i32
    %11 = vector.broadcast %c3_i32 : i32 to vector<64x32xi32>
    %12 = arith.cmpi slt, %4, %11 : vector<64x32xi32>
    %c0_6 = arith.constant 0 : index
    %c0_7 = arith.constant 0 : index
    %c0_8 = arith.constant 0 : index
    %13 = vector.load %arg7[%c0_6, %c0_7, %c0_8] : memref<1x64x32xf32, #tpu.memory_space<vmem>>, vector<1x64x32xf32>
    %14 = vector.shape_cast %13 : vector<1x64x32xf32> to vector<64x32xf32>
    %cst_9 = arith.constant 0.000000e+00 : f32
    %15 = vector.broadcast %cst_9 : f32 to vector<64x32xf32>
    %16 = arith.select %12, %14, %15 : vector<64x32xi1>, vector<64x32xf32>
    %17 = tpu.concatenate %10, %1, %16 in 0 : vector<64x32xf32>, vector<128x32xf32>, vector<64x32xf32> -> vector<256x32xf32>
    %c0_10 = arith.constant 0 : index
    %c0_11 = arith.constant 0 : index
    %18 = vector.load %arg3[%c0_10, %c0_11] : memref<3x32xf32, #tpu.memory_space<vmem>>, vector<3x32xf32>
    %c0_12 = arith.constant 0 : index
    %c0_13 = arith.constant 0 : index
    %c0_14 = arith.constant 0 : index
    %19 = vector.load %arg4[%c0_12, %c0_13, %c0_14] : memref<4x128x32xf32, #tpu.memory_space<vmem>>, vector<1x128x32xf32>
    %20 = vector.shape_cast %19 : vector<1x128x32xf32> to vector<128x32xf32>
    %c2 = arith.constant 2 : index
    %c0_15 = arith.constant 0 : index
    %c0_16 = arith.constant 0 : index
    %21 = vector.load %arg4[%c2, %c0_15, %c0_16] : memref<4x128x32xf32, #tpu.memory_space<vmem>>, vector<1x128x32xf32>
    %22 = vector.shape_cast %21 : vector<1x128x32xf32> to vector<128x32xf32>
    %c1 = arith.constant 1 : index
    %c0_17 = arith.constant 0 : index
    %c0_18 = arith.constant 0 : index
    %23 = vector.load %arg4[%c1, %c0_17, %c0_18] : memref<4x128x32xf32, #tpu.memory_space<vmem>>, vector<1x128x32xf32>
    %24 = vector.shape_cast %23 : vector<1x128x32xf32> to vector<128x32xf32>
    %c3 = arith.constant 3 : index
    %c0_19 = arith.constant 0 : index
    %c0_20 = arith.constant 0 : index
    %25 = vector.load %arg4[%c3, %c0_19, %c0_20] : memref<4x128x32xf32, #tpu.memory_space<vmem>>, vector<1x128x32xf32>
    %26 = vector.shape_cast %25 : vector<1x128x32xf32> to vector<128x32xf32>
    %cst_21 = arith.constant 0.000000e+00 : f32
    %27 = vector.broadcast %cst_21 : f32 to vector<128x32xf32>
    %c0_22 = arith.constant 0 : index
    %c0_23 = arith.constant 0 : index
    %c0_24 = arith.constant 0 : index
    %28 = vector.load %arg2[%c0_22, %c0_23, %c0_24] : memref<9x32x32xf32, #tpu.memory_space<vmem>>, vector<1x32x32xf32>
    %29 = vector.shape_cast %28 : vector<1x32x32xf32> to vector<32x32xf32>
    %cst_25 = arith.constant dense<0.000000e+00> : vector<256x32xf32>
    %30 = tpu.matmul %17, %29, %cst_25 {dimension_numbers = #tpu.dot_dimension_numbers<[1], [0], [0], [1], [0, 0, 1, 1], [], []>} : vector<256x32xf32>, vector<32x32xf32>, vector<256x32xf32> -> vector<256x32xf32>
    %31 = vector.extract_strided_slice %30 {offsets = [0, 0], sizes = [128, 32], strides = [1, 1]} : vector<256x32xf32> to vector<128x32xf32>
    %c1_26 = arith.constant 1 : index
    %c0_27 = arith.constant 0 : index
    %c0_28 = arith.constant 0 : index
    %32 = vector.load %arg2[%c1_26, %c0_27, %c0_28] : memref<9x32x32xf32, #tpu.memory_space<vmem>>, vector<1x32x32xf32>
    %33 = vector.shape_cast %32 : vector<1x32x32xf32> to vector<32x32xf32>
    %cst_29 = arith.constant dense<0.000000e+00> : vector<128x32xf32>
    %34 = tpu.matmul %1, %33, %cst_29 {dimension_numbers = #tpu.dot_dimension_numbers<[1], [0], [0], [1], [0, 0, 1, 1], [], []>} : vector<128x32xf32>, vector<32x32xf32>, vector<128x32xf32> -> vector<128x32xf32>
    %c2_30 = arith.constant 2 : index
    %c0_31 = arith.constant 0 : index
    %c0_32 = arith.constant 0 : index
    %35 = vector.load %arg2[%c2_30, %c0_31, %c0_32] : memref<9x32x32xf32, #tpu.memory_space<vmem>>, vector<1x32x32xf32>
    %36 = vector.shape_cast %35 : vector<1x32x32xf32> to vector<32x32xf32>
    %cst_33 = arith.constant dense<0.000000e+00> : vector<256x32xf32>
    %37 = tpu.matmul %17, %36, %cst_33 {dimension_numbers = #tpu.dot_dimension_numbers<[1], [0], [0], [1], [0, 0, 1, 1], [], []>} : vector<256x32xf32>, vector<32x32xf32>, vector<256x32xf32> -> vector<256x32xf32>
    %38 = vector.extract_strided_slice %37 {offsets = [128, 0], sizes = [128, 32], strides = [1, 1]} : vector<256x32xf32> to vector<128x32xf32>
    %39 = arith.addf %31, %34 : vector<128x32xf32>
    %40 = arith.addf %39, %38 : vector<128x32xf32>
    %41 = vector.extract_strided_slice %18 {offsets = [0, 0], sizes = [1, 32], strides = [1, 1]} : vector<3x32xf32> to vector<1x32xf32>
    %42 = vector.broadcast %41 : vector<1x32xf32> to vector<128x32xf32>
    %43 = arith.addf %40, %42 : vector<128x32xf32>
    %44 = arith.negf %43 : vector<128x32xf32>
    %45 = math.exp %44 : vector<128x32xf32>
    %cst_34 = arith.constant 1.000000e+00 : f32
    %46 = vector.broadcast %cst_34 : f32 to vector<128x32xf32>
    %47 = arith.addf %46, %45 : vector<128x32xf32>
    %48 = arith.divf %46, %47 : vector<128x32xf32>
    %49 = arith.addf %27, %48 : vector<128x32xf32>
    %c3_35 = arith.constant 3 : index
    %c0_36 = arith.constant 0 : index
    %c0_37 = arith.constant 0 : index
    %50 = vector.load %arg2[%c3_35, %c0_36, %c0_37] : memref<9x32x32xf32, #tpu.memory_space<vmem>>, vector<1x32x32xf32>
    %51 = vector.shape_cast %50 : vector<1x32x32xf32> to vector<32x32xf32>
    %cst_38 = arith.constant dense<0.000000e+00> : vector<256x32xf32>
    %52 = tpu.matmul %17, %51, %cst_38 {dimension_numbers = #tpu.dot_dimension_numbers<[1], [0], [0], [1], [0, 0, 1, 1], [], []>} : vector<256x32xf32>, vector<32x32xf32>, vector<256x32xf32> -> vector<256x32xf32>
    %53 = vector.extract_strided_slice %52 {offsets = [56, 0], sizes = [128, 32], strides = [1, 1]} : vector<256x32xf32> to vector<128x32xf32>
    %c4 = arith.constant 4 : index
    %c0_39 = arith.constant 0 : index
    %c0_40 = arith.constant 0 : index
    %54 = vector.load %arg2[%c4, %c0_39, %c0_40] : memref<9x32x32xf32, #tpu.memory_space<vmem>>, vector<1x32x32xf32>
    %55 = vector.shape_cast %54 : vector<1x32x32xf32> to vector<32x32xf32>
    %cst_41 = arith.constant dense<0.000000e+00> : vector<128x32xf32>
    %56 = tpu.matmul %1, %55, %cst_41 {dimension_numbers = #tpu.dot_dimension_numbers<[1], [0], [0], [1], [0, 0, 1, 1], [], []>} : vector<128x32xf32>, vector<32x32xf32>, vector<128x32xf32> -> vector<128x32xf32>
    %c5 = arith.constant 5 : index
    %c0_42 = arith.constant 0 : index
    %c0_43 = arith.constant 0 : index
    %57 = vector.load %arg2[%c5, %c0_42, %c0_43] : memref<9x32x32xf32, #tpu.memory_space<vmem>>, vector<1x32x32xf32>
    %58 = vector.shape_cast %57 : vector<1x32x32xf32> to vector<32x32xf32>
    %cst_44 = arith.constant dense<0.000000e+00> : vector<256x32xf32>
    %59 = tpu.matmul %17, %58, %cst_44 {dimension_numbers = #tpu.dot_dimension_numbers<[1], [0], [0], [1], [0, 0, 1, 1], [], []>} : vector<256x32xf32>, vector<32x32xf32>, vector<256x32xf32> -> vector<256x32xf32>
    %60 = vector.extract_strided_slice %59 {offsets = [72, 0], sizes = [128, 32], strides = [1, 1]} : vector<256x32xf32> to vector<128x32xf32>
    %61 = arith.mulf %53, %20 : vector<128x32xf32>
    %62 = arith.mulf %60, %24 : vector<128x32xf32>
    %63 = arith.addf %61, %56 : vector<128x32xf32>
    %64 = arith.addf %63, %62 : vector<128x32xf32>
    %65 = vector.extract_strided_slice %18 {offsets = [1, 0], sizes = [1, 32], strides = [1, 1]} : vector<3x32xf32> to vector<1x32xf32>
    %66 = vector.broadcast %65 : vector<1x32xf32> to vector<128x32xf32>
    %67 = arith.addf %64, %66 : vector<128x32xf32>
    %68 = arith.negf %67 : vector<128x32xf32>
    %69 = math.exp %68 : vector<128x32xf32>
    %cst_45 = arith.constant 1.000000e+00 : f32
    %70 = vector.broadcast %cst_45 : f32 to vector<128x32xf32>
    %71 = arith.addf %70, %69 : vector<128x32xf32>
    %72 = arith.divf %70, %71 : vector<128x32xf32>
    %73 = arith.addf %49, %72 : vector<128x32xf32>
    %c6 = arith.constant 6 : index
    %c0_46 = arith.constant 0 : index
    %c0_47 = arith.constant 0 : index
    %74 = vector.load %arg2[%c6, %c0_46, %c0_47] : memref<9x32x32xf32, #tpu.memory_space<vmem>>, vector<1x32x32xf32>
    %75 = vector.shape_cast %74 : vector<1x32x32xf32> to vector<32x32xf32>
    %cst_48 = arith.constant dense<0.000000e+00> : vector<256x32xf32>
    %76 = tpu.matmul %17, %75, %cst_48 {dimension_numbers = #tpu.dot_dimension_numbers<[1], [0], [0], [1], [0, 0, 1, 1], [], []>} : vector<256x32xf32>, vector<32x32xf32>, vector<256x32xf32> -> vector<256x32xf32>
    %77 = vector.extract_strided_slice %76 {offsets = [63, 0], sizes = [128, 32], strides = [1, 1]} : vector<256x32xf32> to vector<128x32xf32>
    %c7 = arith.constant 7 : index
    %c0_49 = arith.constant 0 : index
    %c0_50 = arith.constant 0 : index
    %78 = vector.load %arg2[%c7, %c0_49, %c0_50] : memref<9x32x32xf32, #tpu.memory_space<vmem>>, vector<1x32x32xf32>
    %79 = vector.shape_cast %78 : vector<1x32x32xf32> to vector<32x32xf32>
    %cst_51 = arith.constant dense<0.000000e+00> : vector<128x32xf32>
    %80 = tpu.matmul %1, %79, %cst_51 {dimension_numbers = #tpu.dot_dimension_numbers<[1], [0], [0], [1], [0, 0, 1, 1], [], []>} : vector<128x32xf32>, vector<32x32xf32>, vector<128x32xf32> -> vector<128x32xf32>
    %c8 = arith.constant 8 : index
    %c0_52 = arith.constant 0 : index
    %c0_53 = arith.constant 0 : index
    %81 = vector.load %arg2[%c8, %c0_52, %c0_53] : memref<9x32x32xf32, #tpu.memory_space<vmem>>, vector<1x32x32xf32>
    %82 = vector.shape_cast %81 : vector<1x32x32xf32> to vector<32x32xf32>
    %cst_54 = arith.constant dense<0.000000e+00> : vector<256x32xf32>
    %83 = tpu.matmul %17, %82, %cst_54 {dimension_numbers = #tpu.dot_dimension_numbers<[1], [0], [0], [1], [0, 0, 1, 1], [], []>} : vector<256x32xf32>, vector<32x32xf32>, vector<256x32xf32> -> vector<256x32xf32>
    %84 = vector.extract_strided_slice %83 {offsets = [65, 0], sizes = [128, 32], strides = [1, 1]} : vector<256x32xf32> to vector<128x32xf32>
    %85 = arith.mulf %77, %22 : vector<128x32xf32>
    %86 = arith.mulf %84, %26 : vector<128x32xf32>
    %87 = arith.addf %85, %80 : vector<128x32xf32>
    %88 = arith.addf %87, %86 : vector<128x32xf32>
    %89 = vector.extract_strided_slice %18 {offsets = [2, 0], sizes = [1, 32], strides = [1, 1]} : vector<3x32xf32> to vector<1x32xf32>
    %90 = vector.broadcast %89 : vector<1x32xf32> to vector<128x32xf32>
    %91 = arith.addf %88, %90 : vector<128x32xf32>
    %92 = arith.negf %91 : vector<128x32xf32>
    %93 = math.exp %92 : vector<128x32xf32>
    %cst_55 = arith.constant 1.000000e+00 : f32
    %94 = vector.broadcast %cst_55 : f32 to vector<128x32xf32>
    %95 = arith.addf %94, %93 : vector<128x32xf32>
    %96 = arith.divf %94, %95 : vector<128x32xf32>
    %97 = arith.addf %73, %96 : vector<128x32xf32>
    %98 = arith.mulf %97, %1 : vector<128x32xf32>
    %99 = vector.shape_cast %98 : vector<128x32xf32> to vector<16x256xf32>
    %c0_56 = arith.constant 0 : index
    %c0_57 = arith.constant 0 : index
    %c0_58 = arith.constant 0 : index
    %100 = vector.load %arg8[%c0_56, %c0_57, %c0_58] : memref<1x16x256xf32, #tpu.memory_space<vmem>>, vector<1x16x256xf32>
    %101 = vector.shape_cast %100 : vector<1x16x256xf32> to vector<16x256xf32>
    %102 = vector.shape_cast %99 : vector<16x256xf32> to vector<1x16x256xf32>
    tpu.vector_store %arg8[%c0_56, %c0_57, %c0_58], %102 {strides = array<i32>} : memref<1x16x256xf32, #tpu.memory_space<vmem>>, vector<1x16x256xf32>,
    return
  }
  func.func @transform_0(%arg0: i32, %arg1: i32) -> (i32, i32, i32) {
    %c0_i32 = arith.constant 0 : i32
    %c0_i32_0 = arith.constant 0 : i32
    %c0_i32_1 = arith.constant 0 : i32
    %c0_i32_2 = arith.constant 0 : i32
    return %c0_i32, %c0_i32_0, %c0_i32_1 : i32, i32, i32
  }
  func.func @transform_1(%arg0: i32, %arg1: i32) -> (i32, i32) {
    %c0_i32 = arith.constant 0 : i32
    %c0_i32_0 = arith.constant 0 : i32
    %c0_i32_1 = arith.constant 0 : i32
    return %c0_i32, %c0_i32_0 : i32, i32
  }
  func.func @transform_2(%arg0: i32, %arg1: i32) -> (i32, i32, i32) {
    %c0_i32 = arith.constant 0 : i32
    %c0_i32_0 = arith.constant 0 : i32
    %c0_i32_1 = arith.constant 0 : i32
    %c0_i32_2 = arith.constant 0 : i32
    return %c0_i32, %c0_i32_0, %c0_i32_1 : i32, i32, i32
  }
  func.func @transform_3(%arg0: i32, %arg1: i32) -> (i32, i32, i32) {
    %c0_i32 = arith.constant 0 : i32
    %c0_i32_0 = arith.constant 0 : i32
    return %arg0, %arg1, %c0_i32 : i32, i32, i32
  }
  func.func @transform_4(%arg0: i32, %arg1: i32) -> (i32, i32, i32) {
    %c2_i32 = arith.constant 2 : i32
    %0 = arith.muli %arg1, %c2_i32 : i32
    %c1_i32 = arith.constant 1 : i32
    %1 = arith.subi %0, %c1_i32 : i32
    %c0_i32 = arith.constant 0 : i32
    %2 = arith.maxsi %1, %c0_i32 : i32
    %c0_i32_0 = arith.constant 0 : i32
    %c0_i32_1 = arith.constant 0 : i32
    return %arg0, %2, %c0_i32_0 : i32, i32, i32
  }
  func.func @transform_5(%arg0: i32, %arg1: i32) -> (i32, i32, i32) {
    %c1_i32 = arith.constant 1 : i32
    %0 = arith.addi %arg1, %c1_i32 : i32
    %c2_i32 = arith.constant 2 : i32
    %1 = arith.muli %0, %c2_i32 : i32
    %c7_i32 = arith.constant 7 : i32
    %2 = arith.minsi %1, %c7_i32 : i32
    %c0_i32 = arith.constant 0 : i32
    %c0_i32_0 = arith.constant 0 : i32
    return %arg0, %2, %c0_i32 : i32, i32, i32
  }
  func.func @transform_6(%arg0: i32, %arg1: i32) -> (i32, i32, i32) {
    %c0_i32 = arith.constant 0 : i32
    %c0_i32_0 = arith.constant 0 : i32
    return %arg0, %arg1, %c0_i32 : i32, i32, i32
  }
}

module attributes {stable_mosaic.version = 11 : i64} {
  func.func @recon_block_kernel(%arg0: i32, %arg1: i32, %arg2: memref<9x32x32xf32, #tpu.memory_space<vmem>>, %arg3: memref<3x32xf32, #tpu.memory_space<vmem>>, %arg4: memref<4x128x32xf32, #tpu.memory_space<vmem>>, %arg5: memref<1x128x32xf32, #tpu.memory_space<vmem>>, %arg6: memref<1x64x32xf32, #tpu.memory_space<vmem>>, %arg7: memref<1x64x32xf32, #tpu.memory_space<vmem>>, %arg8: memref<1x128x32xf32, #tpu.memory_space<vmem>>) attributes {dimension_semantics = [#tpu.dimension_semantics<parallel>, #tpu.dimension_semantics<parallel>], iteration_bounds = array<i64: 2, 4>, scalar_prefetch = 0 : i64, scratch_operands = 0 : i64, tpu.core_type = #tpu.core_type<tc>, window_params = [{pipeline_mode = #tpu.pipeline_mode<synchronous>, transform_indices = @transform_0, window_bounds = array<i64: 9, 32, 32>}, {pipeline_mode = #tpu.pipeline_mode<synchronous>, transform_indices = @transform_1, window_bounds = array<i64: 3, 32>}, {pipeline_mode = #tpu.pipeline_mode<synchronous>, transform_indices = @transform_2, window_bounds = array<i64: 4, 128, 32>}, {transform_indices = @transform_3, window_bounds = array<i64: 1, 128, 32>}, {transform_indices = @transform_4, window_bounds = array<i64: 1, 64, 32>}, {transform_indices = @transform_5, window_bounds = array<i64: 1, 64, 32>}, {transform_indices = @transform_6, window_bounds = array<i64: 1, 128, 32>}]} {
    %c0 = arith.constant 0 : index
    %c0_0 = arith.constant 0 : index
    %c0_1 = arith.constant 0 : index
    %0 = vector.load %arg5[%c0, %c0_0, %c0_1] : memref<1x128x32xf32, #tpu.memory_space<vmem>>, vector<1x128x32xf32>
    %1 = vector.shape_cast %0 : vector<1x128x32xf32> to vector<128x32xf32>
    %c0_i32 = arith.constant 0 : i32
    %2 = vector.broadcast %c0_i32 : i32 to vector<64x32xi32>
    %3 = vector.broadcast %arg1 : i32 to vector<64x32xi32>
    %4 = arith.addi %2, %3 : vector<64x32xi32>
    %c0_i32_2 = arith.constant 0 : i32
    %5 = vector.broadcast %c0_i32_2 : i32 to vector<64x32xi32>
    %6 = arith.cmpi sgt, %4, %5 : vector<64x32xi32>
    %c0_3 = arith.constant 0 : index
    %c0_4 = arith.constant 0 : index
    %c0_5 = arith.constant 0 : index
    %7 = vector.load %arg6[%c0_3, %c0_4, %c0_5] : memref<1x64x32xf32, #tpu.memory_space<vmem>>, vector<1x64x32xf32>
    %8 = vector.shape_cast %7 : vector<1x64x32xf32> to vector<64x32xf32>
    %cst = arith.constant 0.000000e+00 : f32
    %9 = vector.broadcast %cst : f32 to vector<64x32xf32>
    %10 = arith.select %6, %8, %9 : vector<64x32xi1>, vector<64x32xf32>
    %c3_i32 = arith.constant 3 : i32
    %11 = vector.broadcast %c3_i32 : i32 to vector<64x32xi32>
    %12 = arith.cmpi slt, %4, %11 : vector<64x32xi32>
    %c0_6 = arith.constant 0 : index
    %c0_7 = arith.constant 0 : index
    %c0_8 = arith.constant 0 : index
    %13 = vector.load %arg7[%c0_6, %c0_7, %c0_8] : memref<1x64x32xf32, #tpu.memory_space<vmem>>, vector<1x64x32xf32>
    %14 = vector.shape_cast %13 : vector<1x64x32xf32> to vector<64x32xf32>
    %cst_9 = arith.constant 0.000000e+00 : f32
    %15 = vector.broadcast %cst_9 : f32 to vector<64x32xf32>
    %16 = arith.select %12, %14, %15 : vector<64x32xi1>, vector<64x32xf32>
    %17 = tpu.concatenate %10, %1, %16 in 0 : vector<64x32xf32>, vector<128x32xf32>, vector<64x32xf32> -> vector<256x32xf32>
    %c0_10 = arith.constant 0 : index
    %c0_11 = arith.constant 0 : index
    %18 = vector.load %arg3[%c0_10, %c0_11] : memref<3x32xf32, #tpu.memory_space<vmem>>, vector<3x32xf32>
    %c0_12 = arith.constant 0 : index
    %c0_13 = arith.constant 0 : index
    %c0_14 = arith.constant 0 : index
    %19 = vector.load %arg4[%c0_12, %c0_13, %c0_14] : memref<4x128x32xf32, #tpu.memory_space<vmem>>, vector<1x128x32xf32>
    %20 = vector.shape_cast %19 : vector<1x128x32xf32> to vector<128x32xf32>
    %c2 = arith.constant 2 : index
    %c0_15 = arith.constant 0 : index
    %c0_16 = arith.constant 0 : index
    %21 = vector.load %arg4[%c2, %c0_15, %c0_16] : memref<4x128x32xf32, #tpu.memory_space<vmem>>, vector<1x128x32xf32>
    %22 = vector.shape_cast %21 : vector<1x128x32xf32> to vector<128x32xf32>
    %c1 = arith.constant 1 : index
    %c0_17 = arith.constant 0 : index
    %c0_18 = arith.constant 0 : index
    %23 = vector.load %arg4[%c1, %c0_17, %c0_18] : memref<4x128x32xf32, #tpu.memory_space<vmem>>, vector<1x128x32xf32>
    %24 = vector.shape_cast %23 : vector<1x128x32xf32> to vector<128x32xf32>
    %c3 = arith.constant 3 : index
    %c0_19 = arith.constant 0 : index
    %c0_20 = arith.constant 0 : index
    %25 = vector.load %arg4[%c3, %c0_19, %c0_20] : memref<4x128x32xf32, #tpu.memory_space<vmem>>, vector<1x128x32xf32>
    %26 = vector.shape_cast %25 : vector<1x128x32xf32> to vector<128x32xf32>
    %cst_21 = arith.constant 0.000000e+00 : f32
    %27 = vector.broadcast %cst_21 : f32 to vector<128x32xf32>
    %c0_22 = arith.constant 0 : index
    %c0_23 = arith.constant 0 : index
    %c0_24 = arith.constant 0 : index
    %28 = vector.load %arg2[%c0_22, %c0_23, %c0_24] : memref<9x32x32xf32, #tpu.memory_space<vmem>>, vector<1x32x32xf32>
    %29 = vector.shape_cast %28 : vector<1x32x32xf32> to vector<32x32xf32>
    %cst_25 = arith.constant dense<0.000000e+00> : vector<256x32xf32>
    %30 = tpu.matmul %17, %29, %cst_25 {dimension_numbers = #tpu.dot_dimension_numbers<[1], [0], [0], [1], [0, 0, 1, 1], [], []>} : vector<256x32xf32>, vector<32x32xf32>, vector<256x32xf32> -> vector<256x32xf32>
    %31 = vector.extract_strided_slice %30 {offsets = [0, 0], sizes = [128, 32], strides = [1, 1]} : vector<256x32xf32> to vector<128x32xf32>
    %c1_26 = arith.constant 1 : index
    %c0_27 = arith.constant 0 : index
    %c0_28 = arith.constant 0 : index
    %32 = vector.load %arg2[%c1_26, %c0_27, %c0_28] : memref<9x32x32xf32, #tpu.memory_space<vmem>>, vector<1x32x32xf32>
    %33 = vector.shape_cast %32 : vector<1x32x32xf32> to vector<32x32xf32>
    %cst_29 = arith.constant dense<0.000000e+00> : vector<128x32xf32>
    %34 = tpu.matmul %1, %33, %cst_29 {dimension_numbers = #tpu.dot_dimension_numbers<[1], [0], [0], [1], [0, 0, 1, 1], [], []>} : vector<128x32xf32>, vector<32x32xf32>, vector<128x32xf32> -> vector<128x32xf32>
    %c2_30 = arith.constant 2 : index
    %c0_31 = arith.constant 0 : index
    %c0_32 = arith.constant 0 : index
    %35 = vector.load %arg2[%c2_30, %c0_31, %c0_32] : memref<9x32x32xf32, #tpu.memory_space<vmem>>, vector<1x32x32xf32>
    %36 = vector.shape_cast %35 : vector<1x32x32xf32> to vector<32x32xf32>
    %cst_33 = arith.constant dense<0.000000e+00> : vector<256x32xf32>
    %37 = tpu.matmul %17, %36, %cst_33 {dimension_numbers = #tpu.dot_dimension_numbers<[1], [0], [0], [1], [0, 0, 1, 1], [], []>} : vector<256x32xf32>, vector<32x32xf32>, vector<256x32xf32> -> vector<256x32xf32>
    %38 = vector.extract_strided_slice %37 {offsets = [128, 0], sizes = [128, 32], strides = [1, 1]} : vector<256x32xf32> to vector<128x32xf32>
    %39 = arith.addf %31, %34 : vector<128x32xf32>
    %40 = arith.addf %39, %38 : vector<128x32xf32>
    %41 = vector.extract_strided_slice %18 {offsets = [0, 0], sizes = [1, 32], strides = [1, 1]} : vector<3x32xf32> to vector<1x32xf32>
    %42 = vector.broadcast %41 : vector<1x32xf32> to vector<128x32xf32>
    %43 = arith.addf %40, %42 : vector<128x32xf32>
    %44 = arith.negf %43 : vector<128x32xf32>
    %45 = math.exp %44 : vector<128x32xf32>
    %cst_34 = arith.constant 1.000000e+00 : f32
    %46 = vector.broadcast %cst_34 : f32 to vector<128x32xf32>
    %47 = arith.addf %46, %45 : vector<128x32xf32>
    %48 = arith.divf %46, %47 : vector<128x32xf32>
    %49 = arith.addf %27, %48 : vector<128x32xf32>
    %c3_35 = arith.constant 3 : index
    %c0_36 = arith.constant 0 : index
    %c0_37 = arith.constant 0 : index
    %50 = vector.load %arg2[%c3_35, %c0_36, %c0_37] : memref<9x32x32xf32, #tpu.memory_space<vmem>>, vector<1x32x32xf32>
    %51 = vector.shape_cast %50 : vector<1x32x32xf32> to vector<32x32xf32>
    %cst_38 = arith.constant dense<0.000000e+00> : vector<256x32xf32>
    %52 = tpu.matmul %17, %51, %cst_38 {dimension_numbers = #tpu.dot_dimension_numbers<[1], [0], [0], [1], [0, 0, 1, 1], [], []>} : vector<256x32xf32>, vector<32x32xf32>, vector<256x32xf32> -> vector<256x32xf32>
    %53 = vector.extract_strided_slice %52 {offsets = [56, 0], sizes = [128, 32], strides = [1, 1]} : vector<256x32xf32> to vector<128x32xf32>
    %c4 = arith.constant 4 : index
    %c0_39 = arith.constant 0 : index
    %c0_40 = arith.constant 0 : index
    %54 = vector.load %arg2[%c4, %c0_39, %c0_40] : memref<9x32x32xf32, #tpu.memory_space<vmem>>, vector<1x32x32xf32>
    %55 = vector.shape_cast %54 : vector<1x32x32xf32> to vector<32x32xf32>
    %cst_41 = arith.constant dense<0.000000e+00> : vector<128x32xf32>
    %56 = tpu.matmul %1, %55, %cst_41 {dimension_numbers = #tpu.dot_dimension_numbers<[1], [0], [0], [1], [0, 0, 1, 1], [], []>} : vector<128x32xf32>, vector<32x32xf32>, vector<128x32xf32> -> vector<128x32xf32>
    %c5 = arith.constant 5 : index
    %c0_42 = arith.constant 0 : index
    %c0_43 = arith.constant 0 : index
    %57 = vector.load %arg2[%c5, %c0_42, %c0_43] : memref<9x32x32xf32, #tpu.memory_space<vmem>>, vector<1x32x32xf32>
    %58 = vector.shape_cast %57 : vector<1x32x32xf32> to vector<32x32xf32>
    %cst_44 = arith.constant dense<0.000000e+00> : vector<256x32xf32>
    %59 = tpu.matmul %17, %58, %cst_44 {dimension_numbers = #tpu.dot_dimension_numbers<[1], [0], [0], [1], [0, 0, 1, 1], [], []>} : vector<256x32xf32>, vector<32x32xf32>, vector<256x32xf32> -> vector<256x32xf32>
    %60 = vector.extract_strided_slice %59 {offsets = [72, 0], sizes = [128, 32], strides = [1, 1]} : vector<256x32xf32> to vector<128x32xf32>
    %61 = arith.mulf %53, %20 : vector<128x32xf32>
    %62 = arith.mulf %60, %24 : vector<128x32xf32>
    %63 = arith.addf %61, %56 : vector<128x32xf32>
    %64 = arith.addf %63, %62 : vector<128x32xf32>
    %65 = vector.extract_strided_slice %18 {offsets = [1, 0], sizes = [1, 32], strides = [1, 1]} : vector<3x32xf32> to vector<1x32xf32>
    %66 = vector.broadcast %65 : vector<1x32xf32> to vector<128x32xf32>
    %67 = arith.addf %64, %66 : vector<128x32xf32>
    %68 = arith.negf %67 : vector<128x32xf32>
    %69 = math.exp %68 : vector<128x32xf32>
    %cst_45 = arith.constant 1.000000e+00 : f32
    %70 = vector.broadcast %cst_45 : f32 to vector<128x32xf32>
    %71 = arith.addf %70, %69 : vector<128x32xf32>
    %72 = arith.divf %70, %71 : vector<128x32xf32>
    %73 = arith.addf %49, %72 : vector<128x32xf32>
    %c6 = arith.constant 6 : index
    %c0_46 = arith.constant 0 : index
    %c0_47 = arith.constant 0 : index
    %74 = vector.load %arg2[%c6, %c0_46, %c0_47] : memref<9x32x32xf32, #tpu.memory_space<vmem>>, vector<1x32x32xf32>
    %75 = vector.shape_cast %74 : vector<1x32x32xf32> to vector<32x32xf32>
    %cst_48 = arith.constant dense<0.000000e+00> : vector<256x32xf32>
    %76 = tpu.matmul %17, %75, %cst_48 {dimension_numbers = #tpu.dot_dimension_numbers<[1], [0], [0], [1], [0, 0, 1, 1], [], []>} : vector<256x32xf32>, vector<32x32xf32>, vector<256x32xf32> -> vector<256x32xf32>
    %77 = vector.extract_strided_slice %76 {offsets = [63, 0], sizes = [128, 32], strides = [1, 1]} : vector<256x32xf32> to vector<128x32xf32>
    %c7 = arith.constant 7 : index
    %c0_49 = arith.constant 0 : index
    %c0_50 = arith.constant 0 : index
    %78 = vector.load %arg2[%c7, %c0_49, %c0_50] : memref<9x32x32xf32, #tpu.memory_space<vmem>>, vector<1x32x32xf32>
    %79 = vector.shape_cast %78 : vector<1x32x32xf32> to vector<32x32xf32>
    %cst_51 = arith.constant dense<0.000000e+00> : vector<128x32xf32>
    %80 = tpu.matmul %1, %79, %cst_51 {dimension_numbers = #tpu.dot_dimension_numbers<[1], [0], [0], [1], [0, 0, 1, 1], [], []>} : vector<128x32xf32>, vector<32x32xf32>, vector<128x32xf32> -> vector<128x32xf32>
    %c8 = arith.constant 8 : index
    %c0_52 = arith.constant 0 : index
    %c0_53 = arith.constant 0 : index
    %81 = vector.load %arg2[%c8, %c0_52, %c0_53] : memref<9x32x32xf32, #tpu.memory_space<vmem>>, vector<1x32x32xf32>
    %82 = vector.shape_cast %81 : vector<1x32x32xf32> to vector<32x32xf32>
    %cst_54 = arith.constant dense<0.000000e+00> : vector<256x32xf32>
    %83 = tpu.matmul %17, %82, %cst_54 {dimension_numbers = #tpu.dot_dimension_numbers<[1], [0], [0], [1], [0, 0, 1, 1], [], []>} : vector<256x32xf32>, vector<32x32xf32>, vector<256x32xf32> -> vector<256x32xf32>
    %84 = vector.extract_strided_slice %83 {offsets = [65, 0], sizes = [128, 32], strides = [1, 1]} : vector<256x32xf32> to vector<128x32xf32>
    %85 = arith.mulf %77, %22 : vector<128x32xf32>
    %86 = arith.mulf %84, %26 : vector<128x32xf32>
    %87 = arith.addf %85, %80 : vector<128x32xf32>
    %88 = arith.addf %87, %86 : vector<128x32xf32>
    %89 = vector.extract_strided_slice %18 {offsets = [2, 0], sizes = [1, 32], strides = [1, 1]} : vector<3x32xf32> to vector<1x32xf32>
    %90 = vector.broadcast %89 : vector<1x32xf32> to vector<128x32xf32>
    %91 = arith.addf %88, %90 : vector<128x32xf32>
    %92 = arith.negf %91 : vector<128x32xf32>
    %93 = math.exp %92 : vector<128x32xf32>
    %cst_55 = arith.constant 1.000000e+00 : f32
    %94 = vector.broadcast %cst_55 : f32 to vector<128x32xf32>
    %95 = arith.addf %94, %93 : vector<128x32xf32>
    %96 = arith.divf %94, %95 : vector<128x32xf32>
    %97 = arith.addf %73, %96 : vector<128x32xf32>
    %98 = arith.mulf %97, %1 : vector<128x32xf32>
    %c0_56 = arith.constant 0 : index
    %c0_57 = arith.constant 0 : index
    %c0_58 = arith.constant 0 : index
    %99 = vector.load %arg8[%c0_56, %c0_57, %c0_58] : memref<1x128x32xf32, #tpu.memory_space<vmem>>, vector<1x128x32xf32>
    %100 = vector.shape_cast %99 : vector<1x128x32xf32> to vector<128x32xf32>
    %101 = vector.shape_cast %98 : vector<128x32xf32> to vector<1x128x32xf32>
    tpu.vector_store %arg8[%c0_56, %c0_57, %c0_58], %101 {strides = array<i32>} : memref<1x128x32xf32, #tpu.memory_space<vmem>>, vector<1x128x32xf32>,
    return
  }
  func.func @transform_0(%arg0: i32, %arg1: i32) -> (i32, i32, i32) {
    %c0_i32 = arith.constant 0 : i32
    %c0_i32_0 = arith.constant 0 : i32
    %c0_i32_1 = arith.constant 0 : i32
    %c0_i32_2 = arith.constant 0 : i32
    return %c0_i32, %c0_i32_0, %c0_i32_1 : i32, i32, i32
  }
  func.func @transform_1(%arg0: i32, %arg1: i32) -> (i32, i32) {
    %c0_i32 = arith.constant 0 : i32
    %c0_i32_0 = arith.constant 0 : i32
    %c0_i32_1 = arith.constant 0 : i32
    return %c0_i32, %c0_i32_0 : i32, i32
  }
  func.func @transform_2(%arg0: i32, %arg1: i32) -> (i32, i32, i32) {
    %c0_i32 = arith.constant 0 : i32
    %c0_i32_0 = arith.constant 0 : i32
    %c0_i32_1 = arith.constant 0 : i32
    %c0_i32_2 = arith.constant 0 : i32
    return %c0_i32, %c0_i32_0, %c0_i32_1 : i32, i32, i32
  }
  func.func @transform_3(%arg0: i32, %arg1: i32) -> (i32, i32, i32) {
    %c0_i32 = arith.constant 0 : i32
    %c0_i32_0 = arith.constant 0 : i32
    return %arg0, %arg1, %c0_i32 : i32, i32, i32
  }
  func.func @transform_4(%arg0: i32, %arg1: i32) -> (i32, i32, i32) {
    %c2_i32 = arith.constant 2 : i32
    %0 = arith.muli %arg1, %c2_i32 : i32
    %c1_i32 = arith.constant 1 : i32
    %1 = arith.subi %0, %c1_i32 : i32
    %c0_i32 = arith.constant 0 : i32
    %2 = arith.maxsi %1, %c0_i32 : i32
    %c0_i32_0 = arith.constant 0 : i32
    %c0_i32_1 = arith.constant 0 : i32
    return %arg0, %2, %c0_i32_0 : i32, i32, i32
  }
  func.func @transform_5(%arg0: i32, %arg1: i32) -> (i32, i32, i32) {
    %c1_i32 = arith.constant 1 : i32
    %0 = arith.addi %arg1, %c1_i32 : i32
    %c2_i32 = arith.constant 2 : i32
    %1 = arith.muli %0, %c2_i32 : i32
    %c7_i32 = arith.constant 7 : i32
    %2 = arith.minsi %1, %c7_i32 : i32
    %c0_i32 = arith.constant 0 : i32
    %c0_i32_0 = arith.constant 0 : i32
    return %arg0, %2, %c0_i32 : i32, i32, i32
  }
  func.func @transform_6(%arg0: i32, %arg1: i32) -> (i32, i32, i32) {
    %c0_i32 = arith.constant 0 : i32
    %c0_i32_0 = arith.constant 0 : i32
    return %arg0, %arg1, %c0_i32 : i32, i32, i32
  }
}

</mosaic_0001>

<llo_original>
// kernel: tpu_custom_call.1
$region0: #{tpu_custom_call.1}
  #allocation0 [shape = 'u32[]', space=smem, size = 0x4, offset = 0x4, fixed_abs, tag = 'smem constant byte address 0x4 - core index']
  #allocation1 [shape = 'u32[144,128]{1,0:T(1,128)}', space=vmem, size = 0x12000, scoped, tag = 'internal scratch']
  %s0 = inlined_call_operand.vmem [shape: f32[9,32,32], index: 0, kind: input, shape index: {}]
  %s1 = inlined_call_operand.vmem [shape: f32[3,32], index: 1, kind: input, shape index: {}]
  %s2 = inlined_call_operand.vmem [shape: f32[4,128,32], index: 2, kind: input, shape index: {}]
  %s3 = inlined_call_operand.vmem [shape: f32[2,512,32], index: 3, kind: input, shape index: {}]
  %s4 = inlined_call_operand.vmem [shape: f32[2,512,32], index: 4, kind: input, shape index: {}]
  %s5 = inlined_call_operand.vmem [shape: f32[2,512,32], index: 5, kind: input, shape index: {}]
  %s6 = inlined_call_operand.vmem [shape: f32[2,512,32], index: 6, kind: output, shape index: {}]
  %s7 = sld [smem:[#allocation0]]
  $region57: #{tpu_custom_call.1} parent=0
    _
  %s9 = ssub.s32 1, %s7
  %s10 = scalar_select 0, %s9, %s7
  loop: start=0, step=1, limit=10
  $region2: #{tpu_custom_call.1} parent=0 // loop_pre_header
    _
  $region3: #{tpu_custom_call.1} parent=0 // loop_header
    %s12 = sphi 0, %s16
    %p13 = scmp.ge.s32.totalorder %s12, 10
    %s19 = sphi 0, %s31
    %s20 = sphi 0, %s27
    %s21 = sphi 0, %s19
    %s22 = sphi 0, %s20
    %s23 = sphi 0, %s21
    %s24 = sphi 0, %s22
    %s32 = sphi 0, %s32
    %s34 = sphi 0, %s32
    %s35 = sphi 0, %s34
    %s49 = sphi 0, %s35
    %s53 = sphi 0, %s53
    %s55 = sphi 0, %s53
    %s56 = sphi 0, %s55
    %s70 = sphi 0, %s56
    %s74 = sphi 0, %s74
    %s76 = sphi 0, %s74
    %s77 = sphi 0, %s76
    %s91 = sphi 0, %s77
    %s99 = sphi 0, %s101
    %s102 = sphi 0, %s99
    %s103 = sphi 0, %s102
    %s119 = sphi 0, %s103
    %s135 = sphi 0, %s137
    %s138 = sphi 0, %s135
    %s139 = sphi 0, %s138
    %s155 = sphi 0, %s139
    %s171 = sphi 0, %s173
    %s174 = sphi 0, %s171
    %s175 = sphi 0, %s174
    %s191 = sphi 0, %s175
    %s199 = sphi 0, %s201
    %s202 = sphi 0, %s199
    %s203 = sphi 0, %s202
    %s219 = sphi 0, %s203
  $region4: #{tpu_custom_call.1} parent=0 // loop_header_branch
    %15 = sbr.rel (%p13) target = $region8
  $region5: #{tpu_custom_call.1} parent=0 // loop_body
    %s17 = ssub.s32 %s12, 1
    %s18 = ssub.s32 %s12, 2
    %s25 = sadd.s32 1, %s20
    %p26 = scmp.ge.s32.totalorder %s25, 4
    %s27 = scalar_select %p26, 0, %s25
    %s28 = sadd.s32 1, %s19
    %s29 = scalar_select %p26, %s28, %s19
    %p30 = scmp.ge.s32.totalorder %s29, 2
    %s31 = scalar_select %p30, 0, %s29
    %s33 = sadd.s32 %s32, 1
    %p36 = scmp.eq.s32.totalorder %s12, 7
    %p37 = scmp.ne.s32.totalorder %s32, %s34
    %p38 = scmp.eq.s32.totalorder %s12, 0
    %p39 = por %p37, %p38
    %p40 = scmp.ne.s32.totalorder %s32, %s34
    %p41 = scmp.eq.s32.totalorder %s17, 7
    %p42 = por %p40, %p41
    %p43 = scmp.ne.s32.totalorder %s34, %s35
    %p44 = scmp.eq.s32.totalorder %s17, 0
    %p45 = por %p43, %p44
    %p46 = scmp.ne.s32.totalorder %s34, %s35
    %p47 = scmp.eq.s32.totalorder %s18, 7
    %p48 = por %p46, %p47
    %p50 = scmp.ne.s32.totalorder %s35, %s49
    %p51 = scmp.eq.s32.totalorder %s18, 0
    %p52 = por %p50, %p51
    %s54 = sadd.s32 %s53, 1
    %p57 = scmp.eq.s32.totalorder %s12, 7
    %p58 = scmp.ne.s32.totalorder %s53, %s55
    %p59 = scmp.eq.s32.totalorder %s12, 0
    %p60 = por %p58, %p59
    %p61 = scmp.ne.s32.totalorder %s53, %s55
    %p62 = scmp.eq.s32.totalorder %s17, 7
    %p63 = por %p61, %p62
    %p64 = scmp.ne.s32.totalorder %s55, %s56
    %p65 = scmp.eq.s32.totalorder %s17, 0
    %p66 = por %p64, %p65
    %p67 = scmp.ne.s32.totalorder %s55, %s56
    %p68 = scmp.eq.s32.totalorder %s18, 7
    %p69 = por %p67, %p68
    %p71 = scmp.ne.s32.totalorder %s56, %s70
    %p72 = scmp.eq.s32.totalorder %s18, 0
    %p73 = por %p71, %p72
    %s75 = sadd.s32 %s74, 1
    %p78 = scmp.eq.s32.totalorder %s12, 7
    %p79 = scmp.ne.s32.totalorder %s74, %s76
    %p80 = scmp.eq.s32.totalorder %s12, 0
    %p81 = por %p79, %p80
    %p82 = scmp.ne.s32.totalorder %s74, %s76
    %p83 = scmp.eq.s32.totalorder %s17, 7
    %p84 = por %p82, %p83
    %p85 = scmp.ne.s32.totalorder %s76, %s77
    %p86 = scmp.eq.s32.totalorder %s17, 0
    %p87 = por %p85, %p86
    %p88 = scmp.ne.s32.totalorder %s76, %s77
    %p89 = scmp.eq.s32.totalorder %s18, 7
    %p90 = por %p88, %p89
    %p92 = scmp.ne.s32.totalorder %s77, %s91
    %p93 = scmp.eq.s32.totalorder %s18, 0
    %p94 = por %p92, %p93
    %s95 = ssub.s32 %s19, %s31
    %s96 = ssub.s32 %s20, %s27
    %s97 = sor.u32 %s95, %s96
    %p98 = scmp.eq.s32.totalorder %s97, 0
    %s100 = sadd.s32 %s99, 1
    %s101 = scalar_select %p98, %s99, %s100
    %p104 = pneg %p98
    %p105 = scmp.eq.s32.totalorder %s12, 7
    %p106 = por %p104, %p105
    %p107 = scmp.ne.s32.totalorder %s99, %s102
    %p108 = scmp.eq.s32.totalorder %s12, 0
    %p109 = por %p107, %p108
    %p110 = scmp.ne.s32.totalorder %s99, %s102
    %p111 = scmp.eq.s32.totalorder %s17, 7
    %p112 = por %p110, %p111
    %p113 = scmp.ne.s32.totalorder %s102, %s103
    %p114 = scmp.eq.s32.totalorder %s17, 0
    %p115 = por %p113, %p114
    %p116 = scmp.ne.s32.totalorder %s102, %s103
    %p117 = scmp.eq.s32.totalorder %s18, 7
    %p118 = por %p116, %p117
    %p120 = scmp.ne.s32.totalorder %s103, %s119
    %p121 = scmp.eq.s32.totalorder %s18, 0
    %p122 = por %p120, %p121
    %s123 = smul.u32 %s20, 2
    %s124 = ssub.s32 %s123, 1
    %p125 = scmp.gt.s32.totalorder %s124, 0
    %s126 = scalar_select %p125, %s124, 0
    %s127 = smul.u32 %s27, 2
    %s128 = ssub.s32 %s127, 1
    %p129 = scmp.gt.s32.totalorder %s128, 0
    %s130 = scalar_select %p129, %s128, 0
    %s131 = ssub.s32 %s19, %s31
    %s132 = ssub.s32 %s126, %s130
    %s133 = sor.u32 %s131, %s132
    %p134 = scmp.eq.s32.totalorder %s133, 0
    %s136 = sadd.s32 %s135, 1
    %s137 = scalar_select %p134, %s135, %s136
    %p140 = pneg %p134
    %p141 = scmp.eq.s32.totalorder %s12, 7
    %p142 = por %p140, %p141
    %p143 = scmp.ne.s32.totalorder %s135, %s138
    %p144 = scmp.eq.s32.totalorder %s12, 0
    %p145 = por %p143, %p144
    %p146 = scmp.ne.s32.totalorder %s135, %s138
    %p147 = scmp.eq.s32.totalorder %s17, 7
    %p148 = por %p146, %p147
    %p149 = scmp.ne.s32.totalorder %s138, %s139
    %p150 = scmp.eq.s32.totalorder %s17, 0
    %p151 = por %p149, %p150
    %p152 = scmp.ne.s32.totalorder %s138, %s139
    %p153 = scmp.eq.s32.totalorder %s18, 7
    %p154 = por %p152, %p153
    %p156 = scmp.ne.s32.totalorder %s139, %s155
    %p157 = scmp.eq.s32.totalorder %s18, 0
    %p158 = por %p156, %p157
    %s159 = sadd.s32 %s20, 1
    %s160 = smul.u32 %s159, 2
    %p161 = scmp.lt.s32.totalorder %s160, 7
    %s162 = scalar_select %p161, %s160, 7
    %s163 = sadd.s32 %s27, 1
    %s164 = smul.u32 %s163, 2
    %p165 = scmp.lt.s32.totalorder %s164, 7
    %s166 = scalar_select %p165, %s164, 7
    %s167 = ssub.s32 %s19, %s31
    %s168 = ssub.s32 %s162, %s166
    %s169 = sor.u32 %s167, %s168
    %p170 = scmp.eq.s32.totalorder %s169, 0
    %s172 = sadd.s32 %s171, 1
    %s173 = scalar_select %p170, %s171, %s172
    %p176 = pneg %p170
    %p177 = scmp.eq.s32.totalorder %s12, 7
    %p178 = por %p176, %p177
    %p179 = scmp.ne.s32.totalorder %s171, %s174
    %p180 = scmp.eq.s32.totalorder %s12, 0
    %p181 = por %p179, %p180
    %p182 = scmp.ne.s32.totalorder %s171, %s174
    %p183 = scmp.eq.s32.totalorder %s17, 7
    %p184 = por %p182, %p183
    %p185 = scmp.ne.s32.totalorder %s174, %s175
    %p186 = scmp.eq.s32.totalorder %s17, 0
    %p187 = por %p185, %p186
    %p188 = scmp.ne.s32.totalorder %s174, %s175
    %p189 = scmp.eq.s32.totalorder %s18, 7
    %p190 = por %p188, %p189
    %p192 = scmp.ne.s32.totalorder %s175, %s191
    %p193 = scmp.eq.s32.totalorder %s18, 0
    %p194 = por %p192, %p193
    %s195 = ssub.s32 %s19, %s31
    %s196 = ssub.s32 %s20, %s27
    %s197 = sor.u32 %s195, %s196
    %p198 = scmp.eq.s32.totalorder %s197, 0
    %s200 = sadd.s32 %s199, 1
    %s201 = scalar_select %p198, %s199, %s200
    %p204 = pneg %p198
    %p205 = scmp.eq.s32.totalorder %s12, 7
    %p206 = por %p204, %p205
    %p207 = scmp.ne.s32.totalorder %s199, %s202
    %p208 = scmp.eq.s32.totalorder %s12, 0
    %p209 = por %p207, %p208
    %p210 = scmp.ne.s32.totalorder %s199, %s202
    %p211 = scmp.eq.s32.totalorder %s17, 7
    %p212 = por %p210, %p211
    %p213 = scmp.ne.s32.totalorder %s202, %s203
    %p214 = scmp.eq.s32.totalorder %s17, 0
    %p215 = por %p213, %p214
    %p216 = scmp.ne.s32.totalorder %s202, %s203
    %p217 = scmp.eq.s32.totalorder %s18, 7
    %p218 = por %p216, %p217
    %p220 = scmp.ne.s32.totalorder %s203, %s219
    %p221 = scmp.eq.s32.totalorder %s18, 0
    %p222 = por %p220, %p221
    %p223 = scmp.le.s32.totalorder 1, %s12
    %p224 = scmp.lt.s32.totalorder %s12, 9
    %p225 = pnand %p223, %p224
    %p226 = pneg %p225
    // Predicated region
    $region9: #{tpu_custom_call.1} parent=5 // pred_check
      _
    $region10: #{tpu_custom_call.1} parent=5 // pred_check_branch
      %228 = sbr.rel (%p225) target = $region12
    $region11: #{tpu_custom_call.1} parent=5 // pred_region
      %s229 = ssub.s32 %s12, 1
      // Predicated region
      $region13: #{tpu_custom_call.1} parent=11 // pred_check
        %p230 = pneg %p45
      $region14: #{tpu_custom_call.1} parent=11 // pred_check_branch
        %232 = sbr.rel (%p230) target = $region16
      $region15: #{tpu_custom_call.1} parent=11 // pred_region
        _
      $region16: #{tpu_custom_call.1} parent=11 // pred_fallthru
        _
      // Predicated region
      $region17: #{tpu_custom_call.1} parent=11 // pred_check
        %p233 = pneg %p66
      $region18: #{tpu_custom_call.1} parent=11 // pred_check_branch
        %235 = sbr.rel (%p233) target = $region20
      $region19: #{tpu_custom_call.1} parent=11 // pred_region
        _
      $region20: #{tpu_custom_call.1} parent=11 // pred_fallthru
        _
      // Predicated region
      $region21: #{tpu_custom_call.1} parent=11 // pred_check
        %p236 = pneg %p87
      $region22: #{tpu_custom_call.1} parent=11 // pred_check_branch
        %238 = sbr.rel (%p236) target = $region24
      $region23: #{tpu_custom_call.1} parent=11 // pred_region
        _
      $region24: #{tpu_custom_call.1} parent=11 // pred_fallthru
        _
    $region12: #{tpu_custom_call.1} parent=5 // pred_fallthru
      _
    %p239 = scmp.lt.s32.totalorder %s12, 8
    // Predicated region
    $region25: #{tpu_custom_call.1} parent=5 // pred_check
      %p240 = pneg %p239
    $region26: #{tpu_custom_call.1} parent=5 // pred_check_branch
      %242 = sbr.rel (%p240) target = $region28
    $region27: #{tpu_custom_call.1} parent=5 // pred_region
      // Predicated region
      $region29: #{tpu_custom_call.1} parent=27 // pred_check
        %p243 = pneg %p109
      $region30: #{tpu_custom_call.1} parent=27 // pred_check_branch
        %245 = sbr.rel (%p243) target = $region32
      $region31: #{tpu_custom_call.1} parent=27 // pred_region
        %s246 = smul.u32 16, %s20
        %p247 = scmp.lt.s32.totalorder %s19, 1
        %s248 = scalar_select %p247, %s19, 1
        %p249 = scmp.lt.s32.totalorder %s246, 63
        %s250 = scalar_select %p249, %s246, 63
        %s251 = smul.addr %s248, 64
        %s252 = sadd.s32 %s250, %s251
        %s253 = smul.addr %s252, 8
        %s254 = scalar_lea.vmem %s3, %s253
        %s255 = smul.u32 16, %s20
      $region32: #{tpu_custom_call.1} parent=27 // pred_fallthru
        _
      // Predicated region
      $region33: #{tpu_custom_call.1} parent=27 // pred_check
        %p256 = pneg %p145
      $region34: #{tpu_custom_call.1} parent=27 // pred_check_branch
        %258 = sbr.rel (%p256) target = $region36
      $region35: #{tpu_custom_call.1} parent=27 // pred_region
        %s259 = smul.u32 %s20, 2
        %s260 = ssub.s32 %s259, 1
        %p261 = scmp.gt.s32.totalorder %s260, 0
        %s262 = scalar_select %p261, %s260, 0
        %s263 = smul.u32 8, %s262
        %p264 = scmp.lt.s32.totalorder %s19, 1
        %s265 = scalar_select %p264, %s19, 1
        %p266 = scmp.lt.s32.totalorder %s263, 63
        %s267 = scalar_select %p266, %s263, 63
        %s268 = smul.addr %s265, 64
        %s269 = sadd.s32 %s267, %s268
        %s270 = smul.addr %s269, 8
        %s271 = scalar_lea.vmem %s4, %s270
        %s272 = smul.u32 %s20, 2
        %s273 = ssub.s32 %s272, 1
        %p274 = scmp.gt.s32.totalorder %s273, 0
        %s275 = scalar_select %p274, %s273, 0
        %s276 = smul.u32 8, %s275
      $region36: #{tpu_custom_call.1} parent=27 // pred_fallthru
        _
      // Predicated region
      $region37: #{tpu_custom_call.1} parent=27 // pred_check
        %p277 = pneg %p181
      $region38: #{tpu_custom_call.1} parent=27 // pred_check_branch
        %279 = sbr.rel (%p277) target = $region40
      $region39: #{tpu_custom_call.1} parent=27 // pred_region
        %s280 = sadd.s32 %s20, 1
        %s281 = smul.u32 %s280, 2
        %p282 = scmp.lt.s32.totalorder %s281, 7
        %s283 = scalar_select %p282, %s281, 7
        %s284 = smul.u32 8, %s283
        %p285 = scmp.lt.s32.totalorder %s19, 1
        %s286 = scalar_select %p285, %s19, 1
        %p287 = scmp.lt.s32.totalorder %s284, 63
        %s288 = scalar_select %p287, %s284, 63
        %s289 = smul.addr %s286, 64
        %s290 = sadd.s32 %s288, %s289
        %s291 = smul.addr %s290, 8
        %s292 = scalar_lea.vmem %s5, %s291
        %s293 = sadd.s32 %s20, 1
        %s294 = smul.u32 %s293, 2
        %p295 = scmp.lt.s32.totalorder %s294, 7
        %s296 = scalar_select %p295, %s294, 7
        %s297 = smul.u32 8, %s296
      $region40: #{tpu_custom_call.1} parent=27 // pred_fallthru
        _
    $region28: #{tpu_custom_call.1} parent=5 // pred_fallthru
      _
    %p298 = scmp.le.s32.totalorder 1, %s12
    %p299 = scmp.lt.s32.totalorder %s12, 9
    %p300 = pnand %p298, %p299
    %p301 = pneg %p300
    // Predicated region
    $region41: #{tpu_custom_call.1} parent=5 // pred_check
      _
    $region42: #{tpu_custom_call.1} parent=5 // pred_check_branch
      %303 = sbr.rel (%p300) target = $region44
    $region43: #{tpu_custom_call.1} parent=5 // pred_region
      %s304 = ssub.s32 %s12, 1
      %p305 = pneg %p45
      %p306 = pneg %p42
      %p307 = pneg %p66
      %p308 = pneg %p63
      %p309 = pneg %p87
      %p310 = pneg %p84
      %s311 = smul.u32 16, %s22
      %p312 = scmp.lt.s32.totalorder %s21, 1
      %s313 = scalar_select %p312, %s21, 1
      %p314 = scmp.lt.s32.totalorder %s311, 63
      %s315 = scalar_select %p314, %s311, 63
      %s316 = smul.addr %s313, 64
      %s317 = sadd.s32 %s315, %s316
      %s318 = smul.addr %s317, 8
      %s319 = scalar_lea.vmem %s3, %s318
      %p320 = pneg %p115
      %p321 = pneg %p112
      %s322 = smul.u32 %s22, 2
      %s323 = ssub.s32 %s322, 1
      %p324 = scmp.gt.s32.totalorder %s323, 0
      %s325 = scalar_select %p324, %s323, 0
      %s326 = smul.u32 8, %s325
      %p327 = scmp.lt.s32.totalorder %s21, 1
      %s328 = scalar_select %p327, %s21, 1
      %p329 = scmp.lt.s32.totalorder %s326, 63
      %s330 = scalar_select %p329, %s326, 63
      %s331 = smul.addr %s328, 64
      %s332 = sadd.s32 %s330, %s331
      %s333 = smul.addr %s332, 8
      %s334 = scalar_lea.vmem %s4, %s333
      %p335 = pneg %p151
      %p336 = pneg %p148
      %s337 = sadd.s32 %s22, 1
      %s338 = smul.u32 %s337, 2
      %p339 = scmp.lt.s32.totalorder %s338, 7
      %s340 = scalar_select %p339, %s338, 7
      %s341 = smul.u32 8, %s340
      %p342 = scmp.lt.s32.totalorder %s21, 1
      %s343 = scalar_select %p342, %s21, 1
      %p344 = scmp.lt.s32.totalorder %s341, 63
      %s345 = scalar_select %p344, %s341, 63
      %s346 = smul.addr %s343, 64
      %s347 = sadd.s32 %s345, %s346
      %s348 = smul.addr %s347, 8
      %s349 = scalar_lea.vmem %s5, %s348
      %p350 = pneg %p187
      %p351 = pneg %p184
      %p352 = pneg %p215
      %p353 = pneg %p212
      %s354 = smul.u32 16, %s22
      %p355 = scmp.lt.s32.totalorder %s21, 1
      %s356 = scalar_select %p355, %s21, 1
      %p357 = scmp.lt.s32.totalorder %s354, 63
      %s358 = scalar_select %p357, %s354, 63
      %s359 = smul.addr %s356, 64
      %s360 = sadd.s32 %s358, %s359
      %s361 = smul.addr %s360, 8
      %s362 = scalar_lea.vmem %s6, %s361
      %s363 = smul.u32 16, %s22
      %p364 = scmp.lt.s32.totalorder %s21, 1
      %s365 = scalar_select %p364, %s21, 1
      %p366 = scmp.lt.s32.totalorder %s363, 63
      %s367 = scalar_select %p366, %s363, 63
      %s368 = smul.addr %s365, 64
      %s369 = sadd.s32 %s367, %s368
      %s370 = smul.addr %s369, 8
      %s371 = scalar_lea.vmem %s3, %s370
      %s372 = smul.u32 16, %s22
      %s373 = smul.u32 %s22, 2
      %s374 = ssub.s32 %s373, 1
      %p375 = scmp.gt.s32.totalorder %s374, 0
      %s376 = scalar_select %p375, %s374, 0
      %s377 = smul.u32 8, %s376
      %p378 = scmp.lt.s32.totalorder %s21, 1
      %s379 = scalar_select %p378, %s21, 1
      %p380 = scmp.lt.s32.totalorder %s377, 63
      %s381 = scalar_select %p380, %s377, 63
      %s382 = smul.addr %s379, 64
      %s383 = sadd.s32 %s381, %s382
      %s384 = smul.addr %s383, 8
      %s385 = scalar_lea.vmem %s4, %s384
      %s386 = smul.u32 %s22, 2
      %s387 = ssub.s32 %s386, 1
      %p388 = scmp.gt.s32.totalorder %s387, 0
      %s389 = scalar_select %p388, %s387, 0
      %s390 = smul.u32 8, %s389
      %s391 = sadd.s32 %s22, 1
      %s392 = smul.u32 %s391, 2
      %p393 = scmp.lt.s32.totalorder %s392, 7
      %s394 = scalar_select %p393, %s392, 7
      %s395 = smul.u32 8, %s394
      %p396 = scmp.lt.s32.totalorder %s21, 1
      %s397 = scalar_select %p396, %s21, 1
      %p398 = scmp.lt.s32.totalorder %s395, 63
      %s399 = scalar_select %p398, %s395, 63
      %s400 = smul.addr %s397, 64
      %s401 = sadd.s32 %s399, %s400
      %s402 = smul.addr %s401, 8
      %s403 = scalar_lea.vmem %s5, %s402
      %s404 = sadd.s32 %s22, 1
      %s405 = smul.u32 %s404, 2
      %p406 = scmp.lt.s32.totalorder %s405, 7
      %s407 = scalar_select %p406, %s405, 7
      %s408 = smul.u32 8, %s407
      %s409 = smul.u32 16, %s22
      %p410 = scmp.lt.s32.totalorder %s21, 1
      %s411 = scalar_select %p410, %s21, 1
      %p412 = scmp.lt.s32.totalorder %s409, 63
      %s413 = scalar_select %p412, %s409, 63
      %s414 = smul.addr %s411, 64
      %s415 = sadd.s32 %s413, %s414
      %s416 = smul.addr %s415, 8
      %s417 = scalar_lea.vmem %s6, %s416
      %s418 = smul.u32 16, %s22
      %v419 = vld [vmem:[%s371] sm:$0xff]
      %v420 = vld [vmem:[%s371 + $0x8] sm:$0xff]
      %v421 = vld [vmem:[%s371 + $0x10] sm:$0xff]
      %v422 = vld [vmem:[%s371 + $0x18] sm:$0xff]
      %v423 = vld [vmem:[%s371 + $0x20] sm:$0xff]
      %v424 = vld [vmem:[%s371 + $0x28] sm:$0xff]
      %v425 = vld [vmem:[%s371 + $0x30] sm:$0xff]
      %v426 = vld [vmem:[%s371 + $0x38] sm:$0xff]
      %v427 = vld [vmem:[%s371 + $0x40] sm:$0xff]
      %v428 = vld [vmem:[%s371 + $0x48] sm:$0xff]
      %v429 = vld [vmem:[%s371 + $0x50] sm:$0xff]
      %v430 = vld [vmem:[%s371 + $0x58] sm:$0xff]
      %v431 = vld [vmem:[%s371 + $0x60] sm:$0xff]
      %v432 = vld [vmem:[%s371 + $0x68] sm:$0xff]
      %v433 = vld [vmem:[%s371 + $0x70] sm:$0xff]
      %v434 = vld [vmem:[%s371 + $0x78] sm:$0xff]
      %v435 = vstv %s22
      %vm436 = vcmp.gt.s32.totalorder %v435, 0
      %v437 = vld [vmem:[%s385] sm:$0xff]
      %v438 = vld [vmem:[%s385 + $0x8] sm:$0xff]
      %v439 = vld [vmem:[%s385 + $0x10] sm:$0xff]
      %v440 = vld [vmem:[%s385 + $0x18] sm:$0xff]
      %v441 = vld [vmem:[%s385 + $0x20] sm:$0xff]
      %v442 = vld [vmem:[%s385 + $0x28] sm:$0xff]
      %v443 = vld [vmem:[%s385 + $0x30] sm:$0xff]
      %v444 = vld [vmem:[%s385 + $0x38] sm:$0xff]
      %v445 = vsel %vm436, %v437, 0.0
      %v446 = vsel %vm436, %v438, 0.0
      %v447 = vsel %vm436, %v439, 0.0
      %v448 = vsel %vm436, %v440, 0.0
      %v449 = vsel %vm436, %v441, 0.0
      %v450 = vsel %vm436, %v442, 0.0
      %v451 = vsel %vm436, %v443, 0.0
      %v452 = vsel %vm436, %v444, 0.0
      %vm453 = vcmp.lt.s32.totalorder %v435, 3
      %v454 = vld [vmem:[%s403] sm:$0xff]
      %v455 = vld [vmem:[%s403 + $0x8] sm:$0xff]
      %v456 = vld [vmem:[%s403 + $0x10] sm:$0xff]
      %v457 = vld [vmem:[%s403 + $0x18] sm:$0xff]
      %v458 = vld [vmem:[%s403 + $0x20] sm:$0xff]
      %v459 = vld [vmem:[%s403 + $0x28] sm:$0xff]
      %v460 = vld [vmem:[%s403 + $0x30] sm:$0xff]
      %v461 = vld [vmem:[%s403 + $0x38] sm:$0xff]
      %v462 = vsel %vm453, %v454, 0.0
      %v463 = vsel %vm453, %v455, 0.0
      %v464 = vsel %vm453, %v456, 0.0
      %v465 = vsel %vm453, %v457, 0.0
      %v466 = vsel %vm453, %v458, 0.0
      %v467 = vsel %vm453, %v459, 0.0
      %v468 = vsel %vm453, %v460, 0.0
      %v469 = vsel %vm453, %v461, 0.0
      %v470 = vld [vmem:[%s1] sm:$0x7]
      %v471 = vld [vmem:[%s2] sm:$0xff]
      %v472 = vld [vmem:[%s2 + $0x8] sm:$0xff]
      %v473 = vld [vmem:[%s2 + $0x10] sm:$0xff]
      %v474 = vld [vmem:[%s2 + $0x18] sm:$0xff]
      %v475 = vld [vmem:[%s2 + $0x20] sm:$0xff]
      %v476 = vld [vmem:[%s2 + $0x28] sm:$0xff]
      %v477 = vld [vmem:[%s2 + $0x30] sm:$0xff]
      %v478 = vld [vmem:[%s2 + $0x38] sm:$0xff]
      %v479 = vld [vmem:[%s2 + $0x40] sm:$0xff]
      %v480 = vld [vmem:[%s2 + $0x48] sm:$0xff]
      %v481 = vld [vmem:[%s2 + $0x50] sm:$0xff]
      %v482 = vld [vmem:[%s2 + $0x58] sm:$0xff]
      %v483 = vld [vmem:[%s2 + $0x60] sm:$0xff]
      %v484 = vld [vmem:[%s2 + $0x68] sm:$0xff]
      %v485 = vld [vmem:[%s2 + $0x70] sm:$0xff]
      %v486 = vld [vmem:[%s2 + $0x78] sm:$0xff]
      %s487 = scalar_lea.vmem %s2, 256
      %v488 = vld [vmem:[%s487] sm:$0xff]
      %v489 = vld [vmem:[%s487 + $0x8] sm:$0xff]
      %v490 = vld [vmem:[%s487 + $0x10] sm:$0xff]
      %v491 = vld [vmem:[%s487 + $0x18] sm:$0xff]
      %v492 = vld [vmem:[%s487 + $0x20] sm:$0xff]
      %v493 = vld [vmem:[%s487 + $0x28] sm:$0xff]
      %v494 = vld [vmem:[%s487 + $0x30] sm:$0xff]
      %v495 = vld [vmem:[%s487 + $0x38] sm:$0xff]
      %v496 = vld [vmem:[%s487 + $0x40] sm:$0xff]
      %v497 = vld [vmem:[%s487 + $0x48] sm:$0xff]
      %v498 = vld [vmem:[%s487 + $0x50] sm:$0xff]
      %v499 = vld [vmem:[%s487 + $0x58] sm:$0xff]
      %v500 = vld [vmem:[%s487 + $0x60] sm:$0xff]
      %v501 = vld [vmem:[%s487 + $0x68] sm:$0xff]
      %v502 = vld [vmem:[%s487 + $0x70] sm:$0xff]
      %v503 = vld [vmem:[%s487 + $0x78] sm:$0xff]
      %s504 = scalar_lea.vmem %s2, 128
      %v505 = vld [vmem:[%s504] sm:$0xff]
      %v506 = vld [vmem:[%s504 + $0x8] sm:$0xff]
      %v507 = vld [vmem:[%s504 + $0x10] sm:$0xff]
      %v508 = vld [vmem:[%s504 + $0x18] sm:$0xff]
      %v509 = vld [vmem:[%s504 + $0x20] sm:$0xff]
      %v510 = vld [vmem:[%s504 + $0x28] sm:$0xff]
      %v511 = vld [vmem:[%s504 + $0x30] sm:$0xff]
      %v512 = vld [vmem:[%s504 + $0x38] sm:$0xff]
      %v513 = vld [vmem:[%s504 + $0x40] sm:$0xff]
      %v514 = vld [vmem:[%s504 + $0x48] sm:$0xff]
      %v515 = vld [vmem:[%s504 + $0x50] sm:$0xff]
      %v516 = vld [vmem:[%s504 + $0x58] sm:$0xff]
      %v517 = vld [vmem:[%s504 + $0x60] sm:$0xff]
      %v518 = vld [vmem:[%s504 + $0x68] sm:$0xff]
      %v519 = vld [vmem:[%s504 + $0x70] sm:$0xff]
      %v520 = vld [vmem:[%s504 + $0x78] sm:$0xff]
      %s521 = scalar_lea.vmem %s2, 384
      %v522 = vld [vmem:[%s521] sm:$0xff]
      %v523 = vld [vmem:[%s521 + $0x8] sm:$0xff]
      %v524 = vld [vmem:[%s521 + $0x10] sm:$0xff]
      %v525 = vld [vmem:[%s521 + $0x18] sm:$0xff]
      %v526 = vld [vmem:[%s521 + $0x20] sm:$0xff]
      %v527 = vld [vmem:[%s521 + $0x28] sm:$0xff]
      %v528 = vld [vmem:[%s521 + $0x30] sm:$0xff]
      %v529 = vld [vmem:[%s521 + $0x38] sm:$0xff]
      %v530 = vld [vmem:[%s521 + $0x40] sm:$0xff]
      %v531 = vld [vmem:[%s521 + $0x48] sm:$0xff]
      %v532 = vld [vmem:[%s521 + $0x50] sm:$0xff]
      %v533 = vld [vmem:[%s521 + $0x58] sm:$0xff]
      %v534 = vld [vmem:[%s521 + $0x60] sm:$0xff]
      %v535 = vld [vmem:[%s521 + $0x68] sm:$0xff]
      %v536 = vld [vmem:[%s521 + $0x70] sm:$0xff]
      %v537 = vld [vmem:[%s521 + $0x78] sm:$0xff]
      %v538 = vld [vmem:[%s0] sm:$0xff]
      %v539 = vld [vmem:[%s0 + $0x8] sm:$0xff]
      %v540 = vld [vmem:[%s0 + $0x10] sm:$0xff]
      %v541 = vld [vmem:[%s0 + $0x18] sm:$0xff]
      %vm542 = vcmask 261120
      %v544 = vsel %vm542, %v445, 0
      %v547 = vsel %vm542, %v446, 0
      %v550 = vsel %vm542, %v447, 0
      %v553 = vsel %vm542, %v448, 0
      %v556 = vsel %vm542, %v449, 0
      %v559 = vsel %vm542, %v450, 0
      %v562 = vsel %vm542, %v451, 0
      %v565 = vsel %vm542, %v452, 0
      %v568 = vsel %vm542, %v419, 0
      %v571 = vsel %vm542, %v420, 0
      %v574 = vsel %vm542, %v421, 0
      %v577 = vsel %vm542, %v422, 0
      %v580 = vsel %vm542, %v423, 0
      %v583 = vsel %vm542, %v424, 0
      %v586 = vsel %vm542, %v425, 0
      %v589 = vsel %vm542, %v426, 0
      %v592 = vsel %vm542, %v427, 0
      %v595 = vsel %vm542, %v428, 0
      %v598 = vsel %vm542, %v429, 0
      %v601 = vsel %vm542, %v430, 0
      %v604 = vsel %vm542, %v431, 0
      %v607 = vsel %vm542, %v432, 0
      %v610 = vsel %vm542, %v433, 0
      %v613 = vsel %vm542, %v434, 0
      %v616 = vsel %vm542, %v462, 0
      %v619 = vsel %vm542, %v463, 0
      %v622 = vsel %vm542, %v464, 0
      %v625 = vsel %vm542, %v465, 0
      %v628 = vsel %vm542, %v466, 0
      %v631 = vsel %vm542, %v467, 0
      %v634 = vsel %vm542, %v468, 0
      %v637 = vsel %vm542, %v469, 0
      %639 = vmatprep.subr.mxu0 0.0
      %640 = vmatpush1.msra.mxu0 %v538
      %641 = vmatprep.subr.mxu0 0.0
      %642 = vmatpush1.msra.mxu0 %v539
      %643 = vmatprep.subr.mxu0 0.0
      %644 = vmatpush1.msra.mxu0 %v540
      %645 = vmatprep.subr.mxu0 0.0
      %646 = vmatpush1.msra.mxu0 %v541
      %647 = vmatprep.subr.mxu0 0.0
      %648 = vmatpush1.msra.mxu0 0.0
      %649 = vmatprep.subr.mxu0 0.0
      %650 = vmatpush1.msra.mxu0 0.0
      %651 = vmatprep.subr.mxu0 0.0
      %652 = vmatpush1.msra.mxu0 0.0
      %653 = vmatprep.subr.mxu0 0.0
      %654 = vmatpush1.msra.mxu0 0.0
      %655 = vmatprep.subr.mxu0 0.0
      %656 = vmatpush1.msra.mxu0 0.0
      %657 = vmatprep.subr.mxu0 0.0
      %658 = vmatpush1.msra.mxu0 0.0
      %659 = vmatprep.subr.mxu0 0.0
      %660 = vmatpush1.msra.mxu0 0.0
      %661 = vmatprep.subr.mxu0 0.0
      %662 = vmatpush1.msra.mxu0 0.0
      %663 = vmatprep.subr.mxu0 0.0
      %664 = vmatpush1.msra.mxu0 0.0
      %665 = vmatprep.subr.mxu0 0.0
      %666 = vmatpush1.msra.mxu0 0.0
      %667 = vmatprep.subr.mxu0 0.0
      %668 = vmatpush1.msra.mxu0 0.0
      %669 = vmatprep.subr.mxu0 0.0
      %670 = vmatpush1.msra.mxu0 0.0
      %671 = vmatprep.subr.mxu0 0.0
      %672 = vmatpush1.msra.mxu0 0.0
      %673 = vmatprep.subr.mxu0 0.0
      %674 = vmatpush1.msra.mxu0 0.0
      %675 = vmatprep.subr.mxu0 0.0
      %676 = vmatpush1.msra.mxu0 0.0
      %677 = vmatprep.subr.mxu0 0.0
      %678 = vmatpush1.msra.mxu0 0.0
      %679 = vmatprep.subr.mxu0 0.0
      %680 = vmatpush1.msra.mxu0 0.0
      %681 = vmatprep.subr.mxu0 0.0
      %682 = vmatpush1.msra.mxu0 0.0
      %683 = vmatprep.subr.mxu0 0.0
      %684 = vmatpush1.msra.mxu0 0.0
      %685 = vmatprep.subr.mxu0 0.0
      %686 = vmatpush1.msra.mxu0 0.0
      %687 = vmatprep.subr.mxu0 0.0
      %688 = vmatpush1.msra.mxu0 0.0
      %689 = vmatprep.subr.mxu0 0.0
      %690 = vmatpush1.msra.mxu0 0.0
      %691 = vmatprep.subr.mxu0 0.0
      %692 = vmatpush1.msra.mxu0 0.0
      %693 = vmatprep.subr.mxu0 0.0
      %694 = vmatpush1.msra.mxu0 0.0
      %695 = vmatprep.subr.mxu0 0.0
      %696 = vmatpush1.msra.mxu0 0.0
      %697 = vmatprep.subr.mxu0 0.0
      %698 = vmatpush1.msra.mxu0 0.0
      %699 = vmatprep.subr.mxu0 0.0
      %700 = vmatpush1.msra.mxu0 0.0
      %701 = vmatprep.subr.mxu0 0.0
      %702 = vmatpush1.msra.mxu0 0.0
      %703 = vmatprep.mubr.f32.mxu0 0.0
      %704 = vmatmul.mubr.f32.gmra.mrb[0].mxu0 %v544
      %v705 = vpop.f32.mrb[0].mxu0
      %v706 = vadd.f32 0.0, %v705
      %v707 = vpop.f32.mrb[0].mxu0
      %708 = vmatprep.mubr.f32.mxu0 0.0
      %709 = vmatmul.mubr.f32.gmra.mrb[0].mxu0 %v547
      %v710 = vpop.f32.mrb[0].mxu0
      %v711 = vadd.f32 0.0, %v710
      %v712 = vpop.f32.mrb[0].mxu0
      %713 = vmatprep.mubr.f32.mxu0 0.0
      %714 = vmatmul.mubr.f32.gmra.mrb[0].mxu0 %v550
      %v715 = vpop.f32.mrb[0].mxu0
      %v716 = vadd.f32 0.0, %v715
      %v717 = vpop.f32.mrb[0].mxu0
      %718 = vmatprep.mubr.f32.mxu0 0.0
      %719 = vmatmul.mubr.f32.gmra.mrb[0].mxu0 %v553
      %v720 = vpop.f32.mrb[0].mxu0
      %v721 = vadd.f32 0.0, %v720
      %v722 = vpop.f32.mrb[0].mxu0
      %723 = vmatprep.mubr.f32.mxu0 0.0
      %724 = vmatmul.mubr.f32.gmra.mrb[0].mxu0 %v556
      %v725 = vpop.f32.mrb[0].mxu0
      %v726 = vadd.f32 0.0, %v725
      %v727 = vpop.f32.mrb[0].mxu0
      %728 = vmatprep.mubr.f32.mxu0 0.0
      %729 = vmatmul.mubr.f32.gmra.mrb[0].mxu0 %v559
      %v730 = vpop.f32.mrb[0].mxu0
      %v731 = vadd.f32 0.0, %v730
      %v732 = vpop.f32.mrb[0].mxu0
      %733 = vmatprep.mubr.f32.mxu0 0.0
      %734 = vmatmul.mubr.f32.gmra.mrb[0].mxu0 %v562
      %v735 = vpop.f32.mrb[0].mxu0
      %v736 = vadd.f32 0.0, %v735
      %v737 = vpop.f32.mrb[0].mxu0
      %738 = vmatprep.mubr.f32.mxu0 0.0
      %739 = vmatmul.mubr.f32.gmra.mrb[0].mxu0 %v565
      %v740 = vpop.f32.mrb[0].mxu0
      %v741 = vadd.f32 0.0, %v740
      %v742 = vpop.f32.mrb[0].mxu0
      %743 = vmatprep.mubr.f32.mxu0 0.0
      %744 = vmatmul.mubr.f32.gmra.mrb[0].mxu0 %v568
      %v745 = vpop.f32.mrb[0].mxu0
      %v746 = vadd.f32 0.0, %v745
      %v747 = vpop.f32.mrb[0].mxu0
      %748 = vmatprep.mubr.f32.mxu0 0.0
      %749 = vmatmul.mubr.f32.gmra.mrb[0].mxu0 %v571
      %v750 = vpop.f32.mrb[0].mxu0
      %v751 = vadd.f32 0.0, %v750
      %v752 = vpop.f32.mrb[0].mxu0
      %753 = vmatprep.mubr.f32.mxu0 0.0
      %754 = vmatmul.mubr.f32.gmra.mrb[0].mxu0 %v574
      %v755 = vpop.f32.mrb[0].mxu0
      %v756 = vadd.f32 0.0, %v755
      %v757 = vpop.f32.mrb[0].mxu0
      %758 = vmatprep.mubr.f32.mxu0 0.0
      %759 = vmatmul.mubr.f32.gmra.mrb[0].mxu0 %v577
      %v760 = vpop.f32.mrb[0].mxu0
      %v761 = vadd.f32 0.0, %v760
      %v762 = vpop.f32.mrb[0].mxu0
      %763 = vmatprep.mubr.f32.mxu0 0.0
      %764 = vmatmul.mubr.f32.gmra.mrb[0].mxu0 %v580
      %v765 = vpop.f32.mrb[0].mxu0
      %v766 = vadd.f32 0.0, %v765
      %v767 = vpop.f32.mrb[0].mxu0
      %768 = vmatprep.mubr.f32.mxu0 0.0
      %769 = vmatmul.mubr.f32.gmra.mrb[0].mxu0 %v583
      %v770 = vpop.f32.mrb[0].mxu0
      %v771 = vadd.f32 0.0, %v770
      %v772 = vpop.f32.mrb[0].mxu0
      %773 = vmatprep.mubr.f32.mxu0 0.0
      %774 = vmatmul.mubr.f32.gmra.mrb[0].mxu0 %v586
      %v775 = vpop.f32.mrb[0].mxu0
      %v776 = vadd.f32 0.0, %v775
      %v777 = vpop.f32.mrb[0].mxu0
      %778 = vmatprep.mubr.f32.mxu0 0.0
      %779 = vmatmul.mubr.f32.gmra.mrb[0].mxu0 %v589
      %v780 = vpop.f32.mrb[0].mxu0
      %v781 = vadd.f32 0.0, %v780
      %v782 = vpop.f32.mrb[0].mxu0
      %783 = vmatprep.mubr.f32.mxu0 0.0
      %784 = vmatmul.mubr.f32.gmra.mrb[0].mxu0 %v592
      %v785 = vpop.f32.mrb[0].mxu0
      %v786 = vpop.f32.mrb[0].mxu0
      %787 = vmatprep.mubr.f32.mxu0 0.0
      %788 = vmatmul.mubr.f32.gmra.mrb[0].mxu0 %v595
      %v789 = vpop.f32.mrb[0].mxu0
      %v790 = vpop.f32.mrb[0].mxu0
      %791 = vmatprep.mubr.f32.mxu0 0.0
      %792 = vmatmul.mubr.f32.gmra.mrb[0].mxu0 %v598
      %v793 = vpop.f32.mrb[0].mxu0
      %v794 = vpop.f32.mrb[0].mxu0
      %795 = vmatprep.mubr.f32.mxu0 0.0
      %796 = vmatmul.mubr.f32.gmra.mrb[0].mxu0 %v601
      %v797 = vpop.f32.mrb[0].mxu0
      %v798 = vpop.f32.mrb[0].mxu0
      %799 = vmatprep.mubr.f32.mxu0 0.0
      %800 = vmatmul.mubr.f32.gmra.mrb[0].mxu0 %v604
      %v801 = vpop.f32.mrb[0].mxu0
      %v802 = vpop.f32.mrb[0].mxu0
      %803 = vmatprep.mubr.f32.mxu0 0.0
      %804 = vmatmul.mubr.f32.gmra.mrb[0].mxu0 %v607
      %v805 = vpop.f32.mrb[0].mxu0
      %v806 = vpop.f32.mrb[0].mxu0
      %807 = vmatprep.mubr.f32.mxu0 0.0
      %808 = vmatmul.mubr.f32.gmra.mrb[0].mxu0 %v610
      %v809 = vpop.f32.mrb[0].mxu0
      %v810 = vpop.f32.mrb[0].mxu0
      %811 = vmatprep.mubr.f32.mxu0 0.0
      %812 = vmatmul.mubr.f32.gmra.mrb[0].mxu0 %v613
      %v813 = vpop.f32.mrb[0].mxu0
      %v814 = vpop.f32.mrb[0].mxu0
      %815 = vmatprep.mubr.f32.mxu0 0.0
      %816 = vmatmul.mubr.f32.gmra.mrb[0].mxu0 %v616
      %v817 = vpop.f32.mrb[0].mxu0
      %v818 = vpop.f32.mrb[0].mxu0
      %819 = vmatprep.mubr.f32.mxu0 0.0
      %820 = vmatmul.mubr.f32.gmra.mrb[0].mxu0 %v619
      %v821 = vpop.f32.mrb[0].mxu0
      %v822 = vpop.f32.mrb[0].mxu0
      %823 = vmatprep.mubr.f32.mxu0 0.0
      %824 = vmatmul.mubr.f32.gmra.mrb[0].mxu0 %v622
      %v825 = vpop.f32.mrb[0].mxu0
      %v826 = vpop.f32.mrb[0].mxu0
      %827 = vmatprep.mubr.f32.mxu0 0.0
      %828 = vmatmul.mubr.f32.gmra.mrb[0].mxu0 %v625
      %v829 = vpop.f32.mrb[0].mxu0
      %v830 = vpop.f32.mrb[0].mxu0
      %831 = vmatprep.mubr.f32.mxu0 0.0
      %832 = vmatmul.mubr.f32.gmra.mrb[0].mxu0 %v628
      %v833 = vpop.f32.mrb[0].mxu0
      %v834 = vpop.f32.mrb[0].mxu0
      %835 = vmatprep.mubr.f32.mxu0 0.0
      %836 = vmatmul.mubr.f32.gmra.mrb[0].mxu0 %v631
      %v837 = vpop.f32.mrb[0].mxu0
      %v838 = vpop.f32.mrb[0].mxu0
      %839 = vmatprep.mubr.f32.mxu0 0.0
      %840 = vmatmul.mubr.f32.gmra.mrb[0].mxu0 %v634
      %v841 = vpop.f32.mrb[0].mxu0
      %v842 = vpop.f32.mrb[0].mxu0
      %843 = vmatprep.mubr.f32.mxu0 0.0
      %844 = vmatmul.mubr.f32.gmra.mrb[0].mxu0 %v637
      %v845 = vpop.f32.mrb[0].mxu0
      %v846 = vpop.f32.mrb[0].mxu0
      %847 = vdwg.mxu0
      %s848 = scalar_lea.vmem %s0, 32
      %v849 = vld [vmem:[%s848] sm:$0xff]
      %v850 = vld [vmem:[%s848 + $0x8] sm:$0xff]
      %v851 = vld [vmem:[%s848 + $0x10] sm:$0xff]
      %v852 = vld [vmem:[%s848 + $0x18] sm:$0xff]
      %853 = vmatprep.subr.mxu0 0.0
      %854 = vmatpush1.msra.mxu0 %v849
      %855 = vmatprep.subr.mxu0 0.0
      %856 = vmatpush1.msra.mxu0 %v850
      %857 = vmatprep.subr.mxu0 0.0
      %858 = vmatpush1.msra.mxu0 %v851
      %859 = vmatprep.subr.mxu0 0.0
      %860 = vmatpush1.msra.mxu0 %v852
      %861 = vmatprep.subr.mxu0 0.0
      %862 = vmatpush1.msra.mxu0 0.0
      %863 = vmatprep.subr.mxu0 0.0
      %864 = vmatpush1.msra.mxu0 0.0
      %865 = vmatprep.subr.mxu0 0.0
      %866 = vmatpush1.msra.mxu0 0.0
      %867 = vmatprep.subr.mxu0 0.0
      %868 = vmatpush1.msra.mxu0 0.0
      %869 = vmatprep.subr.mxu0 0.0
      %870 = vmatpush1.msra.mxu0 0.0
      %871 = vmatprep.subr.mxu0 0.0
      %872 = vmatpush1.msra.mxu0 0.0
      %873 = vmatprep.subr.mxu0 0.0
      %874 = vmatpush1.msra.mxu0 0.0
      %875 = vmatprep.subr.mxu0 0.0
      %876 = vmatpush1.msra.mxu0 0.0
      %877 = vmatprep.subr.mxu0 0.0
      %878 = vmatpush1.msra.mxu0 0.0
      %879 = vmatprep.subr.mxu0 0.0
      %880 = vmatpush1.msra.mxu0 0.0
      %881 = vmatprep.subr.mxu0 0.0
      %882 = vmatpush1.msra.mxu0 0.0
      %883 = vmatprep.subr.mxu0 0.0
      %884 = vmatpush1.msra.mxu0 0.0
      %885 = vmatprep.subr.mxu0 0.0
      %886 = vmatpush1.msra.mxu0 0.0
      %887 = vmatprep.subr.mxu0 0.0
      %888 = vmatpush1.msra.mxu0 0.0
      %889 = vmatprep.subr.mxu0 0.0
      %890 = vmatpush1.msra.mxu0 0.0
      %891 = vmatprep.subr.mxu0 0.0
      %892 = vmatpush1.msra.mxu0 0.0
      %893 = vmatprep.subr.mxu0 0.0
      %894 = vmatpush1.msra.mxu0 0.0
      %895 = vmatprep.subr.mxu0 0.0
      %896 = vmatpush1.msra.mxu0 0.0
      %897 = vmatprep.subr.mxu0 0.0
      %898 = vmatpush1.msra.mxu0 0.0
      %899 = vmatprep.subr.mxu0 0.0
      %900 = vmatpush1.msra.mxu0 0.0
      %901 = vmatprep.subr.mxu0 0.0
      %902 = vmatpush1.msra.mxu0 0.0
      %903 = vmatprep.subr.mxu0 0.0
      %904 = vmatpush1.msra.mxu0 0.0
      %905 = vmatprep.subr.mxu0 0.0
      %906 = vmatpush1.msra.mxu0 0.0
      %907 = vmatprep.subr.mxu0 0.0
      %908 = vmatpush1.msra.mxu0 0.0
      %909 = vmatprep.subr.mxu0 0.0
      %910 = vmatpush1.msra.mxu0 0.0
      %911 = vmatprep.subr.mxu0 0.0
      %912 = vmatpush1.msra.mxu0 0.0
      %913 = vmatprep.subr.mxu0 0.0
      %914 = vmatpush1.msra.mxu0 0.0
      %915 = vmatprep.subr.mxu0 0.0
      %916 = vmatpush1.msra.mxu0 0.0
      %917 = vmatprep.mubr.f32.mxu0 0.0
      %918 = vmatmul.mubr.f32.gmra.mrb[0].mxu0 %v568
      %v919 = vpop.f32.mrb[0].mxu0
      %v920 = vadd.f32 0.0, %v919
      %v921 = vpop.f32.mrb[0].mxu0
      %922 = vmatprep.mubr.f32.mxu0 0.0
      %923 = vmatmul.mubr.f32.gmra.mrb[0].mxu0 %v571
      %v924 = vpop.f32.mrb[0].mxu0
      %v925 = vadd.f32 0.0, %v924
      %v926 = vpop.f32.mrb[0].mxu0
      %927 = vmatprep.mubr.f32.mxu0 0.0
      %928 = vmatmul.mubr.f32.gmra.mrb[0].mxu0 %v574
      %v929 = vpop.f32.mrb[0].mxu0
      %v930 = vadd.f32 0.0, %v929
      %v931 = vpop.f32.mrb[0].mxu0
      %932 = vmatprep.mubr.f32.mxu0 0.0
      %933 = vmatmul.mubr.f32.gmra.mrb[0].mxu0 %v577
      %v934 = vpop.f32.mrb[0].mxu0
      %v935 = vadd.f32 0.0, %v934
      %v936 = vpop.f32.mrb[0].mxu0
      %937 = vmatprep.mubr.f32.mxu0 0.0
      %938 = vmatmul.mubr.f32.gmra.mrb[0].mxu0 %v580
      %v939 = vpop.f32.mrb[0].mxu0
      %v940 = vadd.f32 0.0, %v939
      %v941 = vpop.f32.mrb[0].mxu0
      %942 = vmatprep.mubr.f32.mxu0 0.0
      %943 = vmatmul.mubr.f32.gmra.mrb[0].mxu0 %v583
      %v944 = vpop.f32.mrb[0].mxu0
      %v945 = vadd.f32 0.0, %v944
      %v946 = vpop.f32.mrb[0].mxu0
      %947 = vmatprep.mubr.f32.mxu0 0.0
      %948 = vmatmul.mubr.f32.gmra.mrb[0].mxu0 %v586
      %v949 = vpop.f32.mrb[0].mxu0
      %v950 = vadd.f32 0.0, %v949
      %v951 = vpop.f32.mrb[0].mxu0
      %952 = vmatprep.mubr.f32.mxu0 0.0
      %953 = vmatmul.mubr.f32.gmra.mrb[0].mxu0 %v589
      %v954 = vpop.f32.mrb[0].mxu0
      %v955 = vadd.f32 0.0, %v954
      %v956 = vpop.f32.mrb[0].mxu0
      %957 = vmatprep.mubr.f32.mxu0 0.0
      %958 = vmatmul.mubr.f32.gmra.mrb[0].mxu0 %v592
      %v959 = vpop.f32.mrb[0].mxu0
      %v960 = vadd.f32 0.0, %v959
      %v961 = vpop.f32.mrb[0].mxu0
      %962 = vmatprep.mubr.f32.mxu0 0.0
      %963 = vmatmul.mubr.f32.gmra.mrb[0].mxu0 %v595
      %v964 = vpop.f32.mrb[0].mxu0
      %v965 = vadd.f32 0.0, %v964
      %v966 = vpop.f32.mrb[0].mxu0
      %967 = vmatprep.mubr.f32.mxu0 0.0
      %968 = vmatmul.mubr.f32.gmra.mrb[0].mxu0 %v598
      %v969 = vpop.f32.mrb[0].mxu0
      %v970 = vadd.f32 0.0, %v969
      %v971 = vpop.f32.mrb[0].mxu0
      %972 = vmatprep.mubr.f32.mxu0 0.0
      %973 = vmatmul.mubr.f32.gmra.mrb[0].mxu0 %v601
      %v974 = vpop.f32.mrb[0].mxu0
      %v975 = vadd.f32 0.0, %v974
      %v976 = vpop.f32.mrb[0].mxu0
      %977 = vmatprep.mubr.f32.mxu0 0.0
      %978 = vmatmul.mubr.f32.gmra.mrb[0].mxu0 %v604
      %v979 = vpop.f32.mrb[0].mxu0
      %v980 = vadd.f32 0.0, %v979
      %v981 = vpop.f32.mrb[0].mxu0
      %982 = vmatprep.mubr.f32.mxu0 0.0
      %983 = vmatmul.mubr.f32.gmra.mrb[0].mxu0 %v607
      %v984 = vpop.f32.mrb[0].mxu0
      %v985 = vadd.f32 0.0, %v984
      %v986 = vpop.f32.mrb[0].mxu0
      %987 = vmatprep.mubr.f32.mxu0 0.0
      %988 = vmatmul.mubr.f32.gmra.mrb[0].mxu0 %v610
      %v989 = vpop.f32.mrb[0].mxu0
      %v990 = vadd.f32 0.0, %v989
      %v991 = vpop.f32.mrb[0].mxu0
      %992 = vmatprep.mubr.f32.mxu0 0.0
      %993 = vmatmul.mubr.f32.gmra.mrb[0].mxu0 %v613
      %v994 = vpop.f32.mrb[0].mxu0
      %v995 = vadd.f32 0.0, %v994
      %v996 = vpop.f32.mrb[0].mxu0
      %997 = vdwg.mxu0
      %s998 = scalar_lea.vmem %s0, 64
      %v999 = vld [vmem:[%s998] sm:$0xff]
      %v1000 = vld [vmem:[%s998 + $0x8] sm:$0xff]
      %v1001 = vld [vmem:[%s998 + $0x10] sm:$0xff]
      %v1002 = vld [vmem:[%s998 + $0x18] sm:$0xff]
      %1003 = vmatprep.subr.mxu0 0.0
      %1004 = vmatpush1.msra.mxu0 %v999
      %1005 = vmatprep.subr.mxu0 0.0
      %1006 = vmatpush1.msra.mxu0 %v1000
      %1007 = vmatprep.subr.mxu0 0.0
      %1008 = vmatpush1.msra.mxu0 %v1001
      %1009 = vmatprep.subr.mxu0 0.0
      %1010 = vmatpush1.msra.mxu0 %v1002
      %1011 = vmatprep.subr.mxu0 0.0
      %1012 = vmatpush1.msra.mxu0 0.0
      %1013 = vmatprep.subr.mxu0 0.0
      %1014 = vmatpush1.msra.mxu0 0.0
      %1015 = vmatprep.subr.mxu0 0.0
      %1016 = vmatpush1.msra.mxu0 0.0
      %1017 = vmatprep.subr.mxu0 0.0
      %1018 = vmatpush1.msra.mxu0 0.0
      %1019 = vmatprep.subr.mxu0 0.0
      %1020 = vmatpush1.msra.mxu0 0.0
      %1021 = vmatprep.subr.mxu0 0.0
      %1022 = vmatpush1.msra.mxu0 0.0
      %1023 = vmatprep.subr.mxu0 0.0
      %1024 = vmatpush1.msra.mxu0 0.0
      %1025 = vmatprep.subr.mxu0 0.0
      %1026 = vmatpush1.msra.mxu0 0.0
      %1027 = vmatprep.subr.mxu0 0.0
      %1028 = vmatpush1.msra.mxu0 0.0
      %1029 = vmatprep.subr.mxu0 0.0
      %1030 = vmatpush1.msra.mxu0 0.0
      %1031 = vmatprep.subr.mxu0 0.0
      %1032 = vmatpush1.msra.mxu0 0.0
      %1033 = vmatprep.subr.mxu0 0.0
      %1034 = vmatpush1.msra.mxu0 0.0
      %1035 = vmatprep.subr.mxu0 0.0
      %1036 = vmatpush1.msra.mxu0 0.0
      %1037 = vmatprep.subr.mxu0 0.0
      %1038 = vmatpush1.msra.mxu0 0.0
      %1039 = vmatprep.subr.mxu0 0.0
      %1040 = vmatpush1.msra.mxu0 0.0
      %1041 = vmatprep.subr.mxu0 0.0
      %1042 = vmatpush1.msra.mxu0 0.0
      %1043 = vmatprep.subr.mxu0 0.0
      %1044 = vmatpush1.msra.mxu0 0.0
      %1045 = vmatprep.subr.mxu0 0.0
      %1046 = vmatpush1.msra.mxu0 0.0
      %1047 = vmatprep.subr.mxu0 0.0
      %1048 = vmatpush1.msra.mxu0 0.0
      %1049 = vmatprep.subr.mxu0 0.0
      %1050 = vmatpush1.msra.mxu0 0.0
      %1051 = vmatprep.subr.mxu0 0.0
      %1052 = vmatpush1.msra.mxu0 0.0
      %1053 = vmatprep.subr.mxu0 0.0
      %1054 = vmatpush1.msra.mxu0 0.0
      %1055 = vmatprep.subr.mxu0 0.0
      %1056 = vmatpush1.msra.mxu0 0.0
      %1057 = vmatprep.subr.mxu0 0.0
      %1058 = vmatpush1.msra.mxu0 0.0
      %1059 = vmatprep.subr.mxu0 0.0
      %1060 = vmatpush1.msra.mxu0 0.0
      %1061 = vmatprep.subr.mxu0 0.0
      %1062 = vmatpush1.msra.mxu0 0.0
      %1063 = vmatprep.subr.mxu0 0.0
      %1064 = vmatpush1.msra.mxu0 0.0
      %1065 = vmatprep.subr.mxu0 0.0
      %1066 = vmatpush1.msra.mxu0 0.0
      %1067 = vmatprep.mubr.f32.mxu0 0.0
      %1068 = vmatmul.mubr.f32.gmra.mrb[0].mxu0 %v544
      %v1069 = vpop.f32.mrb[0].mxu0
      %v1070 = vpop.f32.mrb[0].mxu0
      %1071 = vmatprep.mubr.f32.mxu0 0.0
      %1072 = vmatmul.mubr.f32.gmra.mrb[0].mxu0 %v547
      %v1073 = vpop.f32.mrb[0].mxu0
      %v1074 = vpop.f32.mrb[0].mxu0
      %1075 = vmatprep.mubr.f32.mxu0 0.0
      %1076 = vmatmul.mubr.f32.gmra.mrb[0].mxu0 %v550
      %v1077 = vpop.f32.mrb[0].mxu0
      %v1078 = vpop.f32.mrb[0].mxu0
      %1079 = vmatprep.mubr.f32.mxu0 0.0
      %1080 = vmatmul.mubr.f32.gmra.mrb[0].mxu0 %v553
      %v1081 = vpop.f32.mrb[0].mxu0
      %v1082 = vpop.f32.mrb[0].mxu0
      %1083 = vmatprep.mubr.f32.mxu0 0.0
      %1084 = vmatmul.mubr.f32.gmra.mrb[0].mxu0 %v556
      %v1085 = vpop.f32.mrb[0].mxu0
      %v1086 = vpop.f32.mrb[0].mxu0
      %1087 = vmatprep.mubr.f32.mxu0 0.0
      %1088 = vmatmul.mubr.f32.gmra.mrb[0].mxu0 %v559
      %v1089 = vpop.f32.mrb[0].mxu0
      %v1090 = vpop.f32.mrb[0].mxu0
      %1091 = vmatprep.mubr.f32.mxu0 0.0
      %1092 = vmatmul.mubr.f32.gmra.mrb[0].mxu0 %v562
      %v1093 = vpop.f32.mrb[0].mxu0
      %v1094 = vpop.f32.mrb[0].mxu0
      %1095 = vmatprep.mubr.f32.mxu0 0.0
      %1096 = vmatmul.mubr.f32.gmra.mrb[0].mxu0 %v565
      %v1097 = vpop.f32.mrb[0].mxu0
      %v1098 = vpop.f32.mrb[0].mxu0
      %1099 = vmatprep.mubr.f32.mxu0 0.0
      %1100 = vmatmul.mubr.f32.gmra.mrb[0].mxu0 %v568
      %v1101 = vpop.f32.mrb[0].mxu0
      %v1102 = vpop.f32.mrb[0].mxu0
      %1103 = vmatprep.mubr.f32.mxu0 0.0
      %1104 = vmatmul.mubr.f32.gmra.mrb[0].mxu0 %v571
      %v1105 = vpop.f32.mrb[0].mxu0
      %v1106 = vpop.f32.mrb[0].mxu0
      %1107 = vmatprep.mubr.f32.mxu0 0.0
      %1108 = vmatmul.mubr.f32.gmra.mrb[0].mxu0 %v574
      %v1109 = vpop.f32.mrb[0].mxu0
      %v1110 = vpop.f32.mrb[0].mxu0
      %1111 = vmatprep.mubr.f32.mxu0 0.0
      %1112 = vmatmul.mubr.f32.gmra.mrb[0].mxu0 %v577
      %v1113 = vpop.f32.mrb[0].mxu0
      %v1114 = vpop.f32.mrb[0].mxu0
      %1115 = vmatprep.mubr.f32.mxu0 0.0
      %1116 = vmatmul.mubr.f32.gmra.mrb[0].mxu0 %v580
      %v1117 = vpop.f32.mrb[0].mxu0
      %v1118 = vpop.f32.mrb[0].mxu0
      %1119 = vmatprep.mubr.f32.mxu0 0.0
      %1120 = vmatmul.mubr.f32.gmra.mrb[0].mxu0 %v583
      %v1121 = vpop.f32.mrb[0].mxu0
      %v1122 = vpop.f32.mrb[0].mxu0
      %1123 = vmatprep.mubr.f32.mxu0 0.0
      %1124 = vmatmul.mubr.f32.gmra.mrb[0].mxu0 %v586
      %v1125 = vpop.f32.mrb[0].mxu0
      %v1126 = vpop.f32.mrb[0].mxu0
      %1127 = vmatprep.mubr.f32.mxu0 0.0
      %1128 = vmatmul.mubr.f32.gmra.mrb[0].mxu0 %v589
      %v1129 = vpop.f32.mrb[0].mxu0
      %v1130 = vpop.f32.mrb[0].mxu0
      %1131 = vmatprep.mubr.f32.mxu0 0.0
      %1132 = vmatmul.mubr.f32.gmra.mrb[0].mxu0 %v592
      %v1133 = vpop.f32.mrb[0].mxu0
      %v1134 = vadd.f32 0.0, %v1133
      %v1135 = vpop.f32.mrb[0].mxu0
      %1136 = vmatprep.mubr.f32.mxu0 0.0
      %1137 = vmatmul.mubr.f32.gmra.mrb[0].mxu0 %v595
      %v1138 = vpop.f32.mrb[0].mxu0
      %v1139 = vadd.f32 0.0, %v1138
      %v1140 = vpop.f32.mrb[0].mxu0
      %1141 = vmatprep.mubr.f32.mxu0 0.0
      %1142 = vmatmul.mubr.f32.gmra.mrb[0].mxu0 %v598
      %v1143 = vpop.f32.mrb[0].mxu0
      %v1144 = vadd.f32 0.0, %v1143
      %v1145 = vpop.f32.mrb[0].mxu0
      %1146 = vmatprep.mubr.f32.mxu0 0.0
      %1147 = vmatmul.mubr.f32.gmra.mrb[0].mxu0 %v601
      %v1148 = vpop.f32.mrb[0].mxu0
      %v1149 = vadd.f32 0.0, %v1148
      %v1150 = vpop.f32.mrb[0].mxu0
      %1151 = vmatprep.mubr.f32.mxu0 0.0
      %1152 = vmatmul.mubr.f32.gmra.mrb[0].mxu0 %v604
      %v1153 = vpop.f32.mrb[0].mxu0
      %v1154 = vadd.f32 0.0, %v1153
      %v1155 = vpop.f32.mrb[0].mxu0
      %1156 = vmatprep.mubr.f32.mxu0 0.0
      %1157 = vmatmul.mubr.f32.gmra.mrb[0].mxu0 %v607
      %v1158 = vpop.f32.mrb[0].mxu0
      %v1159 = vadd.f32 0.0, %v1158
      %v1160 = vpop.f32.mrb[0].mxu0
      %1161 = vmatprep.mubr.f32.mxu0 0.0
      %1162 = vmatmul.mubr.f32.gmra.mrb[0].mxu0 %v610
      %v1163 = vpop.f32.mrb[0].mxu0
      %v1164 = vadd.f32 0.0, %v1163
      %v1165 = vpop.f32.mrb[0].mxu0
      %1166 = vmatprep.mubr.f32.mxu0 0.0
      %1167 = vmatmul.mubr.f32.gmra.mrb[0].mxu0 %v613
      %v1168 = vpop.f32.mrb[0].mxu0
      %v1169 = vadd.f32 0.0, %v1168
      %v1170 = vpop.f32.mrb[0].mxu0
      %1171 = vmatprep.mubr.f32.mxu0 0.0
      %1172 = vmatmul.mubr.f32.gmra.mrb[0].mxu0 %v616
      %v1173 = vpop.f32.mrb[0].mxu0
      %v1174 = vadd.f32 0.0, %v1173
      %v1175 = vpop.f32.mrb[0].mxu0
      %1176 = vmatprep.mubr.f32.mxu0 0.0
      %1177 = vmatmul.mubr.f32.gmra.mrb[0].mxu0 %v619
      %v1178 = vpop.f32.mrb[0].mxu0
      %v1179 = vadd.f32 0.0, %v1178
      %v1180 = vpop.f32.mrb[0].mxu0
      %1181 = vmatprep.mubr.f32.mxu0 0.0
      %1182 = vmatmul.mubr.f32.gmra.mrb[0].mxu0 %v622
      %v1183 = vpop.f32.mrb[0].mxu0
      %v1184 = vadd.f32 0.0, %v1183
      %v1185 = vpop.f32.mrb[0].mxu0
      %1186 = vmatprep.mubr.f32.mxu0 0.0
      %1187 = vmatmul.mubr.f32.gmra.mrb[0].mxu0 %v625
      %v1188 = vpop.f32.mrb[0].mxu0
      %v1189 = vadd.f32 0.0, %v1188
      %v1190 = vpop.f32.mrb[0].mxu0
      %1191 = vmatprep.mubr.f32.mxu0 0.0
      %1192 = vmatmul.mubr.f32.gmra.mrb[0].mxu0 %v628
      %v1193 = vpop.f32.mrb[0].mxu0
      %v1194 = vadd.f32 0.0, %v1193
      %v1195 = vpop.f32.mrb[0].mxu0
      %1196 = vmatprep.mubr.f32.mxu0 0.0
      %1197 = vmatmul.mubr.f32.gmra.mrb[0].mxu0 %v631
      %v1198 = vpop.f32.mrb[0].mxu0
      %v1199 = vadd.f32 0.0, %v1198
      %v1200 = vpop.f32.mrb[0].mxu0
      %1201 = vmatprep.mubr.f32.mxu0 0.0
      %1202 = vmatmul.mubr.f32.gmra.mrb[0].mxu0 %v634
      %v1203 = vpop.f32.mrb[0].mxu0
      %v1204 = vadd.f32 0.0, %v1203
      %v1205 = vpop.f32.mrb[0].mxu0
      %1206 = vmatprep.mubr.f32.mxu0 0.0
      %1207 = vmatmul.mubr.f32.gmra.mrb[0].mxu0 %v637
      %v1208 = vpop.f32.mrb[0].mxu0
      %v1209 = vadd.f32 0.0, %v1208
      %v1210 = vpop.f32.mrb[0].mxu0
      %1211 = vdwg.mxu0
      %v1212 = vadd.f32 %v706, %v920
      %v1213 = vadd.f32 %v711, %v925
      %v1214 = vadd.f32 %v716, %v930
      %v1215 = vadd.f32 %v721, %v935
      %v1216 = vadd.f32 %v726, %v940
      %v1217 = vadd.f32 %v731, %v945
      %v1218 = vadd.f32 %v736, %v950
      %v1219 = vadd.f32 %v741, %v955
      %v1220 = vadd.f32 %v746, %v960
      %v1221 = vadd.f32 %v751, %v965
      %v1222 = vadd.f32 %v756, %v970
      %v1223 = vadd.f32 %v761, %v975
      %v1224 = vadd.f32 %v766, %v980
      %v1225 = vadd.f32 %v771, %v985
      %v1226 = vadd.f32 %v776, %v990
      %v1227 = vadd.f32 %v781, %v995
      %v1228 = vadd.f32 %v1212, %v1134
      %v1229 = vadd.f32 %v1213, %v1139
      %v1230 = vadd.f32 %v1214, %v1144
      %v1231 = vadd.f32 %v1215, %v1149
      %v1232 = vadd.f32 %v1216, %v1154
      %v1233 = vadd.f32 %v1217, %v1159
      %v1234 = vadd.f32 %v1218, %v1164
      %v1235 = vadd.f32 %v1219, %v1169
      %v1236 = vadd.f32 %v1220, %v1174
      %v1237 = vadd.f32 %v1221, %v1179
      %v1238 = vadd.f32 %v1222, %v1184
      %v1239 = vadd.f32 %v1223, %v1189
      %v1240 = vadd.f32 %v1224, %v1194
      %v1241 = vadd.f32 %v1225, %v1199
      %v1242 = vadd.f32 %v1226, %v1204
      %v1243 = vadd.f32 %v1227, %v1209
      %v1244 = vlaneseq
      %v1245 = vshrl.u32 %v1244, 7
      %v1246 = vsub.s32 0, %v1245
      %v1247 = vrot.slane %v470, %v1246
      %v1248 = vadd.f32 %v1228, %v1247
      %v1249 = vadd.f32 %v1229, %v1247
      %v1250 = vadd.f32 %v1230, %v1247
      %v1251 = vadd.f32 %v1231, %v1247
      %v1252 = vadd.f32 %v1232, %v1247
      %v1253 = vadd.f32 %v1233, %v1247
      %v1254 = vadd.f32 %v1234, %v1247
      %v1255 = vadd.f32 %v1235, %v1247
      %v1256 = vadd.f32 %v1236, %v1247
      %v1257 = vadd.f32 %v1237, %v1247
      %v1258 = vadd.f32 %v1238, %v1247
      %v1259 = vadd.f32 %v1239, %v1247
      %v1260 = vadd.f32 %v1240, %v1247
      %v1261 = vadd.f32 %v1241, %v1247
      %v1262 = vadd.f32 %v1242, %v1247
      %v1263 = vadd.f32 %v1243, %v1247
      %v1264 = vxor.u32 %v1248, 2147483648
      %v1265 = vxor.u32 %v1249, 2147483648
      %v1266 = vxor.u32 %v1250, 2147483648
      %v1267 = vxor.u32 %v1251, 2147483648
      %v1268 = vxor.u32 %v1252, 2147483648
      %v1269 = vxor.u32 %v1253, 2147483648
      %v1270 = vxor.u32 %v1254, 2147483648
      %v1271 = vxor.u32 %v1255, 2147483648
      %v1272 = vxor.u32 %v1256, 2147483648
      %v1273 = vxor.u32 %v1257, 2147483648
      %v1274 = vxor.u32 %v1258, 2147483648
      %v1275 = vxor.u32 %v1259, 2147483648
      %v1276 = vxor.u32 %v1260, 2147483648
      %v1277 = vxor.u32 %v1261, 2147483648
      %v1278 = vxor.u32 %v1262, 2147483648
      %v1279 = vxor.u32 %v1263, 2147483648
      %v1280 = vmul.f32 %v1264, 1.442695
      %v1281 = vpow.pop %v1280
      %v1282 = vmul.f32 %v1265, 1.442695
      %v1283 = vpow.pop %v1282
      %v1284 = vmul.f32 %v1266, 1.442695
      %v1285 = vpow.pop %v1284
      %v1286 = vmul.f32 %v1267, 1.442695
      %v1287 = vpow.pop %v1286
      %v1288 = vmul.f32 %v1268, 1.442695
      %v1289 = vpow.pop %v1288
      %v1290 = vmul.f32 %v1269, 1.442695
      %v1291 = vpow.pop %v1290
      %v1292 = vmul.f32 %v1270, 1.442695
      %v1293 = vpow.pop %v1292
      %v1294 = vmul.f32 %v1271, 1.442695
      %v1295 = vpow.pop %v1294
      %v1296 = vmul.f32 %v1272, 1.442695
      %v1297 = vpow.pop %v1296
      %v1298 = vmul.f32 %v1273, 1.442695
      %v1299 = vpow.pop %v1298
      %v1300 = vmul.f32 %v1274, 1.442695
      %v1301 = vpow.pop %v1300
      %v1302 = vmul.f32 %v1275, 1.442695
      %v1303 = vpow.pop %v1302
      %v1304 = vmul.f32 %v1276, 1.442695
      %v1305 = vpow.pop %v1304
      %v1306 = vmul.f32 %v1277, 1.442695
      %v1307 = vpow.pop %v1306
      %v1308 = vmul.f32 %v1278, 1.442695
      %v1309 = vpow.pop %v1308
      %v1310 = vmul.f32 %v1279, 1.442695
      %v1311 = vpow.pop %v1310
      %v1312 = vadd.f32 %v1281, 1.0
      %v1313 = vadd.f32 %v1283, 1.0
      %v1314 = vadd.f32 %v1285, 1.0
      %v1315 = vadd.f32 %v1287, 1.0
      %v1316 = vadd.f32 %v1289, 1.0
      %v1317 = vadd.f32 %v1291, 1.0
      %v1318 = vadd.f32 %v1293, 1.0
      %v1319 = vadd.f32 %v1295, 1.0
      %v1320 = vadd.f32 %v1297, 1.0
      %v1321 = vadd.f32 %v1299, 1.0
      %v1322 = vadd.f32 %v1301, 1.0
      %v1323 = vadd.f32 %v1303, 1.0
      %v1324 = vadd.f32 %v1305, 1.0
      %v1325 = vadd.f32 %v1307, 1.0
      %v1326 = vadd.f32 %v1309, 1.0
      %v1327 = vadd.f32 %v1311, 1.0
      %v1328 = vrcp.pop %v1312
      %v1329 = vmul.f32 1.0, %v1328
      %v1330 = vrcp.pop %v1313
      %v1331 = vmul.f32 1.0, %v1330
      %v1332 = vrcp.pop %v1314
      %v1333 = vmul.f32 1.0, %v1332
      %v1334 = vrcp.pop %v1315
      %v1335 = vmul.f32 1.0, %v1334
      %v1336 = vrcp.pop %v1316
      %v1337 = vmul.f32 1.0, %v1336
      %v1338 = vrcp.pop %v1317
      %v1339 = vmul.f32 1.0, %v1338
      %v1340 = vrcp.pop %v1318
      %v1341 = vmul.f32 1.0, %v1340
      %v1342 = vrcp.pop %v1319
      %v1343 = vmul.f32 1.0, %v1342
      %v1344 = vrcp.pop %v1320
      %v1345 = vmul.f32 1.0, %v1344
      %v1346 = vrcp.pop %v1321
      %v1347 = vmul.f32 1.0, %v1346
      %v1348 = vrcp.pop %v1322
      %v1349 = vmul.f32 1.0, %v1348
      %v1350 = vrcp.pop %v1323
      %v1351 = vmul.f32 1.0, %v1350
      %v1352 = vrcp.pop %v1324
      %v1353 = vmul.f32 1.0, %v1352
      %v1354 = vrcp.pop %v1325
      %v1355 = vmul.f32 1.0, %v1354
      %v1356 = vrcp.pop %v1326
      %v1357 = vmul.f32 1.0, %v1356
      %v1358 = vrcp.pop %v1327
      %v1359 = vmul.f32 1.0, %v1358
      %v1360 = vadd.f32 %v1329, 0.0
      %v1361 = vadd.f32 %v1331, 0.0
      %v1362 = vadd.f32 %v1333, 0.0
      %v1363 = vadd.f32 %v1335, 0.0
      %v1364 = vadd.f32 %v1337, 0.0
      %v1365 = vadd.f32 %v1339, 0.0
      %v1366 = vadd.f32 %v1341, 0.0
      %v1367 = vadd.f32 %v1343, 0.0
      %v1368 = vadd.f32 %v1345, 0.0
      %v1369 = vadd.f32 %v1347, 0.0
      %v1370 = vadd.f32 %v1349, 0.0
      %v1371 = vadd.f32 %v1351, 0.0
      %v1372 = vadd.f32 %v1353, 0.0
      %v1373 = vadd.f32 %v1355, 0.0
      %v1374 = vadd.f32 %v1357, 0.0
      %v1375 = vadd.f32 %v1359, 0.0
      %s1376 = scalar_lea.vmem %s0, 96
      %v1377 = vld [vmem:[%s1376] sm:$0xff]
      %v1378 = vld [vmem:[%s1376 + $0x8] sm:$0xff]
      %v1379 = vld [vmem:[%s1376 + $0x10] sm:$0xff]
      %v1380 = vld [vmem:[%s1376 + $0x18] sm:$0xff]
      %1381 = vmatprep.subr.mxu0 0.0
      %1382 = vmatpush1.msra.mxu0 %v1377
      %1383 = vmatprep.subr.mxu0 0.0
      %1384 = vmatpush1.msra.mxu0 %v1378
      %1385 = vmatprep.subr.mxu0 0.0
      %1386 = vmatpush1.msra.mxu0 %v1379
      %1387 = vmatprep.subr.mxu0 0.0
      %1388 = vmatpush1.msra.mxu0 %v1380
      %1389 = vmatprep.subr.mxu0 0.0
      %1390 = vmatpush1.msra.mxu0 0.0
      %1391 = vmatprep.subr.mxu0 0.0
      %1392 = vmatpush1.msra.mxu0 0.0
      %1393 = vmatprep.subr.mxu0 0.0
      %1394 = vmatpush1.msra.mxu0 0.0
      %1395 = vmatprep.subr.mxu0 0.0
      %1396 = vmatpush1.msra.mxu0 0.0
      %1397 = vmatprep.subr.mxu0 0.0
      %1398 = vmatpush1.msra.mxu0 0.0
      %1399 = vmatprep.subr.mxu0 0.0
      %1400 = vmatpush1.msra.mxu0 0.0
      %1401 = vmatprep.subr.mxu0 0.0
      %1402 = vmatpush1.msra.mxu0 0.0
      %1403 = vmatprep.subr.mxu0 0.0
      %1404 = vmatpush1.msra.mxu0 0.0
      %1405 = vmatprep.subr.mxu0 0.0
      %1406 = vmatpush1.msra.mxu0 0.0
      %1407 = vmatprep.subr.mxu0 0.0
      %1408 = vmatpush1.msra.mxu0 0.0
      %1409 = vmatprep.subr.mxu0 0.0
      %1410 = vmatpush1.msra.mxu0 0.0
      %1411 = vmatprep.subr.mxu0 0.0
      %1412 = vmatpush1.msra.mxu0 0.0
      %1413 = vmatprep.subr.mxu0 0.0
      %1414 = vmatpush1.msra.mxu0 0.0
      %1415 = vmatprep.subr.mxu0 0.0
      %1416 = vmatpush1.msra.mxu0 0.0
      %1417 = vmatprep.subr.mxu0 0.0
      %1418 = vmatpush1.msra.mxu0 0.0
      %1419 = vmatprep.subr.mxu0 0.0
      %1420 = vmatpush1.msra.mxu0 0.0
      %1421 = vmatprep.subr.mxu0 0.0
      %1422 = vmatpush1.msra.mxu0 0.0
      %1423 = vmatprep.subr.mxu0 0.0
      %1424 = vmatpush1.msra.mxu0 0.0
      %1425 = vmatprep.subr.mxu0 0.0
      %1426 = vmatpush1.msra.mxu0 0.0
      %1427 = vmatprep.subr.mxu0 0.0
      %1428 = vmatpush1.msra.mxu0 0.0
      %1429 = vmatprep.subr.mxu0 0.0
      %1430 = vmatpush1.msra.mxu0 0.0
      %1431 = vmatprep.subr.mxu0 0.0
      %1432 = vmatpush1.msra.mxu0 0.0
      %1433 = vmatprep.subr.mxu0 0.0
      %1434 = vmatpush1.msra.mxu0 0.0
      %1435 = vmatprep.subr.mxu0 0.0
      %1436 = vmatpush1.msra.mxu0 0.0
      %1437 = vmatprep.subr.mxu0 0.0
      %1438 = vmatpush1.msra.mxu0 0.0
      %1439 = vmatprep.subr.mxu0 0.0
      %1440 = vmatpush1.msra.mxu0 0.0
      %1441 = vmatprep.subr.mxu0 0.0
      %1442 = vmatpush1.msra.mxu0 0.0
      %1443 = vmatprep.subr.mxu0 0.0
      %1444 = vmatpush1.msra.mxu0 0.0
      %1445 = vmatprep.mubr.f32.mxu0 0.0
      %1446 = vmatmul.mubr.f32.gmra.mrb[0].mxu0 %v544
      %v1447 = vpop.f32.mrb[0].mxu0
      %v1448 = vpop.f32.mrb[0].mxu0
      %1449 = vmatprep.mubr.f32.mxu0 0.0
      %1450 = vmatmul.mubr.f32.gmra.mrb[0].mxu0 %v547
      %v1451 = vpop.f32.mrb[0].mxu0
      %v1452 = vpop.f32.mrb[0].mxu0
      %1453 = vmatprep.mubr.f32.mxu0 0.0
      %1454 = vmatmul.mubr.f32.gmra.mrb[0].mxu0 %v550
      %v1455 = vpop.f32.mrb[0].mxu0
      %v1456 = vpop.f32.mrb[0].mxu0
      %1457 = vmatprep.mubr.f32.mxu0 0.0
      %1458 = vmatmul.mubr.f32.gmra.mrb[0].mxu0 %v553
      %v1459 = vpop.f32.mrb[0].mxu0
      %v1460 = vpop.f32.mrb[0].mxu0
      %1461 = vmatprep.mubr.f32.mxu0 0.0
      %1462 = vmatmul.mubr.f32.gmra.mrb[0].mxu0 %v556
      %v1463 = vpop.f32.mrb[0].mxu0
      %v1464 = vpop.f32.mrb[0].mxu0
      %1465 = vmatprep.mubr.f32.mxu0 0.0
      %1466 = vmatmul.mubr.f32.gmra.mrb[0].mxu0 %v559
      %v1467 = vpop.f32.mrb[0].mxu0
      %v1468 = vpop.f32.mrb[0].mxu0
      %1469 = vmatprep.mubr.f32.mxu0 0.0
      %1470 = vmatmul.mubr.f32.gmra.mrb[0].mxu0 %v562
      %v1471 = vpop.f32.mrb[0].mxu0
      %v1472 = vpop.f32.mrb[0].mxu0
      %1473 = vmatprep.mubr.f32.mxu0 0.0
      %1474 = vmatmul.mubr.f32.gmra.mrb[0].mxu0 %v565
      %v1475 = vpop.f32.mrb[0].mxu0
      %v1476 = vadd.f32 0.0, %v1475
      %v1477 = vpop.f32.mrb[0].mxu0
      %1478 = vmatprep.mubr.f32.mxu0 0.0
      %1479 = vmatmul.mubr.f32.gmra.mrb[0].mxu0 %v568
      %v1480 = vpop.f32.mrb[0].mxu0
      %v1481 = vadd.f32 0.0, %v1480
      %v1482 = vpop.f32.mrb[0].mxu0
      %1483 = vmatprep.mubr.f32.mxu0 0.0
      %1484 = vmatmul.mubr.f32.gmra.mrb[0].mxu0 %v571
      %v1485 = vpop.f32.mrb[0].mxu0
      %v1486 = vadd.f32 0.0, %v1485
      %v1487 = vpop.f32.mrb[0].mxu0
      %1488 = vmatprep.mubr.f32.mxu0 0.0
      %1489 = vmatmul.mubr.f32.gmra.mrb[0].mxu0 %v574
      %v1490 = vpop.f32.mrb[0].mxu0
      %v1491 = vadd.f32 0.0, %v1490
      %v1492 = vpop.f32.mrb[0].mxu0
      %1493 = vmatprep.mubr.f32.mxu0 0.0
      %1494 = vmatmul.mubr.f32.gmra.mrb[0].mxu0 %v577
      %v1495 = vpop.f32.mrb[0].mxu0
      %v1496 = vadd.f32 0.0, %v1495
      %v1497 = vpop.f32.mrb[0].mxu0
      %1498 = vmatprep.mubr.f32.mxu0 0.0
      %1499 = vmatmul.mubr.f32.gmra.mrb[0].mxu0 %v580
      %v1500 = vpop.f32.mrb[0].mxu0
      %v1501 = vadd.f32 0.0, %v1500
      %v1502 = vpop.f32.mrb[0].mxu0
      %1503 = vmatprep.mubr.f32.mxu0 0.0
      %1504 = vmatmul.mubr.f32.gmra.mrb[0].mxu0 %v583
      %v1505 = vpop.f32.mrb[0].mxu0
      %v1506 = vadd.f32 0.0, %v1505
      %v1507 = vpop.f32.mrb[0].mxu0
      %1508 = vmatprep.mubr.f32.mxu0 0.0
      %1509 = vmatmul.mubr.f32.gmra.mrb[0].mxu0 %v586
      %v1510 = vpop.f32.mrb[0].mxu0
      %v1511 = vadd.f32 0.0, %v1510
      %v1512 = vpop.f32.mrb[0].mxu0
      %1513 = vmatprep.mubr.f32.mxu0 0.0
      %1514 = vmatmul.mubr.f32.gmra.mrb[0].mxu0 %v589
      %v1515 = vpop.f32.mrb[0].mxu0
      %v1516 = vadd.f32 0.0, %v1515
      %v1517 = vpop.f32.mrb[0].mxu0
      %1518 = vmatprep.mubr.f32.mxu0 0.0
      %1519 = vmatmul.mubr.f32.gmra.mrb[0].mxu0 %v592
      %v1520 = vpop.f32.mrb[0].mxu0
      %v1521 = vadd.f32 0.0, %v1520
      %v1522 = vpop.f32.mrb[0].mxu0
      %1523 = vmatprep.mubr.f32.mxu0 0.0
      %1524 = vmatmul.mubr.f32.gmra.mrb[0].mxu0 %v595
      %v1525 = vpop.f32.mrb[0].mxu0
      %v1526 = vadd.f32 0.0, %v1525
      %v1527 = vpop.f32.mrb[0].mxu0
      %1528 = vmatprep.mubr.f32.mxu0 0.0
      %1529 = vmatmul.mubr.f32.gmra.mrb[0].mxu0 %v598
      %v1530 = vpop.f32.mrb[0].mxu0
      %v1531 = vadd.f32 0.0, %v1530
      %v1532 = vpop.f32.mrb[0].mxu0
      %1533 = vmatprep.mubr.f32.mxu0 0.0
      %1534 = vmatmul.mubr.f32.gmra.mrb[0].mxu0 %v601
      %v1535 = vpop.f32.mrb[0].mxu0
      %v1536 = vadd.f32 0.0, %v1535
      %v1537 = vpop.f32.mrb[0].mxu0
      %1538 = vmatprep.mubr.f32.mxu0 0.0
      %1539 = vmatmul.mubr.f32.gmra.mrb[0].mxu0 %v604
      %v1540 = vpop.f32.mrb[0].mxu0
      %v1541 = vadd.f32 0.0, %v1540
      %v1542 = vpop.f32.mrb[0].mxu0
      %1543 = vmatprep.mubr.f32.mxu0 0.0
      %1544 = vmatmul.mubr.f32.gmra.mrb[0].mxu0 %v607
      %v1545 = vpop.f32.mrb[0].mxu0
      %v1546 = vadd.f32 0.0, %v1545
      %v1547 = vpop.f32.mrb[0].mxu0
      %1548 = vmatprep.mubr.f32.mxu0 0.0
      %1549 = vmatmul.mubr.f32.gmra.mrb[0].mxu0 %v610
      %v1550 = vpop.f32.mrb[0].mxu0
      %v1551 = vadd.f32 0.0, %v1550
      %v1552 = vpop.f32.mrb[0].mxu0
      %1553 = vmatprep.mubr.f32.mxu0 0.0
      %1554 = vmatmul.mubr.f32.gmra.mrb[0].mxu0 %v613
      %v1555 = vpop.f32.mrb[0].mxu0
      %v1556 = vpop.f32.mrb[0].mxu0
      %1557 = vmatprep.mubr.f32.mxu0 0.0
      %1558 = vmatmul.mubr.f32.gmra.mrb[0].mxu0 %v616
      %v1559 = vpop.f32.mrb[0].mxu0
      %v1560 = vpop.f32.mrb[0].mxu0
      %1561 = vmatprep.mubr.f32.mxu0 0.0
      %1562 = vmatmul.mubr.f32.gmra.mrb[0].mxu0 %v619
      %v1563 = vpop.f32.mrb[0].mxu0
      %v1564 = vpop.f32.mrb[0].mxu0
      %1565 = vmatprep.mubr.f32.mxu0 0.0
      %1566 = vmatmul.mubr.f32.gmra.mrb[0].mxu0 %v622
      %v1567 = vpop.f32.mrb[0].mxu0
      %v1568 = vpop.f32.mrb[0].mxu0
      %1569 = vmatprep.mubr.f32.mxu0 0.0
      %1570 = vmatmul.mubr.f32.gmra.mrb[0].mxu0 %v625
      %v1571 = vpop.f32.mrb[0].mxu0
      %v1572 = vpop.f32.mrb[0].mxu0
      %1573 = vmatprep.mubr.f32.mxu0 0.0
      %1574 = vmatmul.mubr.f32.gmra.mrb[0].mxu0 %v628
      %v1575 = vpop.f32.mrb[0].mxu0
      %v1576 = vpop.f32.mrb[0].mxu0
      %1577 = vmatprep.mubr.f32.mxu0 0.0
      %1578 = vmatmul.mubr.f32.gmra.mrb[0].mxu0 %v631
      %v1579 = vpop.f32.mrb[0].mxu0
      %v1580 = vpop.f32.mrb[0].mxu0
      %1581 = vmatprep.mubr.f32.mxu0 0.0
      %1582 = vmatmul.mubr.f32.gmra.mrb[0].mxu0 %v634
      %v1583 = vpop.f32.mrb[0].mxu0
      %v1584 = vpop.f32.mrb[0].mxu0
      %1585 = vmatprep.mubr.f32.mxu0 0.0
      %1586 = vmatmul.mubr.f32.gmra.mrb[0].mxu0 %v637
      %v1587 = vpop.f32.mrb[0].mxu0
      %v1588 = vpop.f32.mrb[0].mxu0
      %1589 = vdwg.mxu0
      %s1590 = scalar_lea.vmem %s0, 128
      %v1591 = vld [vmem:[%s1590] sm:$0xff]
      %v1592 = vld [vmem:[%s1590 + $0x8] sm:$0xff]
      %v1593 = vld [vmem:[%s1590 + $0x10] sm:$0xff]
      %v1594 = vld [vmem:[%s1590 + $0x18] sm:$0xff]
      %1595 = vmatprep.subr.mxu0 0.0
      %1596 = vmatpush1.msra.mxu0 %v1591
      %1597 = vmatprep.subr.mxu0 0.0
      %1598 = vmatpush1.msra.mxu0 %v1592
      %1599 = vmatprep.subr.mxu0 0.0
      %1600 = vmatpush1.msra.mxu0 %v1593
      %1601 = vmatprep.subr.mxu0 0.0
      %1602 = vmatpush1.msra.mxu0 %v1594
      %1603 = vmatprep.subr.mxu0 0.0
      %1604 = vmatpush1.msra.mxu0 0.0
      %1605 = vmatprep.subr.mxu0 0.0
      %1606 = vmatpush1.msra.mxu0 0.0
      %1607 = vmatprep.subr.mxu0 0.0
      %1608 = vmatpush1.msra.mxu0 0.0
      %1609 = vmatprep.subr.mxu0 0.0
      %1610 = vmatpush1.msra.mxu0 0.0
      %1611 = vmatprep.subr.mxu0 0.0
      %1612 = vmatpush1.msra.mxu0 0.0
      %1613 = vmatprep.subr.mxu0 0.0
      %1614 = vmatpush1.msra.mxu0 0.0
      %1615 = vmatprep.subr.mxu0 0.0
      %1616 = vmatpush1.msra.mxu0 0.0
      %1617 = vmatprep.subr.mxu0 0.0
      %1618 = vmatpush1.msra.mxu0 0.0
      %1619 = vmatprep.subr.mxu0 0.0
      %1620 = vmatpush1.msra.mxu0 0.0
      %1621 = vmatprep.subr.mxu0 0.0
      %1622 = vmatpush1.msra.mxu0 0.0
      %1623 = vmatprep.subr.mxu0 0.0
      %1624 = vmatpush1.msra.mxu0 0.0
      %1625 = vmatprep.subr.mxu0 0.0
      %1626 = vmatpush1.msra.mxu0 0.0
      %1627 = vmatprep.subr.mxu0 0.0
      %1628 = vmatpush1.msra.mxu0 0.0
      %1629 = vmatprep.subr.mxu0 0.0
      %1630 = vmatpush1.msra.mxu0 0.0
      %1631 = vmatprep.subr.mxu0 0.0
      %1632 = vmatpush1.msra.mxu0 0.0
      %1633 = vmatprep.subr.mxu0 0.0
      %1634 = vmatpush1.msra.mxu0 0.0
      %1635 = vmatprep.subr.mxu0 0.0
      %1636 = vmatpush1.msra.mxu0 0.0
      %1637 = vmatprep.subr.mxu0 0.0
      %1638 = vmatpush1.msra.mxu0 0.0
      %1639 = vmatprep.subr.mxu0 0.0
      %1640 = vmatpush1.msra.mxu0 0.0
      %1641 = vmatprep.subr.mxu0 0.0
      %1642 = vmatpush1.msra.mxu0 0.0
      %1643 = vmatprep.subr.mxu0 0.0
      %1644 = vmatpush1.msra.mxu0 0.0
      %1645 = vmatprep.subr.mxu0 0.0
      %1646 = vmatpush1.msra.mxu0 0.0
      %1647 = vmatprep.subr.mxu0 0.0
      %1648 = vmatpush1.msra.mxu0 0.0
      %1649 = vmatprep.subr.mxu0 0.0
      %1650 = vmatpush1.msra.mxu0 0.0
      %1651 = vmatprep.subr.mxu0 0.0
      %1652 = vmatpush1.msra.mxu0 0.0
      %1653 = vmatprep.subr.mxu0 0.0
      %1654 = vmatpush1.msra.mxu0 0.0
      %1655 = vmatprep.subr.mxu0 0.0
      %1656 = vmatpush1.msra.mxu0 0.0
      %1657 = vmatprep.subr.mxu0 0.0
      %1658 = vmatpush1.msra.mxu0 0.0
      %1659 = vmatprep.mubr.f32.mxu0 0.0
      %1660 = vmatmul.mubr.f32.gmra.mrb[0].mxu0 %v568
      %v1661 = vpop.f32.mrb[0].mxu0
      %v1662 = vadd.f32 0.0, %v1661
      %v1663 = vpop.f32.mrb[0].mxu0
      %1664 = vmatprep.mubr.f32.mxu0 0.0
      %1665 = vmatmul.mubr.f32.gmra.mrb[0].mxu0 %v571
      %v1666 = vpop.f32.mrb[0].mxu0
      %v1667 = vadd.f32 0.0, %v1666
      %v1668 = vpop.f32.mrb[0].mxu0
      %1669 = vmatprep.mubr.f32.mxu0 0.0
      %1670 = vmatmul.mubr.f32.gmra.mrb[0].mxu0 %v574
      %v1671 = vpop.f32.mrb[0].mxu0
      %v1672 = vadd.f32 0.0, %v1671
      %v1673 = vpop.f32.mrb[0].mxu0
      %1674 = vmatprep.mubr.f32.mxu0 0.0
      %1675 = vmatmul.mubr.f32.gmra.mrb[0].mxu0 %v577
      %v1676 = vpop.f32.mrb[0].mxu0
      %v1677 = vadd.f32 0.0, %v1676
      %v1678 = vpop.f32.mrb[0].mxu0
      %1679 = vmatprep.mubr.f32.mxu0 0.0
      %1680 = vmatmul.mubr.f32.gmra.mrb[0].mxu0 %v580
      %v1681 = vpop.f32.mrb[0].mxu0
      %v1682 = vadd.f32 0.0, %v1681
      %v1683 = vpop.f32.mrb[0].mxu0
      %1684 = vmatprep.mubr.f32.mxu0 0.0
      %1685 = vmatmul.mubr.f32.gmra.mrb[0].mxu0 %v583
      %v1686 = vpop.f32.mrb[0].mxu0
      %v1687 = vadd.f32 0.0, %v1686
      %v1688 = vpop.f32.mrb[0].mxu0
      %1689 = vmatprep.mubr.f32.mxu0 0.0
      %1690 = vmatmul.mubr.f32.gmra.mrb[0].mxu0 %v586
      %v1691 = vpop.f32.mrb[0].mxu0
      %v1692 = vadd.f32 0.0, %v1691
      %v1693 = vpop.f32.mrb[0].mxu0
      %1694 = vmatprep.mubr.f32.mxu0 0.0
      %1695 = vmatmul.mubr.f32.gmra.mrb[0].mxu0 %v589
      %v1696 = vpop.f32.mrb[0].mxu0
      %v1697 = vadd.f32 0.0, %v1696
      %v1698 = vpop.f32.mrb[0].mxu0
      %1699 = vmatprep.mubr.f32.mxu0 0.0
      %1700 = vmatmul.mubr.f32.gmra.mrb[0].mxu0 %v592
      %v1701 = vpop.f32.mrb[0].mxu0
      %v1702 = vadd.f32 0.0, %v1701
      %v1703 = vpop.f32.mrb[0].mxu0
      %1704 = vmatprep.mubr.f32.mxu0 0.0
      %1705 = vmatmul.mubr.f32.gmra.mrb[0].mxu0 %v595
      %v1706 = vpop.f32.mrb[0].mxu0
      %v1707 = vadd.f32 0.0, %v1706
      %v1708 = vpop.f32.mrb[0].mxu0
      %1709 = vmatprep.mubr.f32.mxu0 0.0
      %1710 = vmatmul.mubr.f32.gmra.mrb[0].mxu0 %v598
      %v1711 = vpop.f32.mrb[0].mxu0
      %v1712 = vadd.f32 0.0, %v1711
      %v1713 = vpop.f32.mrb[0].mxu0
      %1714 = vmatprep.mubr.f32.mxu0 0.0
      %1715 = vmatmul.mubr.f32.gmra.mrb[0].mxu0 %v601
      %v1716 = vpop.f32.mrb[0].mxu0
      %v1717 = vadd.f32 0.0, %v1716
      %v1718 = vpop.f32.mrb[0].mxu0
      %1719 = vmatprep.mubr.f32.mxu0 0.0
      %1720 = vmatmul.mubr.f32.gmra.mrb[0].mxu0 %v604
      %v1721 = vpop.f32.mrb[0].mxu0
      %v1722 = vadd.f32 0.0, %v1721
      %v1723 = vpop.f32.mrb[0].mxu0
      %1724 = vmatprep.mubr.f32.mxu0 0.0
      %1725 = vmatmul.mubr.f32.gmra.mrb[0].mxu0 %v607
      %v1726 = vpop.f32.mrb[0].mxu0
      %v1727 = vadd.f32 0.0, %v1726
      %v1728 = vpop.f32.mrb[0].mxu0
      %1729 = vmatprep.mubr.f32.mxu0 0.0
      %1730 = vmatmul.mubr.f32.gmra.mrb[0].mxu0 %v610
      %v1731 = vpop.f32.mrb[0].mxu0
      %v1732 = vadd.f32 0.0, %v1731
      %v1733 = vpop.f32.mrb[0].mxu0
      %1734 = vmatprep.mubr.f32.mxu0 0.0
      %1735 = vmatmul.mubr.f32.gmra.mrb[0].mxu0 %v613
      %v1736 = vpop.f32.mrb[0].mxu0
      %v1737 = vadd.f32 0.0, %v1736
      %v1738 = vpop.f32.mrb[0].mxu0
      %1739 = vdwg.mxu0
      %s1740 = scalar_lea.vmem %s0, 160
      %v1741 = vld [vmem:[%s1740] sm:$0xff]
      %v1742 = vld [vmem:[%s1740 + $0x8] sm:$0xff]
      %v1743 = vld [vmem:[%s1740 + $0x10] sm:$0xff]
      %v1744 = vld [vmem:[%s1740 + $0x18] sm:$0xff]
      %1745 = vmatprep.subr.mxu0 0.0
      %1746 = vmatpush1.msra.mxu0 %v1741
      %1747 = vmatprep.subr.mxu0 0.0
      %1748 = vmatpush1.msra.mxu0 %v1742
      %1749 = vmatprep.subr.mxu0 0.0
      %1750 = vmatpush1.msra.mxu0 %v1743
      %1751 = vmatprep.subr.mxu0 0.0
      %1752 = vmatpush1.msra.mxu0 %v1744
      %1753 = vmatprep.subr.mxu0 0.0
      %1754 = vmatpush1.msra.mxu0 0.0
      %1755 = vmatprep.subr.mxu0 0.0
      %1756 = vmatpush1.msra.mxu0 0.0
      %1757 = vmatprep.subr.mxu0 0.0
      %1758 = vmatpush1.msra.mxu0 0.0
      %1759 = vmatprep.subr.mxu0 0.0
      %1760 = vmatpush1.msra.mxu0 0.0
      %1761 = vmatprep.subr.mxu0 0.0
      %1762 = vmatpush1.msra.mxu0 0.0
      %1763 = vmatprep.subr.mxu0 0.0
      %1764 = vmatpush1.msra.mxu0 0.0
      %1765 = vmatprep.subr.mxu0 0.0
      %1766 = vmatpush1.msra.mxu0 0.0
      %1767 = vmatprep.subr.mxu0 0.0
      %1768 = vmatpush1.msra.mxu0 0.0
      %1769 = vmatprep.subr.mxu0 0.0
      %1770 = vmatpush1.msra.mxu0 0.0
      %1771 = vmatprep.subr.mxu0 0.0
      %1772 = vmatpush1.msra.mxu0 0.0
      %1773 = vmatprep.subr.mxu0 0.0
      %1774 = vmatpush1.msra.mxu0 0.0
      %1775 = vmatprep.subr.mxu0 0.0
      %1776 = vmatpush1.msra.mxu0 0.0
      %1777 = vmatprep.subr.mxu0 0.0
      %1778 = vmatpush1.msra.mxu0 0.0
      %1779 = vmatprep.subr.mxu0 0.0
      %1780 = vmatpush1.msra.mxu0 0.0
      %1781 = vmatprep.subr.mxu0 0.0
      %1782 = vmatpush1.msra.mxu0 0.0
      %1783 = vmatprep.subr.mxu0 0.0
      %1784 = vmatpush1.msra.mxu0 0.0
      %1785 = vmatprep.subr.mxu0 0.0
      %1786 = vmatpush1.msra.mxu0 0.0
      %1787 = vmatprep.subr.mxu0 0.0
      %1788 = vmatpush1.msra.mxu0 0.0
      %1789 = vmatprep.subr.mxu0 0.0
      %1790 = vmatpush1.msra.mxu0 0.0
      %1791 = vmatprep.subr.mxu0 0.0
      %1792 = vmatpush1.msra.mxu0 0.0
      %1793 = vmatprep.subr.mxu0 0.0
      %1794 = vmatpush1.msra.mxu0 0.0
      %1795 = vmatprep.subr.mxu0 0.0
      %1796 = vmatpush1.msra.mxu0 0.0
      %1797 = vmatprep.subr.mxu0 0.0
      %1798 = vmatpush1.msra.mxu0 0.0
      %1799 = vmatprep.subr.mxu0 0.0
      %1800 = vmatpush1.msra.mxu0 0.0
      %1801 = vmatprep.subr.mxu0 0.0
      %1802 = vmatpush1.msra.mxu0 0.0
      %1803 = vmatprep.subr.mxu0 0.0
      %1804 = vmatpush1.msra.mxu0 0.0
      %1805 = vmatprep.subr.mxu0 0.0
      %1806 = vmatpush1.msra.mxu0 0.0
      %1807 = vmatprep.subr.mxu0 0.0
      %1808 = vmatpush1.msra.mxu0 0.0
      %1809 = vmatprep.mubr.f32.mxu0 0.0
      %1810 = vmatmul.mubr.f32.gmra.mrb[0].mxu0 %v544
      %v1811 = vpop.f32.mrb[0].mxu0
      %v1812 = vpop.f32.mrb[0].mxu0
      %1813 = vmatprep.mubr.f32.mxu0 0.0
      %1814 = vmatmul.mubr.f32.gmra.mrb[0].mxu0 %v547
      %v1815 = vpop.f32.mrb[0].mxu0
      %v1816 = vpop.f32.mrb[0].mxu0
      %1817 = vmatprep.mubr.f32.mxu0 0.0
      %1818 = vmatmul.mubr.f32.gmra.mrb[0].mxu0 %v550
      %v1819 = vpop.f32.mrb[0].mxu0
      %v1820 = vpop.f32.mrb[0].mxu0
      %1821 = vmatprep.mubr.f32.mxu0 0.0
      %1822 = vmatmul.mubr.f32.gmra.mrb[0].mxu0 %v553
      %v1823 = vpop.f32.mrb[0].mxu0
      %v1824 = vpop.f32.mrb[0].mxu0
      %1825 = vmatprep.mubr.f32.mxu0 0.0
      %1826 = vmatmul.mubr.f32.gmra.mrb[0].mxu0 %v556
      %v1827 = vpop.f32.mrb[0].mxu0
      %v1828 = vpop.f32.mrb[0].mxu0
      %1829 = vmatprep.mubr.f32.mxu0 0.0
      %1830 = vmatmul.mubr.f32.gmra.mrb[0].mxu0 %v559
      %v1831 = vpop.f32.mrb[0].mxu0
      %v1832 = vpop.f32.mrb[0].mxu0
      %1833 = vmatprep.mubr.f32.mxu0 0.0
      %1834 = vmatmul.mubr.f32.gmra.mrb[0].mxu0 %v562
      %v1835 = vpop.f32.mrb[0].mxu0
      %v1836 = vpop.f32.mrb[0].mxu0
      %1837 = vmatprep.mubr.f32.mxu0 0.0
      %1838 = vmatmul.mubr.f32.gmra.mrb[0].mxu0 %v565
      %v1839 = vpop.f32.mrb[0].mxu0
      %v1840 = vpop.f32.mrb[0].mxu0
      %1841 = vmatprep.mubr.f32.mxu0 0.0
      %1842 = vmatmul.mubr.f32.gmra.mrb[0].mxu0 %v568
      %v1843 = vpop.f32.mrb[0].mxu0
      %v1844 = vpop.f32.mrb[0].mxu0
      %1845 = vmatprep.mubr.f32.mxu0 0.0
      %1846 = vmatmul.mubr.f32.gmra.mrb[0].mxu0 %v571
      %v1847 = vpop.f32.mrb[0].mxu0
      %v1848 = vadd.f32 0.0, %v1847
      %v1849 = vpop.f32.mrb[0].mxu0
      %1850 = vmatprep.mubr.f32.mxu0 0.0
      %1851 = vmatmul.mubr.f32.gmra.mrb[0].mxu0 %v574
      %v1852 = vpop.f32.mrb[0].mxu0
      %v1853 = vadd.f32 0.0, %v1852
      %v1854 = vpop.f32.mrb[0].mxu0
      %1855 = vmatprep.mubr.f32.mxu0 0.0
      %1856 = vmatmul.mubr.f32.gmra.mrb[0].mxu0 %v577
      %v1857 = vpop.f32.mrb[0].mxu0
      %v1858 = vadd.f32 0.0, %v1857
      %v1859 = vpop.f32.mrb[0].mxu0
      %1860 = vmatprep.mubr.f32.mxu0 0.0
      %1861 = vmatmul.mubr.f32.gmra.mrb[0].mxu0 %v580
      %v1862 = vpop.f32.mrb[0].mxu0
      %v1863 = vadd.f32 0.0, %v1862
      %v1864 = vpop.f32.mrb[0].mxu0
      %1865 = vmatprep.mubr.f32.mxu0 0.0
      %1866 = vmatmul.mubr.f32.gmra.mrb[0].mxu0 %v583
      %v1867 = vpop.f32.mrb[0].mxu0
      %v1868 = vadd.f32 0.0, %v1867
      %v1869 = vpop.f32.mrb[0].mxu0
      %1870 = vmatprep.mubr.f32.mxu0 0.0
      %1871 = vmatmul.mubr.f32.gmra.mrb[0].mxu0 %v586
      %v1872 = vpop.f32.mrb[0].mxu0
      %v1873 = vadd.f32 0.0, %v1872
      %v1874 = vpop.f32.mrb[0].mxu0
      %1875 = vmatprep.mubr.f32.mxu0 0.0
      %1876 = vmatmul.mubr.f32.gmra.mrb[0].mxu0 %v589
      %v1877 = vpop.f32.mrb[0].mxu0
      %v1878 = vadd.f32 0.0, %v1877
      %v1879 = vpop.f32.mrb[0].mxu0
      %1880 = vmatprep.mubr.f32.mxu0 0.0
      %1881 = vmatmul.mubr.f32.gmra.mrb[0].mxu0 %v592
      %v1882 = vpop.f32.mrb[0].mxu0
      %v1883 = vadd.f32 0.0, %v1882
      %v1884 = vpop.f32.mrb[0].mxu0
      %1885 = vmatprep.mubr.f32.mxu0 0.0
      %1886 = vmatmul.mubr.f32.gmra.mrb[0].mxu0 %v595
      %v1887 = vpop.f32.mrb[0].mxu0
      %v1888 = vadd.f32 0.0, %v1887
      %v1889 = vpop.f32.mrb[0].mxu0
      %1890 = vmatprep.mubr.f32.mxu0 0.0
      %1891 = vmatmul.mubr.f32.gmra.mrb[0].mxu0 %v598
      %v1892 = vpop.f32.mrb[0].mxu0
      %v1893 = vadd.f32 0.0, %v1892
      %v1894 = vpop.f32.mrb[0].mxu0
      %1895 = vmatprep.mubr.f32.mxu0 0.0
      %1896 = vmatmul.mubr.f32.gmra.mrb[0].mxu0 %v601
      %v1897 = vpop.f32.mrb[0].mxu0
      %v1898 = vadd.f32 0.0, %v1897
      %v1899 = vpop.f32.mrb[0].mxu0
      %1900 = vmatprep.mubr.f32.mxu0 0.0
      %1901 = vmatmul.mubr.f32.gmra.mrb[0].mxu0 %v604
      %v1902 = vpop.f32.mrb[0].mxu0
      %v1903 = vadd.f32 0.0, %v1902
      %v1904 = vpop.f32.mrb[0].mxu0
      %1905 = vmatprep.mubr.f32.mxu0 0.0
      %1906 = vmatmul.mubr.f32.gmra.mrb[0].mxu0 %v607
      %v1907 = vpop.f32.mrb[0].mxu0
      %v1908 = vadd.f32 0.0, %v1907
      %v1909 = vpop.f32.mrb[0].mxu0
      %1910 = vmatprep.mubr.f32.mxu0 0.0
      %1911 = vmatmul.mubr.f32.gmra.mrb[0].mxu0 %v610
      %v1912 = vpop.f32.mrb[0].mxu0
      %v1913 = vadd.f32 0.0, %v1912
      %v1914 = vpop.f32.mrb[0].mxu0
      %1915 = vmatprep.mubr.f32.mxu0 0.0
      %1916 = vmatmul.mubr.f32.gmra.mrb[0].mxu0 %v613
      %v1917 = vpop.f32.mrb[0].mxu0
      %v1918 = vadd.f32 0.0, %v1917
      %v1919 = vpop.f32.mrb[0].mxu0
      %1920 = vmatprep.mubr.f32.mxu0 0.0
      %1921 = vmatmul.mubr.f32.gmra.mrb[0].mxu0 %v616
      %v1922 = vpop.f32.mrb[0].mxu0
      %v1923 = vadd.f32 0.0, %v1922
      %v1924 = vpop.f32.mrb[0].mxu0
      %1925 = vmatprep.mubr.f32.mxu0 0.0
      %1926 = vmatmul.mubr.f32.gmra.mrb[0].mxu0 %v619
      %v1927 = vpop.f32.mrb[0].mxu0
      %v1928 = vpop.f32.mrb[0].mxu0
      %1929 = vmatprep.mubr.f32.mxu0 0.0
      %1930 = vmatmul.mubr.f32.gmra.mrb[0].mxu0 %v622
      %v1931 = vpop.f32.mrb[0].mxu0
      %v1932 = vpop.f32.mrb[0].mxu0
      %1933 = vmatprep.mubr.f32.mxu0 0.0
      %1934 = vmatmul.mubr.f32.gmra.mrb[0].mxu0 %v625
      %v1935 = vpop.f32.mrb[0].mxu0
      %v1936 = vpop.f32.mrb[0].mxu0
      %1937 = vmatprep.mubr.f32.mxu0 0.0
      %1938 = vmatmul.mubr.f32.gmra.mrb[0].mxu0 %v628
      %v1939 = vpop.f32.mrb[0].mxu0
      %v1940 = vpop.f32.mrb[0].mxu0
      %1941 = vmatprep.mubr.f32.mxu0 0.0
      %1942 = vmatmul.mubr.f32.gmra.mrb[0].mxu0 %v631
      %v1943 = vpop.f32.mrb[0].mxu0
      %v1944 = vpop.f32.mrb[0].mxu0
      %1945 = vmatprep.mubr.f32.mxu0 0.0
      %1946 = vmatmul.mubr.f32.gmra.mrb[0].mxu0 %v634
      %v1947 = vpop.f32.mrb[0].mxu0
      %v1948 = vpop.f32.mrb[0].mxu0
      %1949 = vmatprep.mubr.f32.mxu0 0.0
      %1950 = vmatmul.mubr.f32.gmra.mrb[0].mxu0 %v637
      %v1951 = vpop.f32.mrb[0].mxu0
      %v1952 = vpop.f32.mrb[0].mxu0
      %1953 = vdwg.mxu0
      %v1954 = vmul.f32 %v1476, %v471
      %v1955 = vmul.f32 %v1481, %v472
      %v1956 = vmul.f32 %v1486, %v473
      %v1957 = vmul.f32 %v1491, %v474
      %v1958 = vmul.f32 %v1496, %v475
      %v1959 = vmul.f32 %v1501, %v476
      %v1960 = vmul.f32 %v1506, %v477
      %v1961 = vmul.f32 %v1511, %v478
      %v1962 = vmul.f32 %v1516, %v479
      %v1963 = vmul.f32 %v1521, %v480
      %v1964 = vmul.f32 %v1526, %v481
      %v1965 = vmul.f32 %v1531, %v482
      %v1966 = vmul.f32 %v1536, %v483
      %v1967 = vmul.f32 %v1541, %v484
      %v1968 = vmul.f32 %v1546, %v485
      %v1969 = vmul.f32 %v1551, %v486
      %v1970 = vmul.f32 %v1848, %v505
      %v1971 = vmul.f32 %v1853, %v506
      %v1972 = vmul.f32 %v1858, %v507
      %v1973 = vmul.f32 %v1863, %v508
      %v1974 = vmul.f32 %v1868, %v509
      %v1975 = vmul.f32 %v1873, %v510
      %v1976 = vmul.f32 %v1878, %v511
      %v1977 = vmul.f32 %v1883, %v512
      %v1978 = vmul.f32 %v1888, %v513
      %v1979 = vmul.f32 %v1893, %v514
      %v1980 = vmul.f32 %v1898, %v515
      %v1981 = vmul.f32 %v1903, %v516
      %v1982 = vmul.f32 %v1908, %v517
      %v1983 = vmul.f32 %v1913, %v518
      %v1984 = vmul.f32 %v1918, %v519
      %v1985 = vmul.f32 %v1923, %v520
      %v1986 = vadd.f32 %v1954, %v1662
      %v1987 = vadd.f32 %v1955, %v1667
      %v1988 = vadd.f32 %v1956, %v1672
      %v1989 = vadd.f32 %v1957, %v1677
      %v1990 = vadd.f32 %v1958, %v1682
      %v1991 = vadd.f32 %v1959, %v1687
      %v1992 = vadd.f32 %v1960, %v1692
      %v1993 = vadd.f32 %v1961, %v1697
      %v1994 = vadd.f32 %v1962, %v1702
      %v1995 = vadd.f32 %v1963, %v1707
      %v1996 = vadd.f32 %v1964, %v1712
      %v1997 = vadd.f32 %v1965, %v1717
      %v1998 = vadd.f32 %v1966, %v1722
      %v1999 = vadd.f32 %v1967, %v1727
      %v2000 = vadd.f32 %v1968, %v1732
      %v2001 = vadd.f32 %v1969, %v1737
      %v2002 = vadd.f32 %v1986, %v1970
      %v2003 = vadd.f32 %v1987, %v1971
      %v2004 = vadd.f32 %v1988, %v1972
      %v2005 = vadd.f32 %v1989, %v1973
      %v2006 = vadd.f32 %v1990, %v1974
      %v2007 = vadd.f32 %v1991, %v1975
      %v2008 = vadd.f32 %v1992, %v1976
      %v2009 = vadd.f32 %v1993, %v1977
      %v2010 = vadd.f32 %v1994, %v1978
      %v2011 = vadd.f32 %v1995, %v1979
      %v2012 = vadd.f32 %v1996, %v1980
      %v2013 = vadd.f32 %v1997, %v1981
      %v2014 = vadd.f32 %v1998, %v1982
      %v2015 = vadd.f32 %v1999, %v1983
      %v2016 = vadd.f32 %v2000, %v1984
      %v2017 = vadd.f32 %v2001, %v1985
      %v2018 = vlaneseq
      %v2019 = vshrl.u32 %v2018, 7
      %v2020 = vsub.s32 1, %v2019
      %v2021 = vrot.slane %v470, %v2020
      %v2022 = vadd.f32 %v2002, %v2021
      %v2023 = vadd.f32 %v2003, %v2021
      %v2024 = vadd.f32 %v2004, %v2021
      %v2025 = vadd.f32 %v2005, %v2021
      %v2026 = vadd.f32 %v2006, %v2021
      %v2027 = vadd.f32 %v2007, %v2021
      %v2028 = vadd.f32 %v2008, %v2021
      %v2029 = vadd.f32 %v2009, %v2021
      %v2030 = vadd.f32 %v2010, %v2021
      %v2031 = vadd.f32 %v2011, %v2021
      %v2032 = vadd.f32 %v2012, %v2021
      %v2033 = vadd.f32 %v2013, %v2021
      %v2034 = vadd.f32 %v2014, %v2021
      %v2035 = vadd.f32 %v2015, %v2021
      %v2036 = vadd.f32 %v2016, %v2021
      %v2037 = vadd.f32 %v2017, %v2021
      %v2038 = vxor.u32 %v2022, 2147483648
      %v2039 = vxor.u32 %v2023, 2147483648
      %v2040 = vxor.u32 %v2024, 2147483648
      %v2041 = vxor.u32 %v2025, 2147483648
      %v2042 = vxor.u32 %v2026, 2147483648
      %v2043 = vxor.u32 %v2027, 2147483648
      %v2044 = vxor.u32 %v2028, 2147483648
      %v2045 = vxor.u32 %v2029, 2147483648
      %v2046 = vxor.u32 %v2030, 2147483648
      %v2047 = vxor.u32 %v2031, 2147483648
      %v2048 = vxor.u32 %v2032, 2147483648
      %v2049 = vxor.u32 %v2033, 2147483648
      %v2050 = vxor.u32 %v2034, 2147483648
      %v2051 = vxor.u32 %v2035, 2147483648
      %v2052 = vxor.u32 %v2036, 2147483648
      %v2053 = vxor.u32 %v2037, 2147483648
      %v2054 = vmul.f32 %v2038, 1.442695
      %v2055 = vpow.pop %v2054
      %v2056 = vmul.f32 %v2039, 1.442695
      %v2057 = vpow.pop %v2056
      %v2058 = vmul.f32 %v2040, 1.442695
      %v2059 = vpow.pop %v2058
      %v2060 = vmul.f32 %v2041, 1.442695
      %v2061 = vpow.pop %v2060
      %v2062 = vmul.f32 %v2042, 1.442695
      %v2063 = vpow.pop %v2062
      %v2064 = vmul.f32 %v2043, 1.442695
      %v2065 = vpow.pop %v2064
      %v2066 = vmul.f32 %v2044, 1.442695
      %v2067 = vpow.pop %v2066
      %v2068 = vmul.f32 %v2045, 1.442695
      %v2069 = vpow.pop %v2068
      %v2070 = vmul.f32 %v2046, 1.442695
      %v2071 = vpow.pop %v2070
      %v2072 = vmul.f32 %v2047, 1.442695
      %v2073 = vpow.pop %v2072
      %v2074 = vmul.f32 %v2048, 1.442695
      %v2075 = vpow.pop %v2074
      %v2076 = vmul.f32 %v2049, 1.442695
      %v2077 = vpow.pop %v2076
      %v2078 = vmul.f32 %v2050, 1.442695
      %v2079 = vpow.pop %v2078
      %v2080 = vmul.f32 %v2051, 1.442695
      %v2081 = vpow.pop %v2080
      %v2082 = vmul.f32 %v2052, 1.442695
      %v2083 = vpow.pop %v2082
      %v2084 = vmul.f32 %v2053, 1.442695
      %v2085 = vpow.pop %v2084
      %v2086 = vadd.f32 %v2055, 1.0
      %v2087 = vadd.f32 %v2057, 1.0
      %v2088 = vadd.f32 %v2059, 1.0
      %v2089 = vadd.f32 %v2061, 1.0
      %v2090 = vadd.f32 %v2063, 1.0
      %v2091 = vadd.f32 %v2065, 1.0
      %v2092 = vadd.f32 %v2067, 1.0
      %v2093 = vadd.f32 %v2069, 1.0
      %v2094 = vadd.f32 %v2071, 1.0
      %v2095 = vadd.f32 %v2073, 1.0
      %v2096 = vadd.f32 %v2075, 1.0
      %v2097 = vadd.f32 %v2077, 1.0
      %v2098 = vadd.f32 %v2079, 1.0
      %v2099 = vadd.f32 %v2081, 1.0
      %v2100 = vadd.f32 %v2083, 1.0
      %v2101 = vadd.f32 %v2085, 1.0
      %v2102 = vrcp.pop %v2086
      %v2103 = vmul.f32 1.0, %v2102
      %v2104 = vrcp.pop %v2087
      %v2105 = vmul.f32 1.0, %v2104
      %v2106 = vrcp.pop %v2088
      %v2107 = vmul.f32 1.0, %v2106
      %v2108 = vrcp.pop %v2089
      %v2109 = vmul.f32 1.0, %v2108
      %v2110 = vrcp.pop %v2090
      %v2111 = vmul.f32 1.0, %v2110
      %v2112 = vrcp.pop %v2091
      %v2113 = vmul.f32 1.0, %v2112
      %v2114 = vrcp.pop %v2092
      %v2115 = vmul.f32 1.0, %v2114
      %v2116 = vrcp.pop %v2093
      %v2117 = vmul.f32 1.0, %v2116
      %v2118 = vrcp.pop %v2094
      %v2119 = vmul.f32 1.0, %v2118
      %v2120 = vrcp.pop %v2095
      %v2121 = vmul.f32 1.0, %v2120
      %v2122 = vrcp.pop %v2096
      %v2123 = vmul.f32 1.0, %v2122
      %v2124 = vrcp.pop %v2097
      %v2125 = vmul.f32 1.0, %v2124
      %v2126 = vrcp.pop %v2098
      %v2127 = vmul.f32 1.0, %v2126
      %v2128 = vrcp.pop %v2099
      %v2129 = vmul.f32 1.0, %v2128
      %v2130 = vrcp.pop %v2100
      %v2131 = vmul.f32 1.0, %v2130
      %v2132 = vrcp.pop %v2101
      %v2133 = vmul.f32 1.0, %v2132
      %v2134 = vadd.f32 %v1360, %v2103
      %v2135 = vadd.f32 %v1361, %v2105
      %v2136 = vadd.f32 %v1362, %v2107
      %v2137 = vadd.f32 %v1363, %v2109
      %v2138 = vadd.f32 %v1364, %v2111
      %v2139 = vadd.f32 %v1365, %v2113
      %v2140 = vadd.f32 %v1366, %v2115
      %v2141 = vadd.f32 %v1367, %v2117
      %v2142 = vadd.f32 %v1368, %v2119
      %v2143 = vadd.f32 %v1369, %v2121
      %v2144 = vadd.f32 %v1370, %v2123
      %v2145 = vadd.f32 %v1371, %v2125
      %v2146 = vadd.f32 %v1372, %v2127
      %v2147 = vadd.f32 %v1373, %v2129
      %v2148 = vadd.f32 %v1374, %v2131
      %v2149 = vadd.f32 %v1375, %v2133
      %s2150 = scalar_lea.vmem %s0, 192
      %v2151 = vld [vmem:[%s2150] sm:$0xff]
      %v2152 = vld [vmem:[%s2150 + $0x8] sm:$0xff]
      %v2153 = vld [vmem:[%s2150 + $0x10] sm:$0xff]
      %v2154 = vld [vmem:[%s2150 + $0x18] sm:$0xff]
      %2155 = vmatprep.subr.mxu0 0.0
      %2156 = vmatpush1.msra.mxu0 %v2151
      %2157 = vmatprep.subr.mxu0 0.0
      %2158 = vmatpush1.msra.mxu0 %v2152
      %2159 = vmatprep.subr.mxu0 0.0
      %2160 = vmatpush1.msra.mxu0 %v2153
      %2161 = vmatprep.subr.mxu0 0.0
      %2162 = vmatpush1.msra.mxu0 %v2154
      %2163 = vmatprep.subr.mxu0 0.0
      %2164 = vmatpush1.msra.mxu0 0.0
      %2165 = vmatprep.subr.mxu0 0.0
      %2166 = vmatpush1.msra.mxu0 0.0
      %2167 = vmatprep.subr.mxu0 0.0
      %2168 = vmatpush1.msra.mxu0 0.0
      %2169 = vmatprep.subr.mxu0 0.0
      %2170 = vmatpush1.msra.mxu0 0.0
      %2171 = vmatprep.subr.mxu0 0.0
      %2172 = vmatpush1.msra.mxu0 0.0
      %2173 = vmatprep.subr.mxu0 0.0
      %2174 = vmatpush1.msra.mxu0 0.0
      %2175 = vmatprep.subr.mxu0 0.0
      %2176 = vmatpush1.msra.mxu0 0.0
      %2177 = vmatprep.subr.mxu0 0.0
      %2178 = vmatpush1.msra.mxu0 0.0
      %2179 = vmatprep.subr.mxu0 0.0
      %2180 = vmatpush1.msra.mxu0 0.0
      %2181 = vmatprep.subr.mxu0 0.0
      %2182 = vmatpush1.msra.mxu0 0.0
      %2183 = vmatprep.subr.mxu0 0.0
      %2184 = vmatpush1.msra.mxu0 0.0
      %2185 = vmatprep.subr.mxu0 0.0
      %2186 = vmatpush1.msra.mxu0 0.0
      %2187 = vmatprep.subr.mxu0 0.0
      %2188 = vmatpush1.msra.mxu0 0.0
      %2189 = vmatprep.subr.mxu0 0.0
      %2190 = vmatpush1.msra.mxu0 0.0
      %2191 = vmatprep.subr.mxu0 0.0
      %2192 = vmatpush1.msra.mxu0 0.0
      %2193 = vmatprep.subr.mxu0 0.0
      %2194 = vmatpush1.msra.mxu0 0.0
      %2195 = vmatprep.subr.mxu0 0.0
      %2196 = vmatpush1.msra.mxu0 0.0
      %2197 = vmatprep.subr.mxu0 0.0
      %2198 = vmatpush1.msra.mxu0 0.0
      %2199 = vmatprep.subr.mxu0 0.0
      %2200 = vmatpush1.msra.mxu0 0.0
      %2201 = vmatprep.subr.mxu0 0.0
      %2202 = vmatpush1.msra.mxu0 0.0
      %2203 = vmatprep.subr.mxu0 0.0
      %2204 = vmatpush1.msra.mxu0 0.0
      %2205 = vmatprep.subr.mxu0 0.0
      %2206 = vmatpush1.msra.mxu0 0.0
      %2207 = vmatprep.subr.mxu0 0.0
      %2208 = vmatpush1.msra.mxu0 0.0
      %2209 = vmatprep.subr.mxu0 0.0
      %2210 = vmatpush1.msra.mxu0 0.0
      %2211 = vmatprep.subr.mxu0 0.0
      %2212 = vmatpush1.msra.mxu0 0.0
      %2213 = vmatprep.subr.mxu0 0.0
      %2214 = vmatpush1.msra.mxu0 0.0
      %2215 = vmatprep.subr.mxu0 0.0
      %2216 = vmatpush1.msra.mxu0 0.0
      %2217 = vmatprep.subr.mxu0 0.0
      %2218 = vmatpush1.msra.mxu0 0.0
      %2219 = vmatprep.mubr.f32.mxu0 0.0
      %2220 = vmatmul.mubr.f32.gmra.mrb[0].mxu0 %v544
      %v2221 = vpop.f32.mrb[0].mxu0
      %v2222 = vpop.f32.mrb[0].mxu0
      %2223 = vmatprep.mubr.f32.mxu0 0.0
      %2224 = vmatmul.mubr.f32.gmra.mrb[0].mxu0 %v547
      %v2225 = vpop.f32.mrb[0].mxu0
      %v2226 = vpop.f32.mrb[0].mxu0
      %2227 = vmatprep.mubr.f32.mxu0 0.0
      %2228 = vmatmul.mubr.f32.gmra.mrb[0].mxu0 %v550
      %v2229 = vpop.f32.mrb[0].mxu0
      %v2230 = vpop.f32.mrb[0].mxu0
      %2231 = vmatprep.mubr.f32.mxu0 0.0
      %2232 = vmatmul.mubr.f32.gmra.mrb[0].mxu0 %v553
      %v2233 = vpop.f32.mrb[0].mxu0
      %v2234 = vpop.f32.mrb[0].mxu0
      %2235 = vmatprep.mubr.f32.mxu0 0.0
      %2236 = vmatmul.mubr.f32.gmra.mrb[0].mxu0 %v556
      %v2237 = vpop.f32.mrb[0].mxu0
      %v2238 = vpop.f32.mrb[0].mxu0
      %2239 = vmatprep.mubr.f32.mxu0 0.0
      %2240 = vmatmul.mubr.f32.gmra.mrb[0].mxu0 %v559
      %v2241 = vpop.f32.mrb[0].mxu0
      %v2242 = vpop.f32.mrb[0].mxu0
      %2243 = vmatprep.mubr.f32.mxu0 0.0
      %2244 = vmatmul.mubr.f32.gmra.mrb[0].mxu0 %v562
      %v2245 = vpop.f32.mrb[0].mxu0
      %v2246 = vpop.f32.mrb[0].mxu0
      %2247 = vmatprep.mubr.f32.mxu0 0.0
      %2248 = vmatmul.mubr.f32.gmra.mrb[0].mxu0 %v565
      %v2249 = vpop.f32.mrb[0].mxu0
      %v2250 = vadd.f32 0.0, %v2249
      %v2251 = vpop.f32.mrb[0].mxu0
      %2252 = vmatprep.mubr.f32.mxu0 0.0
      %2253 = vmatmul.mubr.f32.gmra.mrb[0].mxu0 %v568
      %v2254 = vpop.f32.mrb[0].mxu0
      %v2255 = vadd.f32 0.0, %v2254
      %v2256 = vpop.f32.mrb[0].mxu0
      %2257 = vmatprep.mubr.f32.mxu0 0.0
      %2258 = vmatmul.mubr.f32.gmra.mrb[0].mxu0 %v571
      %v2259 = vpop.f32.mrb[0].mxu0
      %v2260 = vadd.f32 0.0, %v2259
      %v2261 = vpop.f32.mrb[0].mxu0
      %2262 = vmatprep.mubr.f32.mxu0 0.0
      %2263 = vmatmul.mubr.f32.gmra.mrb[0].mxu0 %v574
      %v2264 = vpop.f32.mrb[0].mxu0
      %v2265 = vadd.f32 0.0, %v2264
      %v2266 = vpop.f32.mrb[0].mxu0
      %2267 = vmatprep.mubr.f32.mxu0 0.0
      %2268 = vmatmul.mubr.f32.gmra.mrb[0].mxu0 %v577
      %v2269 = vpop.f32.mrb[0].mxu0
      %v2270 = vadd.f32 0.0, %v2269
      %v2271 = vpop.f32.mrb[0].mxu0
      %2272 = vmatprep.mubr.f32.mxu0 0.0
      %2273 = vmatmul.mubr.f32.gmra.mrb[0].mxu0 %v580
      %v2274 = vpop.f32.mrb[0].mxu0
      %v2275 = vadd.f32 0.0, %v2274
      %v2276 = vpop.f32.mrb[0].mxu0
      %2277 = vmatprep.mubr.f32.mxu0 0.0
      %2278 = vmatmul.mubr.f32.gmra.mrb[0].mxu0 %v583
      %v2279 = vpop.f32.mrb[0].mxu0
      %v2280 = vadd.f32 0.0, %v2279
      %v2281 = vpop.f32.mrb[0].mxu0
      %2282 = vmatprep.mubr.f32.mxu0 0.0
      %2283 = vmatmul.mubr.f32.gmra.mrb[0].mxu0 %v586
      %v2284 = vpop.f32.mrb[0].mxu0
      %v2285 = vadd.f32 0.0, %v2284
      %v2286 = vpop.f32.mrb[0].mxu0
      %2287 = vmatprep.mubr.f32.mxu0 0.0
      %2288 = vmatmul.mubr.f32.gmra.mrb[0].mxu0 %v589
      %v2289 = vpop.f32.mrb[0].mxu0
      %v2290 = vadd.f32 0.0, %v2289
      %v2291 = vpop.f32.mrb[0].mxu0
      %2292 = vmatprep.mubr.f32.mxu0 0.0
      %2293 = vmatmul.mubr.f32.gmra.mrb[0].mxu0 %v592
      %v2294 = vpop.f32.mrb[0].mxu0
      %v2295 = vadd.f32 0.0, %v2294
      %v2296 = vpop.f32.mrb[0].mxu0
      %2297 = vmatprep.mubr.f32.mxu0 0.0
      %2298 = vmatmul.mubr.f32.gmra.mrb[0].mxu0 %v595
      %v2299 = vpop.f32.mrb[0].mxu0
      %v2300 = vadd.f32 0.0, %v2299
      %v2301 = vpop.f32.mrb[0].mxu0
      %2302 = vmatprep.mubr.f32.mxu0 0.0
      %2303 = vmatmul.mubr.f32.gmra.mrb[0].mxu0 %v598
      %v2304 = vpop.f32.mrb[0].mxu0
      %v2305 = vadd.f32 0.0, %v2304
      %v2306 = vpop.f32.mrb[0].mxu0
      %2307 = vmatprep.mubr.f32.mxu0 0.0
      %2308 = vmatmul.mubr.f32.gmra.mrb[0].mxu0 %v601
      %v2309 = vpop.f32.mrb[0].mxu0
      %v2310 = vadd.f32 0.0, %v2309
      %v2311 = vpop.f32.mrb[0].mxu0
      %2312 = vmatprep.mubr.f32.mxu0 0.0
      %2313 = vmatmul.mubr.f32.gmra.mrb[0].mxu0 %v604
      %v2314 = vpop.f32.mrb[0].mxu0
      %v2315 = vadd.f32 0.0, %v2314
      %v2316 = vpop.f32.mrb[0].mxu0
      %2317 = vmatprep.mubr.f32.mxu0 0.0
      %2318 = vmatmul.mubr.f32.gmra.mrb[0].mxu0 %v607
      %v2319 = vpop.f32.mrb[0].mxu0
      %v2320 = vadd.f32 0.0, %v2319
      %v2321 = vpop.f32.mrb[0].mxu0
      %2322 = vmatprep.mubr.f32.mxu0 0.0
      %2323 = vmatmul.mubr.f32.gmra.mrb[0].mxu0 %v610
      %v2324 = vpop.f32.mrb[0].mxu0
      %v2325 = vadd.f32 0.0, %v2324
      %v2326 = vpop.f32.mrb[0].mxu0
      %2327 = vmatprep.mubr.f32.mxu0 0.0
      %2328 = vmatmul.mubr.f32.gmra.mrb[0].mxu0 %v613
      %v2329 = vpop.f32.mrb[0].mxu0
      %v2330 = vadd.f32 0.0, %v2329
      %v2331 = vpop.f32.mrb[0].mxu0
      %2332 = vmatprep.mubr.f32.mxu0 0.0
      %2333 = vmatmul.mubr.f32.gmra.mrb[0].mxu0 %v616
      %v2334 = vpop.f32.mrb[0].mxu0
      %v2335 = vpop.f32.mrb[0].mxu0
      %2336 = vmatprep.mubr.f32.mxu0 0.0
      %2337 = vmatmul.mubr.f32.gmra.mrb[0].mxu0 %v619
      %v2338 = vpop.f32.mrb[0].mxu0
      %v2339 = vpop.f32.mrb[0].mxu0
      %2340 = vmatprep.mubr.f32.mxu0 0.0
      %2341 = vmatmul.mubr.f32.gmra.mrb[0].mxu0 %v622
      %v2342 = vpop.f32.mrb[0].mxu0
      %v2343 = vpop.f32.mrb[0].mxu0
      %2344 = vmatprep.mubr.f32.mxu0 0.0
      %2345 = vmatmul.mubr.f32.gmra.mrb[0].mxu0 %v625
      %v2346 = vpop.f32.mrb[0].mxu0
      %v2347 = vpop.f32.mrb[0].mxu0
      %2348 = vmatprep.mubr.f32.mxu0 0.0
      %2349 = vmatmul.mubr.f32.gmra.mrb[0].mxu0 %v628
      %v2350 = vpop.f32.mrb[0].mxu0
      %v2351 = vpop.f32.mrb[0].mxu0
      %2352 = vmatprep.mubr.f32.mxu0 0.0
      %2353 = vmatmul.mubr.f32.gmra.mrb[0].mxu0 %v631
      %v2354 = vpop.f32.mrb[0].mxu0
      %v2355 = vpop.f32.mrb[0].mxu0
      %2356 = vmatprep.mubr.f32.mxu0 0.0
      %2357 = vmatmul.mubr.f32.gmra.mrb[0].mxu0 %v634
      %v2358 = vpop.f32.mrb[0].mxu0
      %v2359 = vpop.f32.mrb[0].mxu0
      %2360 = vmatprep.mubr.f32.mxu0 0.0
      %2361 = vmatmul.mubr.f32.gmra.mrb[0].mxu0 %v637
      %v2362 = vpop.f32.mrb[0].mxu0
      %v2363 = vpop.f32.mrb[0].mxu0
      %2364 = vdwg.mxu0
      %s2365 = scalar_lea.vmem %s0, 224
      %v2366 = vld [vmem:[%s2365] sm:$0xff]
      %v2367 = vld [vmem:[%s2365 + $0x8] sm:$0xff]
      %v2368 = vld [vmem:[%s2365 + $0x10] sm:$0xff]
      %v2369 = vld [vmem:[%s2365 + $0x18] sm:$0xff]
      %2370 = vmatprep.subr.mxu0 0.0
      %2371 = vmatpush1.msra.mxu0 %v2366
      %2372 = vmatprep.subr.mxu0 0.0
      %2373 = vmatpush1.msra.mxu0 %v2367
      %2374 = vmatprep.subr.mxu0 0.0
      %2375 = vmatpush1.msra.mxu0 %v2368
      %2376 = vmatprep.subr.mxu0 0.0
      %2377 = vmatpush1.msra.mxu0 %v2369
      %2378 = vmatprep.subr.mxu0 0.0
      %2379 = vmatpush1.msra.mxu0 0.0
      %2380 = vmatprep.subr.mxu0 0.0
      %2381 = vmatpush1.msra.mxu0 0.0
      %2382 = vmatprep.subr.mxu0 0.0
      %2383 = vmatpush1.msra.mxu0 0.0
      %2384 = vmatprep.subr.mxu0 0.0
      %2385 = vmatpush1.msra.mxu0 0.0
      %2386 = vmatprep.subr.mxu0 0.0
      %2387 = vmatpush1.msra.mxu0 0.0
      %2388 = vmatprep.subr.mxu0 0.0
      %2389 = vmatpush1.msra.mxu0 0.0
      %2390 = vmatprep.subr.mxu0 0.0
      %2391 = vmatpush1.msra.mxu0 0.0
      %2392 = vmatprep.subr.mxu0 0.0
      %2393 = vmatpush1.msra.mxu0 0.0
      %2394 = vmatprep.subr.mxu0 0.0
      %2395 = vmatpush1.msra.mxu0 0.0
      %2396 = vmatprep.subr.mxu0 0.0
      %2397 = vmatpush1.msra.mxu0 0.0
      %2398 = vmatprep.subr.mxu0 0.0
      %2399 = vmatpush1.msra.mxu0 0.0
      %2400 = vmatprep.subr.mxu0 0.0
      %2401 = vmatpush1.msra.mxu0 0.0
      %2402 = vmatprep.subr.mxu0 0.0
      %2403 = vmatpush1.msra.mxu0 0.0
      %2404 = vmatprep.subr.mxu0 0.0
      %2405 = vmatpush1.msra.mxu0 0.0
      %2406 = vmatprep.subr.mxu0 0.0
      %2407 = vmatpush1.msra.mxu0 0.0
      %2408 = vmatprep.subr.mxu0 0.0
      %2409 = vmatpush1.msra.mxu0 0.0
      %2410 = vmatprep.subr.mxu0 0.0
      %2411 = vmatpush1.msra.mxu0 0.0
      %2412 = vmatprep.subr.mxu0 0.0
      %2413 = vmatpush1.msra.mxu0 0.0
      %2414 = vmatprep.subr.mxu0 0.0
      %2415 = vmatpush1.msra.mxu0 0.0
      %2416 = vmatprep.subr.mxu0 0.0
      %2417 = vmatpush1.msra.mxu0 0.0
      %2418 = vmatprep.subr.mxu0 0.0
      %2419 = vmatpush1.msra.mxu0 0.0
      %2420 = vmatprep.subr.mxu0 0.0
      %2421 = vmatpush1.msra.mxu0 0.0
      %2422 = vmatprep.subr.mxu0 0.0
      %2423 = vmatpush1.msra.mxu0 0.0
      %2424 = vmatprep.subr.mxu0 0.0
      %2425 = vmatpush1.msra.mxu0 0.0
      %2426 = vmatprep.subr.mxu0 0.0
      %2427 = vmatpush1.msra.mxu0 0.0
      %2428 = vmatprep.subr.mxu0 0.0
      %2429 = vmatpush1.msra.mxu0 0.0
      %2430 = vmatprep.subr.mxu0 0.0
      %2431 = vmatpush1.msra.mxu0 0.0
      %2432 = vmatprep.subr.mxu0 0.0
      %2433 = vmatpush1.msra.mxu0 0.0
      %2434 = vmatprep.mubr.f32.mxu0 0.0
      %2435 = vmatmul.mubr.f32.gmra.mrb[0].mxu0 %v568
      %v2436 = vpop.f32.mrb[0].mxu0
      %v2437 = vadd.f32 0.0, %v2436
      %v2438 = vpop.f32.mrb[0].mxu0
      %2439 = vmatprep.mubr.f32.mxu0 0.0
      %2440 = vmatmul.mubr.f32.gmra.mrb[0].mxu0 %v571
      %v2441 = vpop.f32.mrb[0].mxu0
      %v2442 = vadd.f32 0.0, %v2441
      %v2443 = vpop.f32.mrb[0].mxu0
      %2444 = vmatprep.mubr.f32.mxu0 0.0
      %2445 = vmatmul.mubr.f32.gmra.mrb[0].mxu0 %v574
      %v2446 = vpop.f32.mrb[0].mxu0
      %v2447 = vadd.f32 0.0, %v2446
      %v2448 = vpop.f32.mrb[0].mxu0
      %2449 = vmatprep.mubr.f32.mxu0 0.0
      %2450 = vmatmul.mubr.f32.gmra.mrb[0].mxu0 %v577
      %v2451 = vpop.f32.mrb[0].mxu0
      %v2452 = vadd.f32 0.0, %v2451
      %v2453 = vpop.f32.mrb[0].mxu0
      %2454 = vmatprep.mubr.f32.mxu0 0.0
      %2455 = vmatmul.mubr.f32.gmra.mrb[0].mxu0 %v580
      %v2456 = vpop.f32.mrb[0].mxu0
      %v2457 = vadd.f32 0.0, %v2456
      %v2458 = vpop.f32.mrb[0].mxu0
      %2459 = vmatprep.mubr.f32.mxu0 0.0
      %2460 = vmatmul.mubr.f32.gmra.mrb[0].mxu0 %v583
      %v2461 = vpop.f32.mrb[0].mxu0
      %v2462 = vadd.f32 0.0, %v2461
      %v2463 = vpop.f32.mrb[0].mxu0
      %2464 = vmatprep.mubr.f32.mxu0 0.0
      %2465 = vmatmul.mubr.f32.gmra.mrb[0].mxu0 %v586
      %v2466 = vpop.f32.mrb[0].mxu0
      %v2467 = vadd.f32 0.0, %v2466
      %v2468 = vpop.f32.mrb[0].mxu0
      %2469 = vmatprep.mubr.f32.mxu0 0.0
      %2470 = vmatmul.mubr.f32.gmra.mrb[0].mxu0 %v589
      %v2471 = vpop.f32.mrb[0].mxu0
      %v2472 = vadd.f32 0.0, %v2471
      %v2473 = vpop.f32.mrb[0].mxu0
      %2474 = vmatprep.mubr.f32.mxu0 0.0
      %2475 = vmatmul.mubr.f32.gmra.mrb[0].mxu0 %v592
      %v2476 = vpop.f32.mrb[0].mxu0
      %v2477 = vadd.f32 0.0, %v2476
      %v2478 = vpop.f32.mrb[0].mxu0
      %2479 = vmatprep.mubr.f32.mxu0 0.0
      %2480 = vmatmul.mubr.f32.gmra.mrb[0].mxu0 %v595
      %v2481 = vpop.f32.mrb[0].mxu0
      %v2482 = vadd.f32 0.0, %v2481
      %v2483 = vpop.f32.mrb[0].mxu0
      %2484 = vmatprep.mubr.f32.mxu0 0.0
      %2485 = vmatmul.mubr.f32.gmra.mrb[0].mxu0 %v598
      %v2486 = vpop.f32.mrb[0].mxu0
      %v2487 = vadd.f32 0.0, %v2486
      %v2488 = vpop.f32.mrb[0].mxu0
      %2489 = vmatprep.mubr.f32.mxu0 0.0
      %2490 = vmatmul.mubr.f32.gmra.mrb[0].mxu0 %v601
      %v2491 = vpop.f32.mrb[0].mxu0
      %v2492 = vadd.f32 0.0, %v2491
      %v2493 = vpop.f32.mrb[0].mxu0
      %2494 = vmatprep.mubr.f32.mxu0 0.0
      %2495 = vmatmul.mubr.f32.gmra.mrb[0].mxu0 %v604
      %v2496 = vpop.f32.mrb[0].mxu0
      %v2497 = vadd.f32 0.0, %v2496
      %v2498 = vpop.f32.mrb[0].mxu0
      %2499 = vmatprep.mubr.f32.mxu0 0.0
      %2500 = vmatmul.mubr.f32.gmra.mrb[0].mxu0 %v607
      %v2501 = vpop.f32.mrb[0].mxu0
      %v2502 = vadd.f32 0.0, %v2501
      %v2503 = vpop.f32.mrb[0].mxu0
      %2504 = vmatprep.mubr.f32.mxu0 0.0
      %2505 = vmatmul.mubr.f32.gmra.mrb[0].mxu0 %v610
      %v2506 = vpop.f32.mrb[0].mxu0
      %v2507 = vadd.f32 0.0, %v2506
      %v2508 = vpop.f32.mrb[0].mxu0
      %2509 = vmatprep.mubr.f32.mxu0 0.0
      %2510 = vmatmul.mubr.f32.gmra.mrb[0].mxu0 %v613
      %v2511 = vpop.f32.mrb[0].mxu0
      %v2512 = vadd.f32 0.0, %v2511
      %v2513 = vpop.f32.mrb[0].mxu0
      %2514 = vdwg.mxu0
      %s2515 = scalar_lea.vmem %s0, 256
      %v2516 = vld [vmem:[%s2515] sm:$0xff]
      %v2517 = vld [vmem:[%s2515 + $0x8] sm:$0xff]
      %v2518 = vld [vmem:[%s2515 + $0x10] sm:$0xff]
      %v2519 = vld [vmem:[%s2515 + $0x18] sm:$0xff]
      %2520 = vmatprep.subr.mxu0 0.0
      %2521 = vmatpush1.msra.mxu0 %v2516
      %2522 = vmatprep.subr.mxu0 0.0
      %2523 = vmatpush1.msra.mxu0 %v2517
      %2524 = vmatprep.subr.mxu0 0.0
      %2525 = vmatpush1.msra.mxu0 %v2518
      %2526 = vmatprep.subr.mxu0 0.0
      %2527 = vmatpush1.msra.mxu0 %v2519
      %2528 = vmatprep.subr.mxu0 0.0
      %2529 = vmatpush1.msra.mxu0 0.0
      %2530 = vmatprep.subr.mxu0 0.0
      %2531 = vmatpush1.msra.mxu0 0.0
      %2532 = vmatprep.subr.mxu0 0.0
      %2533 = vmatpush1.msra.mxu0 0.0
      %2534 = vmatprep.subr.mxu0 0.0
      %2535 = vmatpush1.msra.mxu0 0.0
      %2536 = vmatprep.subr.mxu0 0.0
      %2537 = vmatpush1.msra.mxu0 0.0
      %2538 = vmatprep.subr.mxu0 0.0
      %2539 = vmatpush1.msra.mxu0 0.0
      %2540 = vmatprep.subr.mxu0 0.0
      %2541 = vmatpush1.msra.mxu0 0.0
      %2542 = vmatprep.subr.mxu0 0.0
      %2543 = vmatpush1.msra.mxu0 0.0
      %2544 = vmatprep.subr.mxu0 0.0
      %2545 = vmatpush1.msra.mxu0 0.0
      %2546 = vmatprep.subr.mxu0 0.0
      %2547 = vmatpush1.msra.mxu0 0.0
      %2548 = vmatprep.subr.mxu0 0.0
      %2549 = vmatpush1.msra.mxu0 0.0
      %2550 = vmatprep.subr.mxu0 0.0
      %2551 = vmatpush1.msra.mxu0 0.0
      %2552 = vmatprep.subr.mxu0 0.0
      %2553 = vmatpush1.msra.mxu0 0.0
      %2554 = vmatprep.subr.mxu0 0.0
      %2555 = vmatpush1.msra.mxu0 0.0
      %2556 = vmatprep.subr.mxu0 0.0
      %2557 = vmatpush1.msra.mxu0 0.0
      %2558 = vmatprep.subr.mxu0 0.0
      %2559 = vmatpush1.msra.mxu0 0.0
      %2560 = vmatprep.subr.mxu0 0.0
      %2561 = vmatpush1.msra.mxu0 0.0
      %2562 = vmatprep.subr.mxu0 0.0
      %2563 = vmatpush1.msra.mxu0 0.0
      %2564 = vmatprep.subr.mxu0 0.0
      %2565 = vmatpush1.msra.mxu0 0.0
      %2566 = vmatprep.subr.mxu0 0.0
      %2567 = vmatpush1.msra.mxu0 0.0
      %2568 = vmatprep.subr.mxu0 0.0
      %2569 = vmatpush1.msra.mxu0 0.0
      %2570 = vmatprep.subr.mxu0 0.0
      %2571 = vmatpush1.msra.mxu0 0.0
      %2572 = vmatprep.subr.mxu0 0.0
      %2573 = vmatpush1.msra.mxu0 0.0
      %2574 = vmatprep.subr.mxu0 0.0
      %2575 = vmatpush1.msra.mxu0 0.0
      %2576 = vmatprep.subr.mxu0 0.0
      %2577 = vmatpush1.msra.mxu0 0.0
      %2578 = vmatprep.subr.mxu0 0.0
      %2579 = vmatpush1.msra.mxu0 0.0
      %2580 = vmatprep.subr.mxu0 0.0
      %2581 = vmatpush1.msra.mxu0 0.0
      %2582 = vmatprep.subr.mxu0 0.0
      %2583 = vmatpush1.msra.mxu0 0.0
      %2584 = vmatprep.mubr.f32.mxu0 0.0
      %2585 = vmatmul.mubr.f32.gmra.mrb[0].mxu0 %v544
      %v2586 = vpop.f32.mrb[0].mxu0
      %v2587 = vpop.f32.mrb[0].mxu0
      %2588 = vmatprep.mubr.f32.mxu0 0.0
      %2589 = vmatmul.mubr.f32.gmra.mrb[0].mxu0 %v547
      %v2590 = vpop.f32.mrb[0].mxu0
      %v2591 = vpop.f32.mrb[0].mxu0
      %2592 = vmatprep.mubr.f32.mxu0 0.0
      %2593 = vmatmul.mubr.f32.gmra.mrb[0].mxu0 %v550
      %v2594 = vpop.f32.mrb[0].mxu0
      %v2595 = vpop.f32.mrb[0].mxu0
      %2596 = vmatprep.mubr.f32.mxu0 0.0
      %2597 = vmatmul.mubr.f32.gmra.mrb[0].mxu0 %v553
      %v2598 = vpop.f32.mrb[0].mxu0
      %v2599 = vpop.f32.mrb[0].mxu0
      %2600 = vmatprep.mubr.f32.mxu0 0.0
      %2601 = vmatmul.mubr.f32.gmra.mrb[0].mxu0 %v556
      %v2602 = vpop.f32.mrb[0].mxu0
      %v2603 = vpop.f32.mrb[0].mxu0
      %2604 = vmatprep.mubr.f32.mxu0 0.0
      %2605 = vmatmul.mubr.f32.gmra.mrb[0].mxu0 %v559
      %v2606 = vpop.f32.mrb[0].mxu0
      %v2607 = vpop.f32.mrb[0].mxu0
      %2608 = vmatprep.mubr.f32.mxu0 0.0
      %2609 = vmatmul.mubr.f32.gmra.mrb[0].mxu0 %v562
      %v2610 = vpop.f32.mrb[0].mxu0
      %v2611 = vpop.f32.mrb[0].mxu0
      %2612 = vmatprep.mubr.f32.mxu0 0.0
      %2613 = vmatmul.mubr.f32.gmra.mrb[0].mxu0 %v565
      %v2614 = vpop.f32.mrb[0].mxu0
      %v2615 = vpop.f32.mrb[0].mxu0
      %2616 = vmatprep.mubr.f32.mxu0 0.0
      %2617 = vmatmul.mubr.f32.gmra.mrb[0].mxu0 %v568
      %v2618 = vpop.f32.mrb[0].mxu0
      %v2619 = vadd.f32 0.0, %v2618
      %v2620 = vpop.f32.mrb[0].mxu0
      %2621 = vmatprep.mubr.f32.mxu0 0.0
      %2622 = vmatmul.mubr.f32.gmra.mrb[0].mxu0 %v571
      %v2623 = vpop.f32.mrb[0].mxu0
      %v2624 = vadd.f32 0.0, %v2623
      %v2625 = vpop.f32.mrb[0].mxu0
      %2626 = vmatprep.mubr.f32.mxu0 0.0
      %2627 = vmatmul.mubr.f32.gmra.mrb[0].mxu0 %v574
      %v2628 = vpop.f32.mrb[0].mxu0
      %v2629 = vadd.f32 0.0, %v2628
      %v2630 = vpop.f32.mrb[0].mxu0
      %2631 = vmatprep.mubr.f32.mxu0 0.0
      %2632 = vmatmul.mubr.f32.gmra.mrb[0].mxu0 %v577
      %v2633 = vpop.f32.mrb[0].mxu0
      %v2634 = vadd.f32 0.0, %v2633
      %v2635 = vpop.f32.mrb[0].mxu0
      %2636 = vmatprep.mubr.f32.mxu0 0.0
      %2637 = vmatmul.mubr.f32.gmra.mrb[0].mxu0 %v580
      %v2638 = vpop.f32.mrb[0].mxu0
      %v2639 = vadd.f32 0.0, %v2638
      %v2640 = vpop.f32.mrb[0].mxu0
      %2641 = vmatprep.mubr.f32.mxu0 0.0
      %2642 = vmatmul.mubr.f32.gmra.mrb[0].mxu0 %v583
      %v2643 = vpop.f32.mrb[0].mxu0
      %v2644 = vadd.f32 0.0, %v2643
      %v2645 = vpop.f32.mrb[0].mxu0
      %2646 = vmatprep.mubr.f32.mxu0 0.0
      %2647 = vmatmul.mubr.f32.gmra.mrb[0].mxu0 %v586
      %v2648 = vpop.f32.mrb[0].mxu0
      %v2649 = vadd.f32 0.0, %v2648
      %v2650 = vpop.f32.mrb[0].mxu0
      %2651 = vmatprep.mubr.f32.mxu0 0.0
      %2652 = vmatmul.mubr.f32.gmra.mrb[0].mxu0 %v589
      %v2653 = vpop.f32.mrb[0].mxu0
      %v2654 = vadd.f32 0.0, %v2653
      %v2655 = vpop.f32.mrb[0].mxu0
      %2656 = vmatprep.mubr.f32.mxu0 0.0
      %2657 = vmatmul.mubr.f32.gmra.mrb[0].mxu0 %v592
      %v2658 = vpop.f32.mrb[0].mxu0
      %v2659 = vadd.f32 0.0, %v2658
      %v2660 = vpop.f32.mrb[0].mxu0
      %2661 = vmatprep.mubr.f32.mxu0 0.0
      %2662 = vmatmul.mubr.f32.gmra.mrb[0].mxu0 %v595
      %v2663 = vpop.f32.mrb[0].mxu0
      %v2664 = vadd.f32 0.0, %v2663
      %v2665 = vpop.f32.mrb[0].mxu0
      %2666 = vmatprep.mubr.f32.mxu0 0.0
      %2667 = vmatmul.mubr.f32.gmra.mrb[0].mxu0 %v598
      %v2668 = vpop.f32.mrb[0].mxu0
      %v2669 = vadd.f32 0.0, %v2668
      %v2670 = vpop.f32.mrb[0].mxu0
      %2671 = vmatprep.mubr.f32.mxu0 0.0
      %2672 = vmatmul.mubr.f32.gmra.mrb[0].mxu0 %v601
      %v2673 = vpop.f32.mrb[0].mxu0
      %v2674 = vadd.f32 0.0, %v2673
      %v2675 = vpop.f32.mrb[0].mxu0
      %2676 = vmatprep.mubr.f32.mxu0 0.0
      %2677 = vmatmul.mubr.f32.gmra.mrb[0].mxu0 %v604
      %v2678 = vpop.f32.mrb[0].mxu0
      %v2679 = vadd.f32 0.0, %v2678
      %v2680 = vpop.f32.mrb[0].mxu0
      %2681 = vmatprep.mubr.f32.mxu0 0.0
      %2682 = vmatmul.mubr.f32.gmra.mrb[0].mxu0 %v607
      %v2683 = vpop.f32.mrb[0].mxu0
      %v2684 = vadd.f32 0.0, %v2683
      %v2685 = vpop.f32.mrb[0].mxu0
      %2686 = vmatprep.mubr.f32.mxu0 0.0
      %2687 = vmatmul.mubr.f32.gmra.mrb[0].mxu0 %v610
      %v2688 = vpop.f32.mrb[0].mxu0
      %v2689 = vadd.f32 0.0, %v2688
      %v2690 = vpop.f32.mrb[0].mxu0
      %2691 = vmatprep.mubr.f32.mxu0 0.0
      %2692 = vmatmul.mubr.f32.gmra.mrb[0].mxu0 %v613
      %v2693 = vpop.f32.mrb[0].mxu0
      %v2694 = vadd.f32 0.0, %v2693
      %v2695 = vpop.f32.mrb[0].mxu0
      %2696 = vmatprep.mubr.f32.mxu0 0.0
      %2697 = vmatmul.mubr.f32.gmra.mrb[0].mxu0 %v616
      %v2698 = vpop.f32.mrb[0].mxu0
      %v2699 = vadd.f32 0.0, %v2698
      %v2700 = vpop.f32.mrb[0].mxu0
      %2701 = vmatprep.mubr.f32.mxu0 0.0
      %2702 = vmatmul.mubr.f32.gmra.mrb[0].mxu0 %v619
      %v2703 = vpop.f32.mrb[0].mxu0
      %v2704 = vpop.f32.mrb[0].mxu0
      %2705 = vmatprep.mubr.f32.mxu0 0.0
      %2706 = vmatmul.mubr.f32.gmra.mrb[0].mxu0 %v622
      %v2707 = vpop.f32.mrb[0].mxu0
      %v2708 = vpop.f32.mrb[0].mxu0
      %2709 = vmatprep.mubr.f32.mxu0 0.0
      %2710 = vmatmul.mubr.f32.gmra.mrb[0].mxu0 %v625
      %v2711 = vpop.f32.mrb[0].mxu0
      %v2712 = vpop.f32.mrb[0].mxu0
      %2713 = vmatprep.mubr.f32.mxu0 0.0
      %2714 = vmatmul.mubr.f32.gmra.mrb[0].mxu0 %v628
      %v2715 = vpop.f32.mrb[0].mxu0
      %v2716 = vpop.f32.mrb[0].mxu0
      %2717 = vmatprep.mubr.f32.mxu0 0.0
      %2718 = vmatmul.mubr.f32.gmra.mrb[0].mxu0 %v631
      %v2719 = vpop.f32.mrb[0].mxu0
      %v2720 = vpop.f32.mrb[0].mxu0
      %2721 = vmatprep.mubr.f32.mxu0 0.0
      %2722 = vmatmul.mubr.f32.gmra.mrb[0].mxu0 %v634
      %v2723 = vpop.f32.mrb[0].mxu0
      %v2724 = vpop.f32.mrb[0].mxu0
      %2725 = vmatprep.mubr.f32.mxu0 0.0
      %2726 = vmatmul.mubr.f32.gmra.mrb[0].mxu0 %v637
      %v2727 = vpop.f32.mrb[0].mxu0
      %v2728 = vpop.f32.mrb[0].mxu0
      %2729 = vdwg.mxu0
      %vm2746 = vcmask 1046528
      %v2747 = vrot.slane %v488, 1
      %v2748 = vrot.slane %v489, 1
      %v2749 = vsel %vm2746, %v2747, %v2748
      %v2750 = vrot.slane %v490, 1
      %v2751 = vsel %vm2746, %v2748, %v2750
      %v2752 = vrot.slane %v491, 1
      %v2753 = vsel %vm2746, %v2750, %v2752
      %v2754 = vrot.slane %v492, 1
      %v2755 = vsel %vm2746, %v2752, %v2754
      %v2756 = vrot.slane %v493, 1
      %v2757 = vsel %vm2746, %v2754, %v2756
      %v2758 = vrot.slane %v494, 1
      %v2759 = vsel %vm2746, %v2756, %v2758
      %v2760 = vrot.slane %v495, 1
      %v2761 = vsel %vm2746, %v2758, %v2760
      %v2762 = vrot.slane %v496, 1
      %v2763 = vsel %vm2746, %v2760, %v2762
      %v2764 = vrot.slane %v497, 1
      %v2765 = vsel %vm2746, %v2762, %v2764
      %v2766 = vrot.slane %v498, 1
      %v2767 = vsel %vm2746, %v2764, %v2766
      %v2768 = vrot.slane %v499, 1
      %v2769 = vsel %vm2746, %v2766, %v2768
      %v2770 = vrot.slane %v500, 1
      %v2771 = vsel %vm2746, %v2768, %v2770
      %v2772 = vrot.slane %v501, 1
      %v2773 = vsel %vm2746, %v2770, %v2772
      %v2774 = vrot.slane %v502, 1
      %v2775 = vsel %vm2746, %v2772, %v2774
      %v2776 = vrot.slane %v503, 1
      %v2777 = vsel %vm2746, %v2774, %v2776
      %v2795 = vmul.f32 %v2250, %v2747
      %v2796 = vmul.f32 %v2255, %v2749
      %v2797 = vmul.f32 %v2260, %v2751
      %v2798 = vmul.f32 %v2265, %v2753
      %v2799 = vmul.f32 %v2270, %v2755
      %v2800 = vmul.f32 %v2275, %v2757
      %v2801 = vmul.f32 %v2280, %v2759
      %v2802 = vmul.f32 %v2285, %v2761
      %v2803 = vmul.f32 %v2290, %v2763
      %v2804 = vmul.f32 %v2295, %v2765
      %v2805 = vmul.f32 %v2300, %v2767
      %v2806 = vmul.f32 %v2305, %v2769
      %v2807 = vmul.f32 %v2310, %v2771
      %v2808 = vmul.f32 %v2315, %v2773
      %v2809 = vmul.f32 %v2320, %v2775
      %v2810 = vmul.f32 %v2325, %v2777
      %v2811 = vmul.f32 %v2330, %v2776
      %vm2828 = vcmask 1040384
      %v2829 = vrot.slane %v522, 7
      %v2830 = vrot.slane %v523, 7
      %v2831 = vsel %vm2828, %v2829, %v2830
      %v2832 = vrot.slane %v524, 7
      %v2833 = vsel %vm2828, %v2830, %v2832
      %v2834 = vrot.slane %v525, 7
      %v2835 = vsel %vm2828, %v2832, %v2834
      %v2836 = vrot.slane %v526, 7
      %v2837 = vsel %vm2828, %v2834, %v2836
      %v2838 = vrot.slane %v527, 7
      %v2839 = vsel %vm2828, %v2836, %v2838
      %v2840 = vrot.slane %v528, 7
      %v2841 = vsel %vm2828, %v2838, %v2840
      %v2842 = vrot.slane %v529, 7
      %v2843 = vsel %vm2828, %v2840, %v2842
      %v2844 = vrot.slane %v530, 7
      %v2845 = vsel %vm2828, %v2842, %v2844
      %v2846 = vrot.slane %v531, 7
      %v2847 = vsel %vm2828, %v2844, %v2846
      %v2848 = vrot.slane %v532, 7
      %v2849 = vsel %vm2828, %v2846, %v2848
      %v2850 = vrot.slane %v533, 7
      %v2851 = vsel %vm2828, %v2848, %v2850
      %v2852 = vrot.slane %v534, 7
      %v2853 = vsel %vm2828, %v2850, %v2852
      %v2854 = vrot.slane %v535, 7
      %v2855 = vsel %vm2828, %v2852, %v2854
      %v2856 = vrot.slane %v536, 7
      %v2857 = vsel %vm2828, %v2854, %v2856
      %v2858 = vrot.slane %v537, 7
      %v2859 = vsel %vm2828, %v2856, %v2858
      %v2877 = vmul.f32 %v2619, %v2829
      %v2878 = vmul.f32 %v2624, %v2831
      %v2879 = vmul.f32 %v2629, %v2833
      %v2880 = vmul.f32 %v2634, %v2835
      %v2881 = vmul.f32 %v2639, %v2837
      %v2882 = vmul.f32 %v2644, %v2839
      %v2883 = vmul.f32 %v2649, %v2841
      %v2884 = vmul.f32 %v2654, %v2843
      %v2885 = vmul.f32 %v2659, %v2845
      %v2886 = vmul.f32 %v2664, %v2847
      %v2887 = vmul.f32 %v2669, %v2849
      %v2888 = vmul.f32 %v2674, %v2851
      %v2889 = vmul.f32 %v2679, %v2853
      %v2890 = vmul.f32 %v2684, %v2855
      %v2891 = vmul.f32 %v2689, %v2857
      %v2892 = vmul.f32 %v2694, %v2859
      %v2893 = vmul.f32 %v2699, %v2858
      %v2910 = vrot.slane %v2437, 1
      %v2911 = vrot.slane %v2442, 1
      %v2912 = vsel %vm2746, %v2910, %v2911
      %v2913 = vrot.slane %v2447, 1
      %v2914 = vsel %vm2746, %v2911, %v2913
      %v2915 = vrot.slane %v2452, 1
      %v2916 = vsel %vm2746, %v2913, %v2915
      %v2917 = vrot.slane %v2457, 1
      %v2918 = vsel %vm2746, %v2915, %v2917
      %v2919 = vrot.slane %v2462, 1
      %v2920 = vsel %vm2746, %v2917, %v2919
      %v2921 = vrot.slane %v2467, 1
      %v2922 = vsel %vm2746, %v2919, %v2921
      %v2923 = vrot.slane %v2472, 1
      %v2924 = vsel %vm2746, %v2921, %v2923
      %v2925 = vrot.slane %v2477, 1
      %v2926 = vsel %vm2746, %v2923, %v2925
      %v2927 = vrot.slane %v2482, 1
      %v2928 = vsel %vm2746, %v2925, %v2927
      %v2929 = vrot.slane %v2487, 1
      %v2930 = vsel %vm2746, %v2927, %v2929
      %v2931 = vrot.slane %v2492, 1
      %v2932 = vsel %vm2746, %v2929, %v2931
      %v2933 = vrot.slane %v2497, 1
      %v2934 = vsel %vm2746, %v2931, %v2933
      %v2935 = vrot.slane %v2502, 1
      %v2936 = vsel %vm2746, %v2933, %v2935
      %v2937 = vrot.slane %v2507, 1
      %v2938 = vsel %vm2746, %v2935, %v2937
      %v2939 = vrot.slane %v2512, 1
      %v2940 = vsel %vm2746, %v2937, %v2939
      %v2958 = vadd.f32 %v2795, %v2910
      %v2959 = vadd.f32 %v2796, %v2912
      %v2960 = vadd.f32 %v2797, %v2914
      %v2961 = vadd.f32 %v2798, %v2916
      %v2962 = vadd.f32 %v2799, %v2918
      %v2963 = vadd.f32 %v2800, %v2920
      %v2964 = vadd.f32 %v2801, %v2922
      %v2965 = vadd.f32 %v2802, %v2924
      %v2966 = vadd.f32 %v2803, %v2926
      %v2967 = vadd.f32 %v2804, %v2928
      %v2968 = vadd.f32 %v2805, %v2930
      %v2969 = vadd.f32 %v2806, %v2932
      %v2970 = vadd.f32 %v2807, %v2934
      %v2971 = vadd.f32 %v2808, %v2936
      %v2972 = vadd.f32 %v2809, %v2938
      %v2973 = vadd.f32 %v2810, %v2940
      %v2974 = vadd.f32 %v2811, %v2939
      %vm2992 = vcmask 1045504
      %v2993 = vrot.slane %v2877, 2
      %v2994 = vrot.slane %v2878, 2
      %v2995 = vsel %vm2992, %v2993, %v2994
      %v2996 = vrot.slane %v2879, 2
      %v2997 = vsel %vm2992, %v2994, %v2996
      %v2998 = vrot.slane %v2880, 2
      %v2999 = vsel %vm2992, %v2996, %v2998
      %v3000 = vrot.slane %v2881, 2
      %v3001 = vsel %vm2992, %v2998, %v3000
      %v3002 = vrot.slane %v2882, 2
      %v3003 = vsel %vm2992, %v3000, %v3002
      %v3004 = vrot.slane %v2883, 2
      %v3005 = vsel %vm2992, %v3002, %v3004
      %v3006 = vrot.slane %v2884, 2
      %v3007 = vsel %vm2992, %v3004, %v3006
      %v3008 = vrot.slane %v2885, 2
      %v3009 = vsel %vm2992, %v3006, %v3008
      %v3010 = vrot.slane %v2886, 2
      %v3011 = vsel %vm2992, %v3008, %v3010
      %v3012 = vrot.slane %v2887, 2
      %v3013 = vsel %vm2992, %v3010, %v3012
      %v3014 = vrot.slane %v2888, 2
      %v3015 = vsel %vm2992, %v3012, %v3014
      %v3016 = vrot.slane %v2889, 2
      %v3017 = vsel %vm2992, %v3014, %v3016
      %v3018 = vrot.slane %v2890, 2
      %v3019 = vsel %vm2992, %v3016, %v3018
      %v3020 = vrot.slane %v2891, 2
      %v3021 = vsel %vm2992, %v3018, %v3020
      %v3022 = vrot.slane %v2892, 2
      %v3023 = vsel %vm2992, %v3020, %v3022
      %v3024 = vrot.slane %v2893, 2
      %v3025 = vsel %vm2992, %v3022, %v3024
      %v3043 = vadd.f32 %v2958, %v2993
      %v3044 = vadd.f32 %v2959, %v2995
      %v3045 = vadd.f32 %v2960, %v2997
      %v3046 = vadd.f32 %v2961, %v2999
      %v3047 = vadd.f32 %v2962, %v3001
      %v3048 = vadd.f32 %v2963, %v3003
      %v3049 = vadd.f32 %v2964, %v3005
      %v3050 = vadd.f32 %v2965, %v3007
      %v3051 = vadd.f32 %v2966, %v3009
      %v3052 = vadd.f32 %v2967, %v3011
      %v3053 = vadd.f32 %v2968, %v3013
      %v3054 = vadd.f32 %v2969, %v3015
      %v3055 = vadd.f32 %v2970, %v3017
      %v3056 = vadd.f32 %v2971, %v3019
      %v3057 = vadd.f32 %v2972, %v3021
      %v3058 = vadd.f32 %v2973, %v3023
      %v3059 = vadd.f32 %v2974, %v3025
      %v3060 = vlaneseq
      %v3061 = vshrl.u32 %v3060, 7
      %v3062 = vsub.s32 2, %v3061
      %v3063 = vrot.slane %v470, %v3062
      %v3064 = vadd.f32 %v3043, %v3063
      %v3065 = vadd.f32 %v3044, %v3063
      %v3066 = vadd.f32 %v3045, %v3063
      %v3067 = vadd.f32 %v3046, %v3063
      %v3068 = vadd.f32 %v3047, %v3063
      %v3069 = vadd.f32 %v3048, %v3063
      %v3070 = vadd.f32 %v3049, %v3063
      %v3071 = vadd.f32 %v3050, %v3063
      %v3072 = vadd.f32 %v3051, %v3063
      %v3073 = vadd.f32 %v3052, %v3063
      %v3074 = vadd.f32 %v3053, %v3063
      %v3075 = vadd.f32 %v3054, %v3063
      %v3076 = vadd.f32 %v3055, %v3063
      %v3077 = vadd.f32 %v3056, %v3063
      %v3078 = vadd.f32 %v3057, %v3063
      %v3079 = vadd.f32 %v3058, %v3063
      %v3080 = vadd.f32 %v3059, %v3063
      %v3081 = vxor.u32 %v3064, 2147483648
      %v3082 = vxor.u32 %v3065, 2147483648
      %v3083 = vxor.u32 %v3066, 2147483648
      %v3084 = vxor.u32 %v3067, 2147483648
      %v3085 = vxor.u32 %v3068, 2147483648
      %v3086 = vxor.u32 %v3069, 2147483648
      %v3087 = vxor.u32 %v3070, 2147483648
      %v3088 = vxor.u32 %v3071, 2147483648
      %v3089 = vxor.u32 %v3072, 2147483648
      %v3090 = vxor.u32 %v3073, 2147483648
      %v3091 = vxor.u32 %v3074, 2147483648
      %v3092 = vxor.u32 %v3075, 2147483648
      %v3093 = vxor.u32 %v3076, 2147483648
      %v3094 = vxor.u32 %v3077, 2147483648
      %v3095 = vxor.u32 %v3078, 2147483648
      %v3096 = vxor.u32 %v3079, 2147483648
      %v3097 = vxor.u32 %v3080, 2147483648
      %v3098 = vmul.f32 %v3081, 1.442695
      %v3099 = vpow.pop %v3098
      %v3100 = vmul.f32 %v3082, 1.442695
      %v3101 = vpow.pop %v3100
      %v3102 = vmul.f32 %v3083, 1.442695
      %v3103 = vpow.pop %v3102
      %v3104 = vmul.f32 %v3084, 1.442695
      %v3105 = vpow.pop %v3104
      %v3106 = vmul.f32 %v3085, 1.442695
      %v3107 = vpow.pop %v3106
      %v3108 = vmul.f32 %v3086, 1.442695
      %v3109 = vpow.pop %v3108
      %v3110 = vmul.f32 %v3087, 1.442695
      %v3111 = vpow.pop %v3110
      %v3112 = vmul.f32 %v3088, 1.442695
      %v3113 = vpow.pop %v3112
      %v3114 = vmul.f32 %v3089, 1.442695
      %v3115 = vpow.pop %v3114
      %v3116 = vmul.f32 %v3090, 1.442695
      %v3117 = vpow.pop %v3116
      %v3118 = vmul.f32 %v3091, 1.442695
      %v3119 = vpow.pop %v3118
      %v3120 = vmul.f32 %v3092, 1.442695
      %v3121 = vpow.pop %v3120
      %v3122 = vmul.f32 %v3093, 1.442695
      %v3123 = vpow.pop %v3122
      %v3124 = vmul.f32 %v3094, 1.442695
      %v3125 = vpow.pop %v3124
      %v3126 = vmul.f32 %v3095, 1.442695
      %v3127 = vpow.pop %v3126
      %v3128 = vmul.f32 %v3096, 1.442695
      %v3129 = vpow.pop %v3128
      %v3130 = vmul.f32 %v3097, 1.442695
      %v3131 = vpow.pop %v3130
      %v3132 = vadd.f32 %v3099, 1.0
      %v3133 = vadd.f32 %v3101, 1.0
      %v3134 = vadd.f32 %v3103, 1.0
      %v3135 = vadd.f32 %v3105, 1.0
      %v3136 = vadd.f32 %v3107, 1.0
      %v3137 = vadd.f32 %v3109, 1.0
      %v3138 = vadd.f32 %v3111, 1.0
      %v3139 = vadd.f32 %v3113, 1.0
      %v3140 = vadd.f32 %v3115, 1.0
      %v3141 = vadd.f32 %v3117, 1.0
      %v3142 = vadd.f32 %v3119, 1.0
      %v3143 = vadd.f32 %v3121, 1.0
      %v3144 = vadd.f32 %v3123, 1.0
      %v3145 = vadd.f32 %v3125, 1.0
      %v3146 = vadd.f32 %v3127, 1.0
      %v3147 = vadd.f32 %v3129, 1.0
      %v3148 = vadd.f32 %v3131, 1.0
      %v3149 = vrcp.pop %v3132
      %v3150 = vmul.f32 1.0, %v3149
      %v3151 = vrcp.pop %v3133
      %v3152 = vmul.f32 1.0, %v3151
      %v3153 = vrcp.pop %v3134
      %v3154 = vmul.f32 1.0, %v3153
      %v3155 = vrcp.pop %v3135
      %v3156 = vmul.f32 1.0, %v3155
      %v3157 = vrcp.pop %v3136
      %v3158 = vmul.f32 1.0, %v3157
      %v3159 = vrcp.pop %v3137
      %v3160 = vmul.f32 1.0, %v3159
      %v3161 = vrcp.pop %v3138
      %v3162 = vmul.f32 1.0, %v3161
      %v3163 = vrcp.pop %v3139
      %v3164 = vmul.f32 1.0, %v3163
      %v3165 = vrcp.pop %v3140
      %v3166 = vmul.f32 1.0, %v3165
      %v3167 = vrcp.pop %v3141
      %v3168 = vmul.f32 1.0, %v3167
      %v3169 = vrcp.pop %v3142
      %v3170 = vmul.f32 1.0, %v3169
      %v3171 = vrcp.pop %v3143
      %v3172 = vmul.f32 1.0, %v3171
      %v3173 = vrcp.pop %v3144
      %v3174 = vmul.f32 1.0, %v3173
      %v3175 = vrcp.pop %v3145
      %v3176 = vmul.f32 1.0, %v3175
      %v3177 = vrcp.pop %v3146
      %v3178 = vmul.f32 1.0, %v3177
      %v3179 = vrcp.pop %v3147
      %v3180 = vmul.f32 1.0, %v3179
      %v3181 = vrcp.pop %v3148
      %v3182 = vmul.f32 1.0, %v3181
      %v3200 = vrot.slane %v3150, 7
      %v3201 = vrot.slane %v3152, 7
      %v3202 = vsel %vm2828, %v3200, %v3201
      %v3203 = vrot.slane %v3154, 7
      %v3204 = vsel %vm2828, %v3201, %v3203
      %v3205 = vrot.slane %v3156, 7
      %v3206 = vsel %vm2828, %v3203, %v3205
      %v3207 = vrot.slane %v3158, 7
      %v3208 = vsel %vm2828, %v3205, %v3207
      %v3209 = vrot.slane %v3160, 7
      %v3210 = vsel %vm2828, %v3207, %v3209
      %v3211 = vrot.slane %v3162, 7
      %v3212 = vsel %vm2828, %v3209, %v3211
      %v3213 = vrot.slane %v3164, 7
      %v3214 = vsel %vm2828, %v3211, %v3213
      %v3215 = vrot.slane %v3166, 7
      %v3216 = vsel %vm2828, %v3213, %v3215
      %v3217 = vrot.slane %v3168, 7
      %v3218 = vsel %vm2828, %v3215, %v3217
      %v3219 = vrot.slane %v3170, 7
      %v3220 = vsel %vm2828, %v3217, %v3219
      %v3221 = vrot.slane %v3172, 7
      %v3222 = vsel %vm2828, %v3219, %v3221
      %v3223 = vrot.slane %v3174, 7
      %v3224 = vsel %vm2828, %v3221, %v3223
      %v3225 = vrot.slane %v3176, 7
      %v3226 = vsel %vm2828, %v3223, %v3225
      %v3227 = vrot.slane %v3178, 7
      %v3228 = vsel %vm2828, %v3225, %v3227
      %v3229 = vrot.slane %v3180, 7
      %v3230 = vsel %vm2828, %v3227, %v3229
      %v3231 = vrot.slane %v3182, 7
      %v3232 = vsel %vm2828, %v3229, %v3231
      %v3249 = vadd.f32 %v2134, %v3202
      %v3250 = vadd.f32 %v2135, %v3204
      %v3251 = vadd.f32 %v2136, %v3206
      %v3252 = vadd.f32 %v2137, %v3208
      %v3253 = vadd.f32 %v2138, %v3210
      %v3254 = vadd.f32 %v2139, %v3212
      %v3255 = vadd.f32 %v2140, %v3214
      %v3256 = vadd.f32 %v2141, %v3216
      %v3257 = vadd.f32 %v2142, %v3218
      %v3258 = vadd.f32 %v2143, %v3220
      %v3259 = vadd.f32 %v2144, %v3222
      %v3260 = vadd.f32 %v2145, %v3224
      %v3261 = vadd.f32 %v2146, %v3226
      %v3262 = vadd.f32 %v2147, %v3228
      %v3263 = vadd.f32 %v2148, %v3230
      %v3264 = vadd.f32 %v2149, %v3232
      %v3265 = vmul.f32 %v3249, %v419
      %v3266 = vmul.f32 %v3250, %v420
      %v3267 = vmul.f32 %v3251, %v421
      %v3268 = vmul.f32 %v3252, %v422
      %v3269 = vmul.f32 %v3253, %v423
      %v3270 = vmul.f32 %v3254, %v424
      %v3271 = vmul.f32 %v3255, %v425
      %v3272 = vmul.f32 %v3256, %v426
      %v3273 = vmul.f32 %v3257, %v427
      %v3274 = vmul.f32 %v3258, %v428
      %v3275 = vmul.f32 %v3259, %v429
      %v3276 = vmul.f32 %v3260, %v430
      %v3277 = vmul.f32 %v3261, %v431
      %v3278 = vmul.f32 %v3262, %v432
      %v3279 = vmul.f32 %v3263, %v433
      %v3280 = vmul.f32 %v3264, %v434
      %3281 = vst.msk [vmem:[%s417] sm:$0xff] %vm542, %v3265
      %3282 = vst.msk [vmem:[%s417 + $0x8] sm:$0xff] %vm542, %v3266
      %3283 = vst.msk [vmem:[%s417 + $0x10] sm:$0xff] %vm542, %v3267
      %3284 = vst.msk [vmem:[%s417 + $0x18] sm:$0xff] %vm542, %v3268
      %3285 = vst.msk [vmem:[%s417 + $0x20] sm:$0xff] %vm542, %v3269
      %3286 = vst.msk [vmem:[%s417 + $0x28] sm:$0xff] %vm542, %v3270
      %3287 = vst.msk [vmem:[%s417 + $0x30] sm:$0xff] %vm542, %v3271
      %3288 = vst.msk [vmem:[%s417 + $0x38] sm:$0xff] %vm542, %v3272
      %3289 = vst.msk [vmem:[%s417 + $0x40] sm:$0xff] %vm542, %v3273
      %3290 = vst.msk [vmem:[%s417 + $0x48] sm:$0xff] %vm542, %v3274
      %3291 = vst.msk [vmem:[%s417 + $0x50] sm:$0xff] %vm542, %v3275
      %3292 = vst.msk [vmem:[%s417 + $0x58] sm:$0xff] %vm542, %v3276
      %3293 = vst.msk [vmem:[%s417 + $0x60] sm:$0xff] %vm542, %v3277
      %3294 = vst.msk [vmem:[%s417 + $0x68] sm:$0xff] %vm542, %v3278
      %3295 = vst.msk [vmem:[%s417 + $0x70] sm:$0xff] %vm542, %v3279
      %3296 = vst.msk [vmem:[%s417 + $0x78] sm:$0xff] %vm542, %v3280
      %s3297 = smul.u32 16, %s22
      %p3298 = scmp.lt.s32.totalorder %s21, 1
      %s3299 = scalar_select %p3298, %s21, 1
      %p3300 = scmp.lt.s32.totalorder %s3297, 63
      %s3301 = scalar_select %p3300, %s3297, 63
      %s3302 = smul.addr %s3299, 64
      %s3303 = sadd.s32 %s3301, %s3302
      %s3304 = smul.addr %s3303, 8
      %s3305 = scalar_lea.vmem %s6, %s3304
      // Predicated region
      $region45: #{tpu_custom_call.1} parent=43 // pred_check
        %p3306 = pneg %p212
      $region46: #{tpu_custom_call.1} parent=43 // pred_check_branch
        %3308 = sbr.rel (%p3306) target = $region48
      $region47: #{tpu_custom_call.1} parent=43 // pred_region
        %s3309 = smul.u32 16, %s22
      $region48: #{tpu_custom_call.1} parent=43 // pred_fallthru
        _
    $region44: #{tpu_custom_call.1} parent=5 // pred_fallthru
      _
    %p3310 = scmp.le.s32.totalorder 2, %s12
    // Predicated region
    $region49: #{tpu_custom_call.1} parent=5 // pred_check
      %p3311 = pneg %p3310
    $region50: #{tpu_custom_call.1} parent=5 // pred_check_branch
      %3313 = sbr.rel (%p3311) target = $region52
    $region51: #{tpu_custom_call.1} parent=5 // pred_region
      %s3314 = ssub.s32 %s12, 2
      // Predicated region
      $region53: #{tpu_custom_call.1} parent=51 // pred_check
        %p3315 = pneg %p218
      $region54: #{tpu_custom_call.1} parent=51 // pred_check_branch
        %3317 = sbr.rel (%p3315) target = $region56
      $region55: #{tpu_custom_call.1} parent=51 // pred_region
        %s3318 = smul.u32 16, %s24
        %p3319 = scmp.lt.s32.totalorder %s23, 1
        %s3320 = scalar_select %p3319, %s23, 1
        %p3321 = scmp.lt.s32.totalorder %s3318, 63
        %s3322 = scalar_select %p3321, %s3318, 63
        %s3323 = smul.addr %s3320, 64
        %s3324 = sadd.s32 %s3322, %s3323
        %s3325 = smul.addr %s3324, 8
        %s3326 = scalar_lea.vmem %s6, %s3325
      $region56: #{tpu_custom_call.1} parent=51 // pred_fallthru
        _
    $region52: #{tpu_custom_call.1} parent=5 // pred_fallthru
      _
  $region6: #{tpu_custom_call.1} parent=0 // loop_footer
    %s16 = sadd.s32 1, %s12
  $region7: #{tpu_custom_call.1} parent=0 // loop_footer_branch
    %11 = sbr.rel target = $region3
  $region8: #{tpu_custom_call.1} parent=0 // loop_exit
    _

</llo_original>
